<compile_context>
chip_gen: v6e
topology: v6e:2x2x1
jax: 0.10.0
libtpu: 0.0.40
codegen_flags: <defaults>
</compile_context>

<pallas_src>
import jax
import jax.numpy as jnp
from jax.experimental import pallas as pl
from jax.experimental.pallas import tpu as pltpu


_TAPS = tuple((dy, dx) for dy in (-1, 0, 1) for dx in (-1, 0, 1))
_ATT_ROWS = 8  # sublane-aligned staging rows for the tiny attention convs


def _round_up(x, m):
    return (x + m - 1) // m * m


def _make_uafm_kernel(H, W, Chigh, Clow, Cout, pad, compute_dtype):
    HW = H * W
    Cmax = max(Chigh, Clow)

    def conv3x3_big(x, w_ref, b_ref, pad_ref, ml, mr, relu):
        """3x3 conv as 9 accumulated MXU matmuls (Cout,Cin)@(Cin,HW) read as shifted
        lane-slices of the zero-haloed staging buffer (no 9x im2col scratch)."""
        cin = x.shape[0]
        cout = b_ref.shape[0]
        pad_ref[0:cin, pad:pad + HW] = x
        acc = jnp.zeros((cout, HW), jnp.float32) + b_ref[...]
        mask_partial = cout < cin      # mask whichever of {input, partial} is smaller
        for t, (dy, dx) in enumerate(_TAPS):
            s = dy * W + dx
            v = pad_ref[0:cin, pad + s:pad + s + HW]               # (cin, HW)
            m = ml if dx == -1 else (mr if dx == 1 else None)
            if m is not None and not mask_partial:
                v = v * m.astype(v.dtype)
            # Chained f32 accumulation of per-tap matmuls (MRB in-place acc on v7x).
            p = jnp.dot(w_ref[t], v, preferred_element_type=jnp.float32)
            if m is not None and mask_partial:
                p = p * m
            acc = acc + p
        return jnp.maximum(acc, 0.0) if relu else acc

    def conv3x3_small(x, w_ref, b_ref, apad_ref, ml, mr, relu):
        """Tiny attention convs (4->2, 2->1): per-tap weighted sublane combinations
        (VPU multiply of a stacked (Cin,HW) block + XLU sublane-reduce), all f32."""
        cin = x.shape[0]
        cout = b_ref.shape[0]
        apad_ref[0:cin, pad:pad + HW] = x
        accs = [jnp.zeros((1, HW), jnp.float32) + b_ref[co] for co in range(cout)]
        for t, (dy, dx) in enumerate(_TAPS):
            s = dy * W + dx
            v = apad_ref[0:cin, pad + s:pad + s + HW]              # (cin, HW)
            m = ml if dx == -1 else (mr if dx == 1 else None)
            for co in range(cout):
                idx = t * cout + co
                w_col = w_ref[0:cin, idx:idx + 1]                  # (cin, 1)
                p = jnp.sum(v * w_col, axis=0, keepdims=True)      # (1, HW)
                if m is not None:
                    p = p * m
                accs[co] = accs[co] + p
        if relu:
            accs = [jnp.maximum(a, 0.0) for a in accs]
        return jnp.concatenate(accs, axis=0)                       # (cout, HW)

    def kernel(xh_ref, xl_ref, wl_ref, bl_ref, wa1_ref, ba1_ref, wa2_ref, ba2_ref,
               wo_ref, bo_ref, o_ref, pad_ref, apad_ref):
        # Column-edge masks for the dx=+/-1 taps, built in-kernel (no HBM streams).
        col = jax.lax.broadcasted_iota(jnp.int32, (1, HW), 1) % W
        ml = jnp.where(col == 0, 0.0, 1.0)                         # (1, HW) f32
        mr = jnp.where(col == W - 1, 0.0, 1.0)                     # (1, HW) f32

        # Zero only the 2*pad halo columns; the interior is rewritten by every conv.
        # Done every grid step: scratch is per-TensorCore, so a program_id==0 guard
        # would miss cores that never see step 0 when the batch axis is core-split.
        pad_ref[0:Cmax, 0:pad] = jnp.zeros((Cmax, pad), pad_ref.dtype)
        pad_ref[0:Cmax, pad + HW:pad + HW + pad] = jnp.zeros((Cmax, pad), pad_ref.dtype)
        apad_ref[0:_ATT_ROWS, 0:pad] = jnp.zeros((_ATT_ROWS, pad), jnp.float32)
        apad_ref[0:_ATT_ROWS, pad + HW:pad + HW + pad] = jnp.zeros(
            (_ATT_ROWS, pad), jnp.float32)

        xh = xh_ref[0].astype(jnp.float32)     # (Chigh, HW) upsampled high-level feat
        xl = xl_ref[0]                         # (Clow, HW) compute dtype (bf16)

        # conv_low: ConvX 3x3 (low -> high), BN folded into weights, ReLU.  MXU bf16.
        xlow = conv3x3_big(xl, wl_ref, bl_ref, pad_ref, ml, mr, relu=True)

        # Spatial attention stats, stacked sublane-dense as one (4, HW) f32 block.
        att = jnp.concatenate([
            jnp.max(xh, axis=0, keepdims=True),
            jnp.mean(xh, axis=0, keepdims=True),
            jnp.max(xlow, axis=0, keepdims=True),
            jnp.mean(xlow, axis=0, keepdims=True),
        ], axis=0)

        # conv_atten: ConvX 3x3 (4->2, ReLU) then Conv3x3 + BN (2->1); sigmoid.  f32.
        a1 = conv3x3_small(att, wa1_ref, ba1_ref, apad_ref, ml, mr, relu=True)
        a2 = conv3x3_small(a1, wa2_ref, ba2_ref, apad_ref, ml, mr, relu=False)
        atten = jax.nn.sigmoid(a2)                                 # (1, HW)

        # Fuse branches with the spatial attention map (f32 VPU epilogue).
        fused = xh * atten + xlow * (1.0 - atten)                  # (Chigh, HW)

        # conv_out: ConvX 3x3 (high -> out), BN folded, ReLU.  MXU bf16.
        out = conv3x3_big(fused.astype(compute_dtype), wo_ref, bo_ref, pad_ref,
                          ml, mr, relu=True)
        o_ref[0] = out.astype(o_ref.dtype)

    return kernel


def _fold_convx_taps(w, gamma, beta, mean, var, eps, dtype):
    """Fold eval-mode BN into a bias-free 3x3 conv.
    Returns per-tap weights (9, Cout, Cin) in `dtype` and an f32 (Cout, 1) bias."""
    scale = gamma / jnp.sqrt(var + eps)
    wf = w * scale[:, None, None, None]                            # (Cout, Cin, 3, 3)
    cout, cin = w.shape[0], w.shape[1]
    w_taps = jnp.transpose(wf, (2, 3, 0, 1)).reshape(9, cout, cin).astype(dtype)
    bias = (beta - mean * scale).reshape(cout, 1).astype(jnp.float32)
    return w_taps, bias


def _fold_convx_small(w, gamma, beta, mean, var, eps):
    """BN-folded weights for the tiny attention convs, laid out (Cin, 9*Cout) f32 so
    the kernel can slice per-(tap, out-channel) sublane weight columns; f32 (Cout,) bias."""
    scale = gamma / jnp.sqrt(var + eps)
    wf = w * scale[:, None, None, None]                            # (Cout, Cin, 3, 3)
    cout, cin = w.shape[0], w.shape[1]
    w_cols = jnp.transpose(wf, (1, 2, 3, 0)).reshape(cin, 9 * cout).astype(jnp.float32)
    bias = (beta - mean * scale).astype(jnp.float32)               # (Cout,)
    return w_cols, bias


def uafm_forward(x_high, x_low, params, eps=1e-5, compute_dtype=jnp.bfloat16):
    """UAFM ('sp') forward. x_high: (N, Chigh, Hh, Wh), x_low: (N, Clow, H, W); NCHW."""
    N, Clow, H, W = x_low.shape
    Chigh = x_high.shape[1]
    Cout = params["out"][0].shape[0]
    HW = H * W
    Cmax = max(Chigh, Clow)
    # Halo: >= W+1 (dy taps reach +/-(W+1) flattened pixels) and a multiple of 128 so
    # the interior store and the centre tap stay lane-aligned.
    pad = _round_up(W + 1, 128)

    # TODO(synk): F.interpolate(mode='bilinear', align_corners=False) stays in the
    # wrapper (jax.image.resize); it is not fused into the Pallas kernel.
    xh_up = jax.image.resize(x_high.astype(jnp.float32), (N, Chigh, H, W),
                             method="bilinear")

    # NCHW with flattened spatial is already the kernel's (C, H*W) layout: no transposes.
    # MXU operands are bf16 (f32 accumulation); the in-kernel VPU epilogue is f32.
    xh_flat = xh_up.reshape(N, Chigh, HW).astype(compute_dtype)
    xl_flat = x_low.reshape(N, Clow, HW).astype(compute_dtype)

    # Fold the eval-mode BatchNorms into the conv weights / biases.
    w_low, b_low = _fold_convx_taps(*params["low"], eps, compute_dtype)
    w_a1, b_a1 = _fold_convx_small(*params["att1"], eps)
    w_a2, b_a2 = _fold_convx_small(*params["att2"], eps)
    w_out, b_out = _fold_convx_taps(*params["out"], eps, compute_dtype)

    kernel = _make_uafm_kernel(H, W, Chigh, Clow, Cout, pad, compute_dtype)

    out_flat = pl.pallas_call(
        kernel,
        out_shape=jax.ShapeDtypeStruct((N, Cout, HW), jnp.float32),
        grid_spec=pltpu.PrefetchScalarGridSpec(
            num_scalar_prefetch=0,
            grid=(N,),
            in_specs=[
                pl.BlockSpec((1, Chigh, HW), lambda n: (n, 0, 0)),     # x_high (upsampled)
                pl.BlockSpec((1, Clow, HW), lambda n: (n, 0, 0)),      # x_low
                pl.BlockSpec((9, Chigh, Clow), lambda n: (0, 0, 0)),   # conv_low per-tap W
                pl.BlockSpec((Chigh, 1), lambda n: (0, 0)),            # conv_low bias
                pl.BlockSpec((4, 18), lambda n: (0, 0)),               # atten conv1 W cols
                pl.BlockSpec(memory_space=pltpu.MemorySpace.SMEM),     # atten conv1 bias
                pl.BlockSpec((2, 9), lambda n: (0, 0)),                # atten conv2 W cols
                pl.BlockSpec(memory_space=pltpu.MemorySpace.SMEM),     # atten conv2 bias
                pl.BlockSpec((9, Cout, Chigh), lambda n: (0, 0, 0)),   # conv_out per-tap W
                pl.BlockSpec((Cout, 1), lambda n: (0, 0)),             # conv_out bias
            ],
            out_specs=pl.BlockSpec((1, Cout, HW), lambda n: (n, 0, 0)),
            scratch_shapes=[
                pltpu.VMEM((Cmax, HW + 2 * pad), compute_dtype),       # big-conv staging
                pltpu.VMEM((_ATT_ROWS, HW + 2 * pad), jnp.float32),    # attention staging
            ],
        ),
        compiler_params=pltpu.CompilerParams(
            dimension_semantics=("parallel",)),
    )(xh_flat, xl_flat, w_low, b_low, w_a1, b_a1, w_a2, b_a2, w_out, b_out)

    return out_flat.reshape(N, Cout, H, W)


# ------------------------- plain-JAX reference (for the self-check) -------------------------

def _convx_ref(x, w, gamma, beta, mean, var, eps=1e-5, relu=True):
    dn = jax.lax.conv_dimension_numbers(x.shape, w.shape, ("NCHW", "OIHW", "NCHW"))
    y = jax.lax.conv_general_dilated(x, w, (1, 1), ((1, 1), (1, 1)), dimension_numbers=dn)
    scale = gamma / jnp.sqrt(var + eps)
    y = y * scale[None, :, None, None] + (beta - mean * scale)[None, :, None, None]
    return jnp.maximum(y, 0.0) if relu else y


def _uafm_reference(x_high, x_low, params, eps=1e-5):
    N, _, H, W = x_low.shape
    Chigh = x_high.shape[1]
    xl = _convx_ref(x_low, *params["low"], eps=eps, relu=True)
    xh = jax.image.resize(x_high, (N, Chigh, H, W), method="bilinear")

    def sp_att(x):
        return jnp.concatenate([jnp.max(x, axis=1, keepdims=True),
                                jnp.mean(x, axis=1, keepdims=True)], axis=1)

    att = jnp.concatenate([sp_att(xh), sp_att(xl)], axis=1)
    a = _convx_ref(att, *params["att1"], eps=eps, relu=True)
    a = _convx_ref(a, *params["att2"], eps=eps, relu=False)
    a = jax.nn.sigmoid(a)
    x = xh * a + xl * (1.0 - a)
    return _convx_ref(x, *params["out"], eps=eps, relu=True)


if __name__ == "__main__":
    N = 2
    low_chan, high_chan, out_chan = 4, 16, 8
    H, W = 16, 16
    Hh, Wh = 8, 8          # high-level feature is spatially smaller; upsampled 2x inside UAFM

    key = jax.random.PRNGKey(0)
    ks = jax.random.split(key, 10)

    def conv_w(k, cout, cin):
        return 0.1 * jax.random.normal(k, (cout, cin, 3, 3), jnp.float32)

    def bn_params(k, c):
        k1, k2, k3, k4 = jax.random.split(k, 4)
        gamma = 0.5 + jnp.abs(jax.random.normal(k1, (c,), jnp.float32))
        beta = 0.1 * jax.random.normal(k2, (c,), jnp.float32)
        mean = 0.1 * jax.random.normal(k3, (c,), jnp.float32)
        var = 1.0 + jnp.abs(jax.random.normal(k4, (c,), jnp.float32))
        return gamma, beta, mean, var

    x_high = jax.random.normal(ks[0], (N, high_chan, Hh, Wh), jnp.float32)
    x_low = jax.random.normal(ks[1], (N, low_chan, H, W), jnp.float32)

    params = {
        "low":  (conv_w(ks[2], high_chan, low_chan),) + bn_params(ks[3], high_chan),
        "att1": (conv_w(ks[4], 2, 4),) + bn_params(ks[5], 2),
        "att2": (conv_w(ks[6], 1, 2),) + bn_params(ks[7], 1),
        "out":  (conv_w(ks[8], out_chan, high_chan),) + bn_params(ks[9], out_chan),
    }

    out = uafm_forward(x_high, x_low, params)
    out = jax.block_until_ready(out)

    ref = _uafm_reference(x_high, x_low, params)
    assert out.shape == (N, out_chan, H, W)
    max_err = float(jnp.max(jnp.abs(out - ref)))
    # bf16 MXU operands (f32 accumulation) -> loosened tolerance vs. the f32 reference.
    assert jnp.allclose(out, ref, atol=3e-2, rtol=3e-2), max_err

    print("KERNEL_OK")
</pallas_src>

<mosaic_0001>
module attributes {stable_mosaic.version = 11 : i64} {
  func.func @kernel(%arg0: i32, %arg1: memref<1x16x256xbf16, #tpu.memory_space<vmem>>, %arg2: memref<1x4x256xbf16, #tpu.memory_space<vmem>>, %arg3: memref<9x16x4xbf16, #tpu.memory_space<vmem>>, %arg4: memref<16x1xf32, #tpu.memory_space<vmem>>, %arg5: memref<4x18xf32, #tpu.memory_space<vmem>>, %arg6: memref<2xf32, #tpu.memory_space<smem>>, %arg7: memref<2x9xf32, #tpu.memory_space<vmem>>, %arg8: memref<1xf32, #tpu.memory_space<smem>>, %arg9: memref<9x8x16xbf16, #tpu.memory_space<vmem>>, %arg10: memref<8x1xf32, #tpu.memory_space<vmem>>, %arg11: memref<1x8x256xf32, #tpu.memory_space<vmem>>, %arg12: memref<16x512xbf16, #tpu.memory_space<vmem>>, %arg13: memref<8x512xf32, #tpu.memory_space<vmem>>) attributes {dimension_semantics = [#tpu.dimension_semantics<parallel>], iteration_bounds = array<i64: 2>, scalar_prefetch = 0 : i64, scratch_operands = 2 : i64, tpu.core_type = #tpu.core_type<tc>, window_params = [{transform_indices = @transform_0, window_bounds = array<i64: 1, 16, 256>}, {transform_indices = @transform_1, window_bounds = array<i64: 1, 4, 256>}, {pipeline_mode = #tpu.pipeline_mode<synchronous>, transform_indices = @transform_2, window_bounds = array<i64: 9, 16, 4>}, {pipeline_mode = #tpu.pipeline_mode<synchronous>, transform_indices = @transform_3, window_bounds = array<i64: 16, 1>}, {pipeline_mode = #tpu.pipeline_mode<synchronous>, transform_indices = @transform_4, window_bounds = array<i64: 4, 18>}, {transform_indices = @transform_5, window_bounds = array<i64: 2>}, {pipeline_mode = #tpu.pipeline_mode<synchronous>, transform_indices = @transform_6, window_bounds = array<i64: 2, 9>}, {transform_indices = @transform_7, window_bounds = array<i64: 1>}, {pipeline_mode = #tpu.pipeline_mode<synchronous>, transform_indices = @transform_8, window_bounds = array<i64: 9, 8, 16>}, {pipeline_mode = #tpu.pipeline_mode<synchronous>, transform_indices = @transform_9, window_bounds = array<i64: 8, 1>}, {transform_indices = @transform_10, window_bounds = array<i64: 1, 8, 256>}]} {
    %0 = tpu.iota {dimensions = array<i32: 1>} : vector<1x256xi32>
    %c16_i32 = arith.constant 16 : i32
    %c0_i32 = arith.constant 0 : i32
    %1 = arith.cmpi eq, %c16_i32, %c0_i32 : i32
    %c1_i32 = arith.constant 1 : i32
    %2 = arith.select %1, %c1_i32, %c16_i32 : i32
    %3 = vector.broadcast %2 : i32 to vector<1x256xi32>
    %4 = arith.remsi %0, %3 : vector<1x256xi32>
    %c0_i32_0 = arith.constant 0 : i32
    %5 = vector.broadcast %c0_i32_0 : i32 to vector<1x256xi32>
    %6 = arith.cmpi ne, %4, %5 : vector<1x256xi32>
    %c0_i32_1 = arith.constant 0 : i32
    %7 = vector.broadcast %c0_i32_1 : i32 to vector<1x256xi32>
    %8 = arith.cmpi slt, %4, %7 : vector<1x256xi32>
    %c0_i32_2 = arith.constant 0 : i32
    %9 = arith.cmpi slt, %2, %c0_i32_2 : i32
    %10 = vector.broadcast %9 : i1 to vector<1x256xi1>
    %11 = vector.broadcast %10 : vector<1x256xi1> to vector<1x256xi1>
    %12 = arith.xori %8, %11 : vector<1x256xi1>
    %13 = arith.andi %12, %6 : vector<1x256xi1>
    %14 = vector.broadcast %2 : i32 to vector<1x256xi32>
    %15 = arith.addi %4, %14 : vector<1x256xi32>
    %16 = arith.select %13, %15, %4 : vector<1x256xi1>, vector<1x256xi32>
    %c0_i32_3 = arith.constant 0 : i32
    %17 = vector.broadcast %c0_i32_3 : i32 to vector<1x256xi32>
    %18 = arith.cmpi eq, %16, %17 : vector<1x256xi32>
    %cst = arith.constant 0.000000e+00 : f32
    %cst_4 = arith.constant 1.000000e+00 : f32
    %19 = vector.broadcast %cst : f32 to vector<1x256xf32>
    %20 = vector.broadcast %cst_4 : f32 to vector<1x256xf32>
    %21 = arith.select %18, %19, %20 : vector<1x256xi1>, vector<1x256xf32>
    %c15_i32 = arith.constant 15 : i32
    %22 = vector.broadcast %c15_i32 : i32 to vector<1x256xi32>
    %23 = arith.cmpi eq, %16, %22 : vector<1x256xi32>
    %cst_5 = arith.constant 0.000000e+00 : f32
    %cst_6 = arith.constant 1.000000e+00 : f32
    %24 = vector.broadcast %cst_5 : f32 to vector<1x256xf32>
    %25 = vector.broadcast %cst_6 : f32 to vector<1x256xf32>
    %26 = arith.select %23, %24, %25 : vector<1x256xi1>, vector<1x256xf32>
    %cst_7 = arith.constant 0.000000e+00 : bf16
    %27 = vector.broadcast %cst_7 : bf16 to vector<16x128xbf16>
    %c0 = arith.constant 0 : index
    %c0_8 = arith.constant 0 : index
    %28 = vector.load %arg12[%c0, %c0_8] : memref<16x512xbf16, #tpu.memory_space<vmem>>, vector<16x128xbf16>
    tpu.vector_store %arg12[%c0, %c0_8], %27 {strides = array<i32>} : memref<16x512xbf16, #tpu.memory_space<vmem>>, vector<16x128xbf16>,
    %cst_9 = arith.constant 0.000000e+00 : bf16
    %29 = vector.broadcast %cst_9 : bf16 to vector<16x128xbf16>
    %c0_10 = arith.constant 0 : index
    %c384 = arith.constant 384 : index
    %30 = vector.load %arg12[%c0_10, %c384] : memref<16x512xbf16, #tpu.memory_space<vmem>>, vector<16x128xbf16>
    tpu.vector_store %arg12[%c0_10, %c384], %29 {strides = array<i32>} : memref<16x512xbf16, #tpu.memory_space<vmem>>, vector<16x128xbf16>,
    %cst_11 = arith.constant 0.000000e+00 : f32
    %31 = vector.broadcast %cst_11 : f32 to vector<8x128xf32>
    %c0_12 = arith.constant 0 : index
    %c0_13 = arith.constant 0 : index
    %32 = vector.load %arg13[%c0_12, %c0_13] : memref<8x512xf32, #tpu.memory_space<vmem>>, vector<8x128xf32>
    tpu.vector_store %arg13[%c0_12, %c0_13], %31 {strides = array<i32>} : memref<8x512xf32, #tpu.memory_space<vmem>>, vector<8x128xf32>,
    %cst_14 = arith.constant 0.000000e+00 : f32
    %33 = vector.broadcast %cst_14 : f32 to vector<8x128xf32>
    %c0_15 = arith.constant 0 : index
    %c384_16 = arith.constant 384 : index
    %34 = vector.load %arg13[%c0_15, %c384_16] : memref<8x512xf32, #tpu.memory_space<vmem>>, vector<8x128xf32>
    tpu.vector_store %arg13[%c0_15, %c384_16], %33 {strides = array<i32>} : memref<8x512xf32, #tpu.memory_space<vmem>>, vector<8x128xf32>,
    %c0_17 = arith.constant 0 : index
    %c0_18 = arith.constant 0 : index
    %c0_19 = arith.constant 0 : index
    %35 = vector.load %arg1[%c0_17, %c0_18, %c0_19] : memref<1x16x256xbf16, #tpu.memory_space<vmem>>, vector<1x16x256xbf16>
    %36 = vector.shape_cast %35 : vector<1x16x256xbf16> to vector<16x256xbf16>
    %37 = arith.extf %36 : vector<16x256xbf16> to vector<16x256xf32>
    %c0_20 = arith.constant 0 : index
    %c0_21 = arith.constant 0 : index
    %c0_22 = arith.constant 0 : index
    %38 = vector.load %arg2[%c0_20, %c0_21, %c0_22] : memref<1x4x256xbf16, #tpu.memory_space<vmem>>, vector<1x4x256xbf16>
    %39 = vector.shape_cast %38 : vector<1x4x256xbf16> to vector<4x256xbf16>
    %c0_23 = arith.constant 0 : index
    %c128 = arith.constant 128 : index
    %40 = vector.load %arg12[%c0_23, %c128] : memref<16x512xbf16, #tpu.memory_space<vmem>>, vector<4x256xbf16>
    tpu.vector_store %arg12[%c0_23, %c128], %39 {strides = array<i32>} : memref<16x512xbf16, #tpu.memory_space<vmem>>, vector<4x256xbf16>,
    %cst_24 = arith.constant 0.000000e+00 : f32
    %41 = vector.broadcast %cst_24 : f32 to vector<16x256xf32>
    %c0_25 = arith.constant 0 : index
    %c0_26 = arith.constant 0 : index
    %42 = vector.load %arg4[%c0_25, %c0_26] : memref<16x1xf32, #tpu.memory_space<vmem>>, vector<16x1xf32>
    %43 = vector.broadcast %42 : vector<16x1xf32> to vector<16x256xf32>
    %44 = arith.addf %41, %43 : vector<16x256xf32>
    %c0_27 = arith.constant 0 : index
    %c111 = arith.constant 111 : index
    %45 = vector.load %arg12[%c0_27, %c111] : memref<16x512xbf16, #tpu.memory_space<vmem>>, vector<4x256xbf16>
    %46 = arith.truncf %21 : vector<1x256xf32> to vector<1x256xbf16>
    %47 = vector.broadcast %46 : vector<1x256xbf16> to vector<4x256xbf16>
    %48 = arith.mulf %45, %47 : vector<4x256xbf16>
    %c0_28 = arith.constant 0 : index
    %c0_29 = arith.constant 0 : index
    %c0_30 = arith.constant 0 : index
    %49 = vector.load %arg3[%c0_28, %c0_29, %c0_30] : memref<9x16x4xbf16, #tpu.memory_space<vmem>>, vector<1x16x4xbf16>
    %50 = vector.shape_cast %49 : vector<1x16x4xbf16> to vector<16x4xbf16>
    %cst_31 = arith.constant dense<0.000000e+00> : vector<16x256xf32>
    %51 = tpu.matmul %50, %48, %cst_31 {dimension_numbers = #tpu.dot_dimension_numbers<[1], [0], [0], [1], [0, 0, 1, 1], [], []>} : vector<16x4xbf16>, vector<4x256xbf16>, vector<16x256xf32> -> vector<16x256xf32>
    %52 = arith.addf %44, %51 : vector<16x256xf32>
    %c0_32 = arith.constant 0 : index
    %c112 = arith.constant 112 : index
    %53 = vector.load %arg12[%c0_32, %c112] : memref<16x512xbf16, #tpu.memory_space<vmem>>, vector<4x256xbf16>
    %c1 = arith.constant 1 : index
    %c0_33 = arith.constant 0 : index
    %c0_34 = arith.constant 0 : index
    %54 = vector.load %arg3[%c1, %c0_33, %c0_34] : memref<9x16x4xbf16, #tpu.memory_space<vmem>>, vector<1x16x4xbf16>
    %55 = vector.shape_cast %54 : vector<1x16x4xbf16> to vector<16x4xbf16>
    %cst_35 = arith.constant dense<0.000000e+00> : vector<16x256xf32>
    %56 = tpu.matmul %55, %53, %cst_35 {dimension_numbers = #tpu.dot_dimension_numbers<[1], [0], [0], [1], [0, 0, 1, 1], [], []>} : vector<16x4xbf16>, vector<4x256xbf16>, vector<16x256xf32> -> vector<16x256xf32>
    %57 = arith.addf %52, %56 : vector<16x256xf32>
    %c0_36 = arith.constant 0 : index
    %c113 = arith.constant 113 : index
    %58 = vector.load %arg12[%c0_36, %c113] : memref<16x512xbf16, #tpu.memory_space<vmem>>, vector<4x256xbf16>
    %59 = arith.truncf %26 : vector<1x256xf32> to vector<1x256xbf16>
    %60 = vector.broadcast %59 : vector<1x256xbf16> to vector<4x256xbf16>
    %61 = arith.mulf %58, %60 : vector<4x256xbf16>
    %c2 = arith.constant 2 : index
    %c0_37 = arith.constant 0 : index
    %c0_38 = arith.constant 0 : index
    %62 = vector.load %arg3[%c2, %c0_37, %c0_38] : memref<9x16x4xbf16, #tpu.memory_space<vmem>>, vector<1x16x4xbf16>
    %63 = vector.shape_cast %62 : vector<1x16x4xbf16> to vector<16x4xbf16>
    %cst_39 = arith.constant dense<0.000000e+00> : vector<16x256xf32>
    %64 = tpu.matmul %63, %61, %cst_39 {dimension_numbers = #tpu.dot_dimension_numbers<[1], [0], [0], [1], [0, 0, 1, 1], [], []>} : vector<16x4xbf16>, vector<4x256xbf16>, vector<16x256xf32> -> vector<16x256xf32>
    %65 = arith.addf %57, %64 : vector<16x256xf32>
    %c0_40 = arith.constant 0 : index
    %c127 = arith.constant 127 : index
    %66 = vector.load %arg12[%c0_40, %c127] : memref<16x512xbf16, #tpu.memory_space<vmem>>, vector<4x256xbf16>
    %67 = arith.truncf %21 : vector<1x256xf32> to vector<1x256xbf16>
    %68 = vector.broadcast %67 : vector<1x256xbf16> to vector<4x256xbf16>
    %69 = arith.mulf %66, %68 : vector<4x256xbf16>
    %c3 = arith.constant 3 : index
    %c0_41 = arith.constant 0 : index
    %c0_42 = arith.constant 0 : index
    %70 = vector.load %arg3[%c3, %c0_41, %c0_42] : memref<9x16x4xbf16, #tpu.memory_space<vmem>>, vector<1x16x4xbf16>
    %71 = vector.shape_cast %70 : vector<1x16x4xbf16> to vector<16x4xbf16>
    %cst_43 = arith.constant dense<0.000000e+00> : vector<16x256xf32>
    %72 = tpu.matmul %71, %69, %cst_43 {dimension_numbers = #tpu.dot_dimension_numbers<[1], [0], [0], [1], [0, 0, 1, 1], [], []>} : vector<16x4xbf16>, vector<4x256xbf16>, vector<16x256xf32> -> vector<16x256xf32>
    %73 = arith.addf %65, %72 : vector<16x256xf32>
    %c0_44 = arith.constant 0 : index
    %c128_45 = arith.constant 128 : index
    %74 = vector.load %arg12[%c0_44, %c128_45] : memref<16x512xbf16, #tpu.memory_space<vmem>>, vector<4x256xbf16>
    %c4 = arith.constant 4 : index
    %c0_46 = arith.constant 0 : index
    %c0_47 = arith.constant 0 : index
    %75 = vector.load %arg3[%c4, %c0_46, %c0_47] : memref<9x16x4xbf16, #tpu.memory_space<vmem>>, vector<1x16x4xbf16>
    %76 = vector.shape_cast %75 : vector<1x16x4xbf16> to vector<16x4xbf16>
    %cst_48 = arith.constant dense<0.000000e+00> : vector<16x256xf32>
    %77 = tpu.matmul %76, %74, %cst_48 {dimension_numbers = #tpu.dot_dimension_numbers<[1], [0], [0], [1], [0, 0, 1, 1], [], []>} : vector<16x4xbf16>, vector<4x256xbf16>, vector<16x256xf32> -> vector<16x256xf32>
    %78 = arith.addf %73, %77 : vector<16x256xf32>
    %c0_49 = arith.constant 0 : index
    %c129 = arith.constant 129 : index
    %79 = vector.load %arg12[%c0_49, %c129] : memref<16x512xbf16, #tpu.memory_space<vmem>>, vector<4x256xbf16>
    %80 = arith.truncf %26 : vector<1x256xf32> to vector<1x256xbf16>
    %81 = vector.broadcast %80 : vector<1x256xbf16> to vector<4x256xbf16>
    %82 = arith.mulf %79, %81 : vector<4x256xbf16>
    %c5 = arith.constant 5 : index
    %c0_50 = arith.constant 0 : index
    %c0_51 = arith.constant 0 : index
    %83 = vector.load %arg3[%c5, %c0_50, %c0_51] : memref<9x16x4xbf16, #tpu.memory_space<vmem>>, vector<1x16x4xbf16>
    %84 = vector.shape_cast %83 : vector<1x16x4xbf16> to vector<16x4xbf16>
    %cst_52 = arith.constant dense<0.000000e+00> : vector<16x256xf32>
    %85 = tpu.matmul %84, %82, %cst_52 {dimension_numbers = #tpu.dot_dimension_numbers<[1], [0], [0], [1], [0, 0, 1, 1], [], []>} : vector<16x4xbf16>, vector<4x256xbf16>, vector<16x256xf32> -> vector<16x256xf32>
    %86 = arith.addf %78, %85 : vector<16x256xf32>
    %c0_53 = arith.constant 0 : index
    %c143 = arith.constant 143 : index
    %87 = vector.load %arg12[%c0_53, %c143] : memref<16x512xbf16, #tpu.memory_space<vmem>>, vector<4x256xbf16>
    %88 = arith.truncf %21 : vector<1x256xf32> to vector<1x256xbf16>
    %89 = vector.broadcast %88 : vector<1x256xbf16> to vector<4x256xbf16>
    %90 = arith.mulf %87, %89 : vector<4x256xbf16>
    %c6 = arith.constant 6 : index
    %c0_54 = arith.constant 0 : index
    %c0_55 = arith.constant 0 : index
    %91 = vector.load %arg3[%c6, %c0_54, %c0_55] : memref<9x16x4xbf16, #tpu.memory_space<vmem>>, vector<1x16x4xbf16>
    %92 = vector.shape_cast %91 : vector<1x16x4xbf16> to vector<16x4xbf16>
    %cst_56 = arith.constant dense<0.000000e+00> : vector<16x256xf32>
    %93 = tpu.matmul %92, %90, %cst_56 {dimension_numbers = #tpu.dot_dimension_numbers<[1], [0], [0], [1], [0, 0, 1, 1], [], []>} : vector<16x4xbf16>, vector<4x256xbf16>, vector<16x256xf32> -> vector<16x256xf32>
    %94 = arith.addf %86, %93 : vector<16x256xf32>
    %c0_57 = arith.constant 0 : index
    %c144 = arith.constant 144 : index
    %95 = vector.load %arg12[%c0_57, %c144] : memref<16x512xbf16, #tpu.memory_space<vmem>>, vector<4x256xbf16>
    %c7 = arith.constant 7 : index
    %c0_58 = arith.constant 0 : index
    %c0_59 = arith.constant 0 : index
    %96 = vector.load %arg3[%c7, %c0_58, %c0_59] : memref<9x16x4xbf16, #tpu.memory_space<vmem>>, vector<1x16x4xbf16>
    %97 = vector.shape_cast %96 : vector<1x16x4xbf16> to vector<16x4xbf16>
    %cst_60 = arith.constant dense<0.000000e+00> : vector<16x256xf32>
    %98 = tpu.matmul %97, %95, %cst_60 {dimension_numbers = #tpu.dot_dimension_numbers<[1], [0], [0], [1], [0, 0, 1, 1], [], []>} : vector<16x4xbf16>, vector<4x256xbf16>, vector<16x256xf32> -> vector<16x256xf32>
    %99 = arith.addf %94, %98 : vector<16x256xf32>
    %c0_61 = arith.constant 0 : index
    %c145 = arith.constant 145 : index
    %100 = vector.load %arg12[%c0_61, %c145] : memref<16x512xbf16, #tpu.memory_space<vmem>>, vector<4x256xbf16>
    %101 = arith.truncf %26 : vector<1x256xf32> to vector<1x256xbf16>
    %102 = vector.broadcast %101 : vector<1x256xbf16> to vector<4x256xbf16>
    %103 = arith.mulf %100, %102 : vector<4x256xbf16>
    %c8 = arith.constant 8 : index
    %c0_62 = arith.constant 0 : index
    %c0_63 = arith.constant 0 : index
    %104 = vector.load %arg3[%c8, %c0_62, %c0_63] : memref<9x16x4xbf16, #tpu.memory_space<vmem>>, vector<1x16x4xbf16>
    %105 = vector.shape_cast %104 : vector<1x16x4xbf16> to vector<16x4xbf16>
    %cst_64 = arith.constant dense<0.000000e+00> : vector<16x256xf32>
    %106 = tpu.matmul %105, %103, %cst_64 {dimension_numbers = #tpu.dot_dimension_numbers<[1], [0], [0], [1], [0, 0, 1, 1], [], []>} : vector<16x4xbf16>, vector<4x256xbf16>, vector<16x256xf32> -> vector<16x256xf32>
    %107 = arith.addf %99, %106 : vector<16x256xf32>
    %cst_65 = arith.constant 0.000000e+00 : f32
    %108 = vector.broadcast %cst_65 : f32 to vector<16x256xf32>
    %109 = arith.maximumf %107, %108 : vector<16x256xf32>
    %cst_66 = arith.constant dense<0xFF800000> : vector<256xf32>
    %110 = vector.multi_reduction <maximumf>, %37, %cst_66 [0] : vector<16x256xf32> to vector<256xf32>
    %111 = vector.shape_cast %110 : vector<256xf32> to vector<1x256xf32>
    %cst_67 = arith.constant dense<0.000000e+00> : vector<256xf32>
    %112 = vector.multi_reduction <add>, %37, %cst_67 [0] : vector<16x256xf32> to vector<256xf32>
    %113 = vector.shape_cast %112 : vector<256xf32> to vector<1x256xf32>
    %cst_68 = arith.constant 1.600000e+01 : f32
    %114 = vector.broadcast %cst_68 : f32 to vector<1x256xf32>
    %115 = arith.divf %113, %114 : vector<1x256xf32>
    %cst_69 = arith.constant dense<0xFF800000> : vector<256xf32>
    %116 = vector.multi_reduction <maximumf>, %109, %cst_69 [0] : vector<16x256xf32> to vector<256xf32>
    %117 = vector.shape_cast %116 : vector<256xf32> to vector<1x256xf32>
    %cst_70 = arith.constant dense<0.000000e+00> : vector<256xf32>
    %118 = vector.multi_reduction <add>, %109, %cst_70 [0] : vector<16x256xf32> to vector<256xf32>
    %119 = vector.shape_cast %118 : vector<256xf32> to vector<1x256xf32>
    %cst_71 = arith.constant 1.600000e+01 : f32
    %120 = vector.broadcast %cst_71 : f32 to vector<1x256xf32>
    %121 = arith.divf %119, %120 : vector<1x256xf32>
    %122 = tpu.concatenate %111, %115, %117, %121 in 0 : vector<1x256xf32>, vector<1x256xf32>, vector<1x256xf32>, vector<1x256xf32> -> vector<4x256xf32>
    %c0_72 = arith.constant 0 : index
    %c128_73 = arith.constant 128 : index
    %123 = vector.load %arg13[%c0_72, %c128_73] : memref<8x512xf32, #tpu.memory_space<vmem>>, vector<4x256xf32>
    tpu.vector_store %arg13[%c0_72, %c128_73], %122 {strides = array<i32>} : memref<8x512xf32, #tpu.memory_space<vmem>>, vector<4x256xf32>,
    %cst_74 = arith.constant 0.000000e+00 : f32
    %124 = vector.broadcast %cst_74 : f32 to vector<1x256xf32>
    %c0_75 = arith.constant 0 : index
    %125 = memref.load %arg6[%c0_75] : memref<2xf32, #tpu.memory_space<smem>>
    %126 = vector.broadcast %125 : f32 to vector<1x256xf32>
    %127 = arith.addf %124, %126 : vector<1x256xf32>
    %cst_76 = arith.constant 0.000000e+00 : f32
    %128 = vector.broadcast %cst_76 : f32 to vector<1x256xf32>
    %c1_77 = arith.constant 1 : index
    %129 = memref.load %arg6[%c1_77] : memref<2xf32, #tpu.memory_space<smem>>
    %130 = vector.broadcast %129 : f32 to vector<1x256xf32>
    %131 = arith.addf %128, %130 : vector<1x256xf32>
    %c0_78 = arith.constant 0 : index
    %c111_79 = arith.constant 111 : index
    %132 = vector.load %arg13[%c0_78, %c111_79] : memref<8x512xf32, #tpu.memory_space<vmem>>, vector<4x256xf32>
    %c0_80 = arith.constant 0 : index
    %c0_81 = arith.constant 0 : index
    %133 = vector.load %arg5[%c0_80, %c0_81] : memref<4x18xf32, #tpu.memory_space<vmem>>, vector<4x1xf32>
    %134 = vector.broadcast %133 : vector<4x1xf32> to vector<4x256xf32>
    %135 = arith.mulf %132, %134 : vector<4x256xf32>
    %cst_82 = arith.constant dense<0.000000e+00> : vector<256xf32>
    %136 = vector.multi_reduction <add>, %135, %cst_82 [0] : vector<4x256xf32> to vector<256xf32>
    %137 = vector.shape_cast %136 : vector<256xf32> to vector<1x256xf32>
    %138 = arith.mulf %137, %21 : vector<1x256xf32>
    %139 = arith.addf %127, %138 : vector<1x256xf32>
    %c0_83 = arith.constant 0 : index
    %c1_84 = arith.constant 1 : index
    %140 = vector.load %arg5[%c0_83, %c1_84] : memref<4x18xf32, #tpu.memory_space<vmem>>, vector<4x1xf32>
    %141 = vector.broadcast %140 : vector<4x1xf32> to vector<4x256xf32>
    %142 = arith.mulf %132, %141 : vector<4x256xf32>
    %cst_85 = arith.constant dense<0.000000e+00> : vector<256xf32>
    %143 = vector.multi_reduction <add>, %142, %cst_85 [0] : vector<4x256xf32> to vector<256xf32>
    %144 = vector.shape_cast %143 : vector<256xf32> to vector<1x256xf32>
    %145 = arith.mulf %144, %21 : vector<1x256xf32>
    %146 = arith.addf %131, %145 : vector<1x256xf32>
    %c0_86 = arith.constant 0 : index
    %c112_87 = arith.constant 112 : index
    %147 = vector.load %arg13[%c0_86, %c112_87] : memref<8x512xf32, #tpu.memory_space<vmem>>, vector<4x256xf32>
    %c0_88 = arith.constant 0 : index
    %c2_89 = arith.constant 2 : index
    %148 = vector.load %arg5[%c0_88, %c2_89] : memref<4x18xf32, #tpu.memory_space<vmem>>, vector<4x1xf32>
    %149 = vector.broadcast %148 : vector<4x1xf32> to vector<4x256xf32>
    %150 = arith.mulf %147, %149 : vector<4x256xf32>
    %cst_90 = arith.constant dense<0.000000e+00> : vector<256xf32>
    %151 = vector.multi_reduction <add>, %150, %cst_90 [0] : vector<4x256xf32> to vector<256xf32>
    %152 = vector.shape_cast %151 : vector<256xf32> to vector<1x256xf32>
    %153 = arith.addf %139, %152 : vector<1x256xf32>
    %c0_91 = arith.constant 0 : index
    %c3_92 = arith.constant 3 : index
    %154 = vector.load %arg5[%c0_91, %c3_92] : memref<4x18xf32, #tpu.memory_space<vmem>>, vector<4x1xf32>
    %155 = vector.broadcast %154 : vector<4x1xf32> to vector<4x256xf32>
    %156 = arith.mulf %147, %155 : vector<4x256xf32>
    %cst_93 = arith.constant dense<0.000000e+00> : vector<256xf32>
    %157 = vector.multi_reduction <add>, %156, %cst_93 [0] : vector<4x256xf32> to vector<256xf32>
    %158 = vector.shape_cast %157 : vector<256xf32> to vector<1x256xf32>
    %159 = arith.addf %146, %158 : vector<1x256xf32>
    %c0_94 = arith.constant 0 : index
    %c113_95 = arith.constant 113 : index
    %160 = vector.load %arg13[%c0_94, %c113_95] : memref<8x512xf32, #tpu.memory_space<vmem>>, vector<4x256xf32>
    %c0_96 = arith.constant 0 : index
    %c4_97 = arith.constant 4 : index
    %161 = vector.load %arg5[%c0_96, %c4_97] : memref<4x18xf32, #tpu.memory_space<vmem>>, vector<4x1xf32>
    %162 = vector.broadcast %161 : vector<4x1xf32> to vector<4x256xf32>
    %163 = arith.mulf %160, %162 : vector<4x256xf32>
    %cst_98 = arith.constant dense<0.000000e+00> : vector<256xf32>
    %164 = vector.multi_reduction <add>, %163, %cst_98 [0] : vector<4x256xf32> to vector<256xf32>
    %165 = vector.shape_cast %164 : vector<256xf32> to vector<1x256xf32>
    %166 = arith.mulf %165, %26 : vector<1x256xf32>
    %167 = arith.addf %153, %166 : vector<1x256xf32>
    %c0_99 = arith.constant 0 : index
    %c5_100 = arith.constant 5 : index
    %168 = vector.load %arg5[%c0_99, %c5_100] : memref<4x18xf32, #tpu.memory_space<vmem>>, vector<4x1xf32>
    %169 = vector.broadcast %168 : vector<4x1xf32> to vector<4x256xf32>
    %170 = arith.mulf %160, %169 : vector<4x256xf32>
    %cst_101 = arith.constant dense<0.000000e+00> : vector<256xf32>
    %171 = vector.multi_reduction <add>, %170, %cst_101 [0] : vector<4x256xf32> to vector<256xf32>
    %172 = vector.shape_cast %171 : vector<256xf32> to vector<1x256xf32>
    %173 = arith.mulf %172, %26 : vector<1x256xf32>
    %174 = arith.addf %159, %173 : vector<1x256xf32>
    %c0_102 = arith.constant 0 : index
    %c127_103 = arith.constant 127 : index
    %175 = vector.load %arg13[%c0_102, %c127_103] : memref<8x512xf32, #tpu.memory_space<vmem>>, vector<4x256xf32>
    %c0_104 = arith.constant 0 : index
    %c6_105 = arith.constant 6 : index
    %176 = vector.load %arg5[%c0_104, %c6_105] : memref<4x18xf32, #tpu.memory_space<vmem>>, vector<4x1xf32>
    %177 = vector.broadcast %176 : vector<4x1xf32> to vector<4x256xf32>
    %178 = arith.mulf %175, %177 : vector<4x256xf32>
    %cst_106 = arith.constant dense<0.000000e+00> : vector<256xf32>
    %179 = vector.multi_reduction <add>, %178, %cst_106 [0] : vector<4x256xf32> to vector<256xf32>
    %180 = vector.shape_cast %179 : vector<256xf32> to vector<1x256xf32>
    %181 = arith.mulf %180, %21 : vector<1x256xf32>
    %182 = arith.addf %167, %181 : vector<1x256xf32>
    %c0_107 = arith.constant 0 : index
    %c7_108 = arith.constant 7 : index
    %183 = vector.load %arg5[%c0_107, %c7_108] : memref<4x18xf32, #tpu.memory_space<vmem>>, vector<4x1xf32>
    %184 = vector.broadcast %183 : vector<4x1xf32> to vector<4x256xf32>
    %185 = arith.mulf %175, %184 : vector<4x256xf32>
    %cst_109 = arith.constant dense<0.000000e+00> : vector<256xf32>
    %186 = vector.multi_reduction <add>, %185, %cst_109 [0] : vector<4x256xf32> to vector<256xf32>
    %187 = vector.shape_cast %186 : vector<256xf32> to vector<1x256xf32>
    %188 = arith.mulf %187, %21 : vector<1x256xf32>
    %189 = arith.addf %174, %188 : vector<1x256xf32>
    %c0_110 = arith.constant 0 : index
    %c128_111 = arith.constant 128 : index
    %190 = vector.load %arg13[%c0_110, %c128_111] : memref<8x512xf32, #tpu.memory_space<vmem>>, vector<4x256xf32>
    %c0_112 = arith.constant 0 : index
    %c8_113 = arith.constant 8 : index
    %191 = vector.load %arg5[%c0_112, %c8_113] : memref<4x18xf32, #tpu.memory_space<vmem>>, vector<4x1xf32>
    %192 = vector.broadcast %191 : vector<4x1xf32> to vector<4x256xf32>
    %193 = arith.mulf %190, %192 : vector<4x256xf32>
    %cst_114 = arith.constant dense<0.000000e+00> : vector<256xf32>
    %194 = vector.multi_reduction <add>, %193, %cst_114 [0] : vector<4x256xf32> to vector<256xf32>
    %195 = vector.shape_cast %194 : vector<256xf32> to vector<1x256xf32>
    %196 = arith.addf %182, %195 : vector<1x256xf32>
    %c0_115 = arith.constant 0 : index
    %c9 = arith.constant 9 : index
    %197 = vector.load %arg5[%c0_115, %c9] : memref<4x18xf32, #tpu.memory_space<vmem>>, vector<4x1xf32>
    %198 = vector.broadcast %197 : vector<4x1xf32> to vector<4x256xf32>
    %199 = arith.mulf %190, %198 : vector<4x256xf32>
    %cst_116 = arith.constant dense<0.000000e+00> : vector<256xf32>
    %200 = vector.multi_reduction <add>, %199, %cst_116 [0] : vector<4x256xf32> to vector<256xf32>
    %201 = vector.shape_cast %200 : vector<256xf32> to vector<1x256xf32>
    %202 = arith.addf %189, %201 : vector<1x256xf32>
    %c0_117 = arith.constant 0 : index
    %c129_118 = arith.constant 129 : index
    %203 = vector.load %arg13[%c0_117, %c129_118] : memref<8x512xf32, #tpu.memory_space<vmem>>, vector<4x256xf32>
    %c0_119 = arith.constant 0 : index
    %c10 = arith.constant 10 : index
    %204 = vector.load %arg5[%c0_119, %c10] : memref<4x18xf32, #tpu.memory_space<vmem>>, vector<4x1xf32>
    %205 = vector.broadcast %204 : vector<4x1xf32> to vector<4x256xf32>
    %206 = arith.mulf %203, %205 : vector<4x256xf32>
    %cst_120 = arith.constant dense<0.000000e+00> : vector<256xf32>
    %207 = vector.multi_reduction <add>, %206, %cst_120 [0] : vector<4x256xf32> to vector<256xf32>
    %208 = vector.shape_cast %207 : vector<256xf32> to vector<1x256xf32>
    %209 = arith.mulf %208, %26 : vector<1x256xf32>
    %210 = arith.addf %196, %209 : vector<1x256xf32>
    %c0_121 = arith.constant 0 : index
    %c11 = arith.constant 11 : index
    %211 = vector.load %arg5[%c0_121, %c11] : memref<4x18xf32, #tpu.memory_space<vmem>>, vector<4x1xf32>
    %212 = vector.broadcast %211 : vector<4x1xf32> to vector<4x256xf32>
    %213 = arith.mulf %203, %212 : vector<4x256xf32>
    %cst_122 = arith.constant dense<0.000000e+00> : vector<256xf32>
    %214 = vector.multi_reduction <add>, %213, %cst_122 [0] : vector<4x256xf32> to vector<256xf32>
    %215 = vector.shape_cast %214 : vector<256xf32> to vector<1x256xf32>
    %216 = arith.mulf %215, %26 : vector<1x256xf32>
    %217 = arith.addf %202, %216 : vector<1x256xf32>
    %c0_123 = arith.constant 0 : index
    %c143_124 = arith.constant 143 : index
    %218 = vector.load %arg13[%c0_123, %c143_124] : memref<8x512xf32, #tpu.memory_space<vmem>>, vector<4x256xf32>
    %c0_125 = arith.constant 0 : index
    %c12 = arith.constant 12 : index
    %219 = vector.load %arg5[%c0_125, %c12] : memref<4x18xf32, #tpu.memory_space<vmem>>, vector<4x1xf32>
    %220 = vector.broadcast %219 : vector<4x1xf32> to vector<4x256xf32>
    %221 = arith.mulf %218, %220 : vector<4x256xf32>
    %cst_126 = arith.constant dense<0.000000e+00> : vector<256xf32>
    %222 = vector.multi_reduction <add>, %221, %cst_126 [0] : vector<4x256xf32> to vector<256xf32>
    %223 = vector.shape_cast %222 : vector<256xf32> to vector<1x256xf32>
    %224 = arith.mulf %223, %21 : vector<1x256xf32>
    %225 = arith.addf %210, %224 : vector<1x256xf32>
    %c0_127 = arith.constant 0 : index
    %c13 = arith.constant 13 : index
    %226 = vector.load %arg5[%c0_127, %c13] : memref<4x18xf32, #tpu.memory_space<vmem>>, vector<4x1xf32>
    %227 = vector.broadcast %226 : vector<4x1xf32> to vector<4x256xf32>
    %228 = arith.mulf %218, %227 : vector<4x256xf32>
    %cst_128 = arith.constant dense<0.000000e+00> : vector<256xf32>
    %229 = vector.multi_reduction <add>, %228, %cst_128 [0] : vector<4x256xf32> to vector<256xf32>
    %230 = vector.shape_cast %229 : vector<256xf32> to vector<1x256xf32>
    %231 = arith.mulf %230, %21 : vector<1x256xf32>
    %232 = arith.addf %217, %231 : vector<1x256xf32>
    %c0_129 = arith.constant 0 : index
    %c144_130 = arith.constant 144 : index
    %233 = vector.load %arg13[%c0_129, %c144_130] : memref<8x512xf32, #tpu.memory_space<vmem>>, vector<4x256xf32>
    %c0_131 = arith.constant 0 : index
    %c14 = arith.constant 14 : index
    %234 = vector.load %arg5[%c0_131, %c14] : memref<4x18xf32, #tpu.memory_space<vmem>>, vector<4x1xf32>
    %235 = vector.broadcast %234 : vector<4x1xf32> to vector<4x256xf32>
    %236 = arith.mulf %233, %235 : vector<4x256xf32>
    %cst_132 = arith.constant dense<0.000000e+00> : vector<256xf32>
    %237 = vector.multi_reduction <add>, %236, %cst_132 [0] : vector<4x256xf32> to vector<256xf32>
    %238 = vector.shape_cast %237 : vector<256xf32> to vector<1x256xf32>
    %239 = arith.addf %225, %238 : vector<1x256xf32>
    %c0_133 = arith.constant 0 : index
    %c15 = arith.constant 15 : index
    %240 = vector.load %arg5[%c0_133, %c15] : memref<4x18xf32, #tpu.memory_space<vmem>>, vector<4x1xf32>
    %241 = vector.broadcast %240 : vector<4x1xf32> to vector<4x256xf32>
    %242 = arith.mulf %233, %241 : vector<4x256xf32>
    %cst_134 = arith.constant dense<0.000000e+00> : vector<256xf32>
    %243 = vector.multi_reduction <add>, %242, %cst_134 [0] : vector<4x256xf32> to vector<256xf32>
    %244 = vector.shape_cast %243 : vector<256xf32> to vector<1x256xf32>
    %245 = arith.addf %232, %244 : vector<1x256xf32>
    %c0_135 = arith.constant 0 : index
    %c145_136 = arith.constant 145 : index
    %246 = vector.load %arg13[%c0_135, %c145_136] : memref<8x512xf32, #tpu.memory_space<vmem>>, vector<4x256xf32>
    %c0_137 = arith.constant 0 : index
    %c16 = arith.constant 16 : index
    %247 = vector.load %arg5[%c0_137, %c16] : memref<4x18xf32, #tpu.memory_space<vmem>>, vector<4x1xf32>
    %248 = vector.broadcast %247 : vector<4x1xf32> to vector<4x256xf32>
    %249 = arith.mulf %246, %248 : vector<4x256xf32>
    %cst_138 = arith.constant dense<0.000000e+00> : vector<256xf32>
    %250 = vector.multi_reduction <add>, %249, %cst_138 [0] : vector<4x256xf32> to vector<256xf32>
    %251 = vector.shape_cast %250 : vector<256xf32> to vector<1x256xf32>
    %252 = arith.mulf %251, %26 : vector<1x256xf32>
    %253 = arith.addf %239, %252 : vector<1x256xf32>
    %c0_139 = arith.constant 0 : index
    %c17 = arith.constant 17 : index
    %254 = vector.load %arg5[%c0_139, %c17] : memref<4x18xf32, #tpu.memory_space<vmem>>, vector<4x1xf32>
    %255 = vector.broadcast %254 : vector<4x1xf32> to vector<4x256xf32>
    %256 = arith.mulf %246, %255 : vector<4x256xf32>
    %cst_140 = arith.constant dense<0.000000e+00> : vector<256xf32>
    %257 = vector.multi_reduction <add>, %256, %cst_140 [0] : vector<4x256xf32> to vector<256xf32>
    %258 = vector.shape_cast %257 : vector<256xf32> to vector<1x256xf32>
    %259 = arith.mulf %258, %26 : vector<1x256xf32>
    %260 = arith.addf %245, %259 : vector<1x256xf32>
    %cst_141 = arith.constant 0.000000e+00 : f32
    %261 = vector.broadcast %cst_141 : f32 to vector<1x256xf32>
    %262 = arith.maximumf %253, %261 : vector<1x256xf32>
    %cst_142 = arith.constant 0.000000e+00 : f32
    %263 = vector.broadcast %cst_142 : f32 to vector<1x256xf32>
    %264 = arith.maximumf %260, %263 : vector<1x256xf32>
    %265 = tpu.concatenate %262, %264 in 0 : vector<1x256xf32>, vector<1x256xf32> -> vector<2x256xf32>
    %c0_143 = arith.constant 0 : index
    %c128_144 = arith.constant 128 : index
    %266 = vector.load %arg13[%c0_143, %c128_144] : memref<8x512xf32, #tpu.memory_space<vmem>>, vector<2x256xf32>
    tpu.vector_store %arg13[%c0_143, %c128_144], %265 {strides = array<i32>} : memref<8x512xf32, #tpu.memory_space<vmem>>, vector<2x256xf32>,
    %cst_145 = arith.constant 0.000000e+00 : f32
    %267 = vector.broadcast %cst_145 : f32 to vector<1x256xf32>
    %c0_146 = arith.constant 0 : index
    %268 = memref.load %arg8[%c0_146] : memref<1xf32, #tpu.memory_space<smem>>
    %269 = vector.broadcast %268 : f32 to vector<1x256xf32>
    %270 = arith.addf %267, %269 : vector<1x256xf32>
    %c0_147 = arith.constant 0 : index
    %c111_148 = arith.constant 111 : index
    %271 = vector.load %arg13[%c0_147, %c111_148] : memref<8x512xf32, #tpu.memory_space<vmem>>, vector<2x256xf32>
    %c0_149 = arith.constant 0 : index
    %c0_150 = arith.constant 0 : index
    %272 = vector.load %arg7[%c0_149, %c0_150] : memref<2x9xf32, #tpu.memory_space<vmem>>, vector<2x1xf32>
    %273 = vector.broadcast %272 : vector<2x1xf32> to vector<2x256xf32>
    %274 = arith.mulf %271, %273 : vector<2x256xf32>
    %cst_151 = arith.constant dense<0.000000e+00> : vector<256xf32>
    %275 = vector.multi_reduction <add>, %274, %cst_151 [0] : vector<2x256xf32> to vector<256xf32>
    %276 = vector.shape_cast %275 : vector<256xf32> to vector<1x256xf32>
    %277 = arith.mulf %276, %21 : vector<1x256xf32>
    %278 = arith.addf %270, %277 : vector<1x256xf32>
    %c0_152 = arith.constant 0 : index
    %c112_153 = arith.constant 112 : index
    %279 = vector.load %arg13[%c0_152, %c112_153] : memref<8x512xf32, #tpu.memory_space<vmem>>, vector<2x256xf32>
    %c0_154 = arith.constant 0 : index
    %c1_155 = arith.constant 1 : index
    %280 = vector.load %arg7[%c0_154, %c1_155] : memref<2x9xf32, #tpu.memory_space<vmem>>, vector<2x1xf32>
    %281 = vector.broadcast %280 : vector<2x1xf32> to vector<2x256xf32>
    %282 = arith.mulf %279, %281 : vector<2x256xf32>
    %cst_156 = arith.constant dense<0.000000e+00> : vector<256xf32>
    %283 = vector.multi_reduction <add>, %282, %cst_156 [0] : vector<2x256xf32> to vector<256xf32>
    %284 = vector.shape_cast %283 : vector<256xf32> to vector<1x256xf32>
    %285 = arith.addf %278, %284 : vector<1x256xf32>
    %c0_157 = arith.constant 0 : index
    %c113_158 = arith.constant 113 : index
    %286 = vector.load %arg13[%c0_157, %c113_158] : memref<8x512xf32, #tpu.memory_space<vmem>>, vector<2x256xf32>
    %c0_159 = arith.constant 0 : index
    %c2_160 = arith.constant 2 : index
    %287 = vector.load %arg7[%c0_159, %c2_160] : memref<2x9xf32, #tpu.memory_space<vmem>>, vector<2x1xf32>
    %288 = vector.broadcast %287 : vector<2x1xf32> to vector<2x256xf32>
    %289 = arith.mulf %286, %288 : vector<2x256xf32>
    %cst_161 = arith.constant dense<0.000000e+00> : vector<256xf32>
    %290 = vector.multi_reduction <add>, %289, %cst_161 [0] : vector<2x256xf32> to vector<256xf32>
    %291 = vector.shape_cast %290 : vector<256xf32> to vector<1x256xf32>
    %292 = arith.mulf %291, %26 : vector<1x256xf32>
    %293 = arith.addf %285, %292 : vector<1x256xf32>
    %c0_162 = arith.constant 0 : index
    %c127_163 = arith.constant 127 : index
    %294 = vector.load %arg13[%c0_162, %c127_163] : memref<8x512xf32, #tpu.memory_space<vmem>>, vector<2x256xf32>
    %c0_164 = arith.constant 0 : index
    %c3_165 = arith.constant 3 : index
    %295 = vector.load %arg7[%c0_164, %c3_165] : memref<2x9xf32, #tpu.memory_space<vmem>>, vector<2x1xf32>
    %296 = vector.broadcast %295 : vector<2x1xf32> to vector<2x256xf32>
    %297 = arith.mulf %294, %296 : vector<2x256xf32>
    %cst_166 = arith.constant dense<0.000000e+00> : vector<256xf32>
    %298 = vector.multi_reduction <add>, %297, %cst_166 [0] : vector<2x256xf32> to vector<256xf32>
    %299 = vector.shape_cast %298 : vector<256xf32> to vector<1x256xf32>
    %300 = arith.mulf %299, %21 : vector<1x256xf32>
    %301 = arith.addf %293, %300 : vector<1x256xf32>
    %c0_167 = arith.constant 0 : index
    %c128_168 = arith.constant 128 : index
    %302 = vector.load %arg13[%c0_167, %c128_168] : memref<8x512xf32, #tpu.memory_space<vmem>>, vector<2x256xf32>
    %c0_169 = arith.constant 0 : index
    %c4_170 = arith.constant 4 : index
    %303 = vector.load %arg7[%c0_169, %c4_170] : memref<2x9xf32, #tpu.memory_space<vmem>>, vector<2x1xf32>
    %304 = vector.broadcast %303 : vector<2x1xf32> to vector<2x256xf32>
    %305 = arith.mulf %302, %304 : vector<2x256xf32>
    %cst_171 = arith.constant dense<0.000000e+00> : vector<256xf32>
    %306 = vector.multi_reduction <add>, %305, %cst_171 [0] : vector<2x256xf32> to vector<256xf32>
    %307 = vector.shape_cast %306 : vector<256xf32> to vector<1x256xf32>
    %308 = arith.addf %301, %307 : vector<1x256xf32>
    %c0_172 = arith.constant 0 : index
    %c129_173 = arith.constant 129 : index
    %309 = vector.load %arg13[%c0_172, %c129_173] : memref<8x512xf32, #tpu.memory_space<vmem>>, vector<2x256xf32>
    %c0_174 = arith.constant 0 : index
    %c5_175 = arith.constant 5 : index
    %310 = vector.load %arg7[%c0_174, %c5_175] : memref<2x9xf32, #tpu.memory_space<vmem>>, vector<2x1xf32>
    %311 = vector.broadcast %310 : vector<2x1xf32> to vector<2x256xf32>
    %312 = arith.mulf %309, %311 : vector<2x256xf32>
    %cst_176 = arith.constant dense<0.000000e+00> : vector<256xf32>
    %313 = vector.multi_reduction <add>, %312, %cst_176 [0] : vector<2x256xf32> to vector<256xf32>
    %314 = vector.shape_cast %313 : vector<256xf32> to vector<1x256xf32>
    %315 = arith.mulf %314, %26 : vector<1x256xf32>
    %316 = arith.addf %308, %315 : vector<1x256xf32>
    %c0_177 = arith.constant 0 : index
    %c143_178 = arith.constant 143 : index
    %317 = vector.load %arg13[%c0_177, %c143_178] : memref<8x512xf32, #tpu.memory_space<vmem>>, vector<2x256xf32>
    %c0_179 = arith.constant 0 : index
    %c6_180 = arith.constant 6 : index
    %318 = vector.load %arg7[%c0_179, %c6_180] : memref<2x9xf32, #tpu.memory_space<vmem>>, vector<2x1xf32>
    %319 = vector.broadcast %318 : vector<2x1xf32> to vector<2x256xf32>
    %320 = arith.mulf %317, %319 : vector<2x256xf32>
    %cst_181 = arith.constant dense<0.000000e+00> : vector<256xf32>
    %321 = vector.multi_reduction <add>, %320, %cst_181 [0] : vector<2x256xf32> to vector<256xf32>
    %322 = vector.shape_cast %321 : vector<256xf32> to vector<1x256xf32>
    %323 = arith.mulf %322, %21 : vector<1x256xf32>
    %324 = arith.addf %316, %323 : vector<1x256xf32>
    %c0_182 = arith.constant 0 : index
    %c144_183 = arith.constant 144 : index
    %325 = vector.load %arg13[%c0_182, %c144_183] : memref<8x512xf32, #tpu.memory_space<vmem>>, vector<2x256xf32>
    %c0_184 = arith.constant 0 : index
    %c7_185 = arith.constant 7 : index
    %326 = vector.load %arg7[%c0_184, %c7_185] : memref<2x9xf32, #tpu.memory_space<vmem>>, vector<2x1xf32>
    %327 = vector.broadcast %326 : vector<2x1xf32> to vector<2x256xf32>
    %328 = arith.mulf %325, %327 : vector<2x256xf32>
    %cst_186 = arith.constant dense<0.000000e+00> : vector<256xf32>
    %329 = vector.multi_reduction <add>, %328, %cst_186 [0] : vector<2x256xf32> to vector<256xf32>
    %330 = vector.shape_cast %329 : vector<256xf32> to vector<1x256xf32>
    %331 = arith.addf %324, %330 : vector<1x256xf32>
    %c0_187 = arith.constant 0 : index
    %c145_188 = arith.constant 145 : index
    %332 = vector.load %arg13[%c0_187, %c145_188] : memref<8x512xf32, #tpu.memory_space<vmem>>, vector<2x256xf32>
    %c0_189 = arith.constant 0 : index
    %c8_190 = arith.constant 8 : index
    %333 = vector.load %arg7[%c0_189, %c8_190] : memref<2x9xf32, #tpu.memory_space<vmem>>, vector<2x1xf32>
    %334 = vector.broadcast %333 : vector<2x1xf32> to vector<2x256xf32>
    %335 = arith.mulf %332, %334 : vector<2x256xf32>
    %cst_191 = arith.constant dense<0.000000e+00> : vector<256xf32>
    %336 = vector.multi_reduction <add>, %335, %cst_191 [0] : vector<2x256xf32> to vector<256xf32>
    %337 = vector.shape_cast %336 : vector<256xf32> to vector<1x256xf32>
    %338 = arith.mulf %337, %26 : vector<1x256xf32>
    %339 = arith.addf %331, %338 : vector<1x256xf32>
    %340 = arith.negf %339 : vector<1x256xf32>
    %341 = math.exp %340 : vector<1x256xf32>
    %cst_192 = arith.constant 1.000000e+00 : f32
    %342 = vector.broadcast %cst_192 : f32 to vector<1x256xf32>
    %343 = arith.addf %342, %341 : vector<1x256xf32>
    %344 = arith.divf %342, %343 : vector<1x256xf32>
    %345 = vector.broadcast %344 : vector<1x256xf32> to vector<16x256xf32>
    %346 = arith.mulf %37, %345 : vector<16x256xf32>
    %cst_193 = arith.constant 1.000000e+00 : f32
    %347 = vector.broadcast %cst_193 : f32 to vector<1x256xf32>
    %348 = arith.subf %347, %344 : vector<1x256xf32>
    %349 = vector.broadcast %348 : vector<1x256xf32> to vector<16x256xf32>
    %350 = arith.mulf %109, %349 : vector<16x256xf32>
    %351 = arith.addf %346, %350 : vector<16x256xf32>
    %352 = arith.truncf %351 : vector<16x256xf32> to vector<16x256xbf16>
    %c0_194 = arith.constant 0 : index
    %c128_195 = arith.constant 128 : index
    %353 = vector.load %arg12[%c0_194, %c128_195] : memref<16x512xbf16, #tpu.memory_space<vmem>>, vector<16x256xbf16>
    tpu.vector_store %arg12[%c0_194, %c128_195], %352 {strides = array<i32>} : memref<16x512xbf16, #tpu.memory_space<vmem>>, vector<16x256xbf16>,
    %cst_196 = arith.constant 0.000000e+00 : f32
    %354 = vector.broadcast %cst_196 : f32 to vector<8x256xf32>
    %c0_197 = arith.constant 0 : index
    %c0_198 = arith.constant 0 : index
    %355 = vector.load %arg10[%c0_197, %c0_198] : memref<8x1xf32, #tpu.memory_space<vmem>>, vector<8x1xf32>
    %356 = vector.broadcast %355 : vector<8x1xf32> to vector<8x256xf32>
    %357 = arith.addf %354, %356 : vector<8x256xf32>
    %c0_199 = arith.constant 0 : index
    %c111_200 = arith.constant 111 : index
    %358 = vector.load %arg12[%c0_199, %c111_200] : memref<16x512xbf16, #tpu.memory_space<vmem>>, vector<16x256xbf16>
    %c0_201 = arith.constant 0 : index
    %c0_202 = arith.constant 0 : index
    %c0_203 = arith.constant 0 : index
    %359 = vector.load %arg9[%c0_201, %c0_202, %c0_203] : memref<9x8x16xbf16, #tpu.memory_space<vmem>>, vector<1x8x16xbf16>
    %360 = vector.shape_cast %359 : vector<1x8x16xbf16> to vector<8x16xbf16>
    %cst_204 = arith.constant dense<0.000000e+00> : vector<8x256xf32>
    %361 = tpu.matmul %360, %358, %cst_204 {dimension_numbers = #tpu.dot_dimension_numbers<[1], [0], [0], [1], [0, 0, 1, 1], [], []>} : vector<8x16xbf16>, vector<16x256xbf16>, vector<8x256xf32> -> vector<8x256xf32>
    %362 = vector.broadcast %21 : vector<1x256xf32> to vector<8x256xf32>
    %363 = arith.mulf %361, %362 : vector<8x256xf32>
    %364 = arith.addf %357, %363 : vector<8x256xf32>
    %c0_205 = arith.constant 0 : index
    %c112_206 = arith.constant 112 : index
    %365 = vector.load %arg12[%c0_205, %c112_206] : memref<16x512xbf16, #tpu.memory_space<vmem>>, vector<16x256xbf16>
    %c1_207 = arith.constant 1 : index
    %c0_208 = arith.constant 0 : index
    %c0_209 = arith.constant 0 : index
    %366 = vector.load %arg9[%c1_207, %c0_208, %c0_209] : memref<9x8x16xbf16, #tpu.memory_space<vmem>>, vector<1x8x16xbf16>
    %367 = vector.shape_cast %366 : vector<1x8x16xbf16> to vector<8x16xbf16>
    %cst_210 = arith.constant dense<0.000000e+00> : vector<8x256xf32>
    %368 = tpu.matmul %367, %365, %cst_210 {dimension_numbers = #tpu.dot_dimension_numbers<[1], [0], [0], [1], [0, 0, 1, 1], [], []>} : vector<8x16xbf16>, vector<16x256xbf16>, vector<8x256xf32> -> vector<8x256xf32>
    %369 = arith.addf %364, %368 : vector<8x256xf32>
    %c0_211 = arith.constant 0 : index
    %c113_212 = arith.constant 113 : index
    %370 = vector.load %arg12[%c0_211, %c113_212] : memref<16x512xbf16, #tpu.memory_space<vmem>>, vector<16x256xbf16>
    %c2_213 = arith.constant 2 : index
    %c0_214 = arith.constant 0 : index
    %c0_215 = arith.constant 0 : index
    %371 = vector.load %arg9[%c2_213, %c0_214, %c0_215] : memref<9x8x16xbf16, #tpu.memory_space<vmem>>, vector<1x8x16xbf16>
    %372 = vector.shape_cast %371 : vector<1x8x16xbf16> to vector<8x16xbf16>
    %cst_216 = arith.constant dense<0.000000e+00> : vector<8x256xf32>
    %373 = tpu.matmul %372, %370, %cst_216 {dimension_numbers = #tpu.dot_dimension_numbers<[1], [0], [0], [1], [0, 0, 1, 1], [], []>} : vector<8x16xbf16>, vector<16x256xbf16>, vector<8x256xf32> -> vector<8x256xf32>
    %374 = vector.broadcast %26 : vector<1x256xf32> to vector<8x256xf32>
    %375 = arith.mulf %373, %374 : vector<8x256xf32>
    %376 = arith.addf %369, %375 : vector<8x256xf32>
    %c0_217 = arith.constant 0 : index
    %c127_218 = arith.constant 127 : index
    %377 = vector.load %arg12[%c0_217, %c127_218] : memref<16x512xbf16, #tpu.memory_space<vmem>>, vector<16x256xbf16>
    %c3_219 = arith.constant 3 : index
    %c0_220 = arith.constant 0 : index
    %c0_221 = arith.constant 0 : index
    %378 = vector.load %arg9[%c3_219, %c0_220, %c0_221] : memref<9x8x16xbf16, #tpu.memory_space<vmem>>, vector<1x8x16xbf16>
    %379 = vector.shape_cast %378 : vector<1x8x16xbf16> to vector<8x16xbf16>
    %cst_222 = arith.constant dense<0.000000e+00> : vector<8x256xf32>
    %380 = tpu.matmul %379, %377, %cst_222 {dimension_numbers = #tpu.dot_dimension_numbers<[1], [0], [0], [1], [0, 0, 1, 1], [], []>} : vector<8x16xbf16>, vector<16x256xbf16>, vector<8x256xf32> -> vector<8x256xf32>
    %381 = vector.broadcast %21 : vector<1x256xf32> to vector<8x256xf32>
    %382 = arith.mulf %380, %381 : vector<8x256xf32>
    %383 = arith.addf %376, %382 : vector<8x256xf32>
    %c0_223 = arith.constant 0 : index
    %c128_224 = arith.constant 128 : index
    %384 = vector.load %arg12[%c0_223, %c128_224] : memref<16x512xbf16, #tpu.memory_space<vmem>>, vector<16x256xbf16>
    %c4_225 = arith.constant 4 : index
    %c0_226 = arith.constant 0 : index
    %c0_227 = arith.constant 0 : index
    %385 = vector.load %arg9[%c4_225, %c0_226, %c0_227] : memref<9x8x16xbf16, #tpu.memory_space<vmem>>, vector<1x8x16xbf16>
    %386 = vector.shape_cast %385 : vector<1x8x16xbf16> to vector<8x16xbf16>
    %cst_228 = arith.constant dense<0.000000e+00> : vector<8x256xf32>
    %387 = tpu.matmul %386, %384, %cst_228 {dimension_numbers = #tpu.dot_dimension_numbers<[1], [0], [0], [1], [0, 0, 1, 1], [], []>} : vector<8x16xbf16>, vector<16x256xbf16>, vector<8x256xf32> -> vector<8x256xf32>
    %388 = arith.addf %383, %387 : vector<8x256xf32>
    %c0_229 = arith.constant 0 : index
    %c129_230 = arith.constant 129 : index
    %389 = vector.load %arg12[%c0_229, %c129_230] : memref<16x512xbf16, #tpu.memory_space<vmem>>, vector<16x256xbf16>
    %c5_231 = arith.constant 5 : index
    %c0_232 = arith.constant 0 : index
    %c0_233 = arith.constant 0 : index
    %390 = vector.load %arg9[%c5_231, %c0_232, %c0_233] : memref<9x8x16xbf16, #tpu.memory_space<vmem>>, vector<1x8x16xbf16>
    %391 = vector.shape_cast %390 : vector<1x8x16xbf16> to vector<8x16xbf16>
    %cst_234 = arith.constant dense<0.000000e+00> : vector<8x256xf32>
    %392 = tpu.matmul %391, %389, %cst_234 {dimension_numbers = #tpu.dot_dimension_numbers<[1], [0], [0], [1], [0, 0, 1, 1], [], []>} : vector<8x16xbf16>, vector<16x256xbf16>, vector<8x256xf32> -> vector<8x256xf32>
    %393 = vector.broadcast %26 : vector<1x256xf32> to vector<8x256xf32>
    %394 = arith.mulf %392, %393 : vector<8x256xf32>
    %395 = arith.addf %388, %394 : vector<8x256xf32>
    %c0_235 = arith.constant 0 : index
    %c143_236 = arith.constant 143 : index
    %396 = vector.load %arg12[%c0_235, %c143_236] : memref<16x512xbf16, #tpu.memory_space<vmem>>, vector<16x256xbf16>
    %c6_237 = arith.constant 6 : index
    %c0_238 = arith.constant 0 : index
    %c0_239 = arith.constant 0 : index
    %397 = vector.load %arg9[%c6_237, %c0_238, %c0_239] : memref<9x8x16xbf16, #tpu.memory_space<vmem>>, vector<1x8x16xbf16>
    %398 = vector.shape_cast %397 : vector<1x8x16xbf16> to vector<8x16xbf16>
    %cst_240 = arith.constant dense<0.000000e+00> : vector<8x256xf32>
    %399 = tpu.matmul %398, %396, %cst_240 {dimension_numbers = #tpu.dot_dimension_numbers<[1], [0], [0], [1], [0, 0, 1, 1], [], []>} : vector<8x16xbf16>, vector<16x256xbf16>, vector<8x256xf32> -> vector<8x256xf32>
    %400 = vector.broadcast %21 : vector<1x256xf32> to vector<8x256xf32>
    %401 = arith.mulf %399, %400 : vector<8x256xf32>
    %402 = arith.addf %395, %401 : vector<8x256xf32>
    %c0_241 = arith.constant 0 : index
    %c144_242 = arith.constant 144 : index
    %403 = vector.load %arg12[%c0_241, %c144_242] : memref<16x512xbf16, #tpu.memory_space<vmem>>, vector<16x256xbf16>
    %c7_243 = arith.constant 7 : index
    %c0_244 = arith.constant 0 : index
    %c0_245 = arith.constant 0 : index
    %404 = vector.load %arg9[%c7_243, %c0_244, %c0_245] : memref<9x8x16xbf16, #tpu.memory_space<vmem>>, vector<1x8x16xbf16>
    %405 = vector.shape_cast %404 : vector<1x8x16xbf16> to vector<8x16xbf16>
    %cst_246 = arith.constant dense<0.000000e+00> : vector<8x256xf32>
    %406 = tpu.matmul %405, %403, %cst_246 {dimension_numbers = #tpu.dot_dimension_numbers<[1], [0], [0], [1], [0, 0, 1, 1], [], []>} : vector<8x16xbf16>, vector<16x256xbf16>, vector<8x256xf32> -> vector<8x256xf32>
    %407 = arith.addf %402, %406 : vector<8x256xf32>
    %c0_247 = arith.constant 0 : index
    %c145_248 = arith.constant 145 : index
    %408 = vector.load %arg12[%c0_247, %c145_248] : memref<16x512xbf16, #tpu.memory_space<vmem>>, vector<16x256xbf16>
    %c8_249 = arith.constant 8 : index
    %c0_250 = arith.constant 0 : index
    %c0_251 = arith.constant 0 : index
    %409 = vector.load %arg9[%c8_249, %c0_250, %c0_251] : memref<9x8x16xbf16, #tpu.memory_space<vmem>>, vector<1x8x16xbf16>
    %410 = vector.shape_cast %409 : vector<1x8x16xbf16> to vector<8x16xbf16>
    %cst_252 = arith.constant dense<0.000000e+00> : vector<8x256xf32>
    %411 = tpu.matmul %410, %408, %cst_252 {dimension_numbers = #tpu.dot_dimension_numbers<[1], [0], [0], [1], [0, 0, 1, 1], [], []>} : vector<8x16xbf16>, vector<16x256xbf16>, vector<8x256xf32> -> vector<8x256xf32>
    %412 = vector.broadcast %26 : vector<1x256xf32> to vector<8x256xf32>
    %413 = arith.mulf %411, %412 : vector<8x256xf32>
    %414 = arith.addf %407, %413 : vector<8x256xf32>
    %cst_253 = arith.constant 0.000000e+00 : f32
    %415 = vector.broadcast %cst_253 : f32 to vector<8x256xf32>
    %416 = arith.maximumf %414, %415 : vector<8x256xf32>
    %c0_254 = arith.constant 0 : index
    %c0_255 = arith.constant 0 : index
    %c0_256 = arith.constant 0 : index
    %417 = vector.load %arg11[%c0_254, %c0_255, %c0_256] : memref<1x8x256xf32, #tpu.memory_space<vmem>>, vector<1x8x256xf32>
    %418 = vector.shape_cast %417 : vector<1x8x256xf32> to vector<8x256xf32>
    %419 = vector.shape_cast %416 : vector<8x256xf32> to vector<1x8x256xf32>
    tpu.vector_store %arg11[%c0_254, %c0_255, %c0_256], %419 {strides = array<i32>} : memref<1x8x256xf32, #tpu.memory_space<vmem>>, vector<1x8x256xf32>,
    return
  }
  func.func @transform_0(%arg0: i32) -> (i32, i32, i32) {
    %c0_i32 = arith.constant 0 : i32
    %c0_i32_0 = arith.constant 0 : i32
    %c0_i32_1 = arith.constant 0 : i32
    return %arg0, %c0_i32, %c0_i32_0 : i32, i32, i32
  }
  func.func @transform_1(%arg0: i32) -> (i32, i32, i32) {
    %c0_i32 = arith.constant 0 : i32
    %c0_i32_0 = arith.constant 0 : i32
    %c0_i32_1 = arith.constant 0 : i32
    return %arg0, %c0_i32, %c0_i32_0 : i32, i32, i32
  }
  func.func @transform_2(%arg0: i32) -> (i32, i32, i32) {
    %c0_i32 = arith.constant 0 : i32
    %c0_i32_0 = arith.constant 0 : i32
    %c0_i32_1 = arith.constant 0 : i32
    %c0_i32_2 = arith.constant 0 : i32
    return %c0_i32, %c0_i32_0, %c0_i32_1 : i32, i32, i32
  }
  func.func @transform_3(%arg0: i32) -> (i32, i32) {
    %c0_i32 = arith.constant 0 : i32
    %c0_i32_0 = arith.constant 0 : i32
    %c0_i32_1 = arith.constant 0 : i32
    return %c0_i32, %c0_i32_0 : i32, i32
  }
  func.func @transform_4(%arg0: i32) -> (i32, i32) {
    %c0_i32 = arith.constant 0 : i32
    %c0_i32_0 = arith.constant 0 : i32
    %c0_i32_1 = arith.constant 0 : i32
    return %c0_i32, %c0_i32_0 : i32, i32
  }
  func.func @transform_5(%arg0: i32) -> i32 {
    %c0_i32 = arith.constant 0 : i32
    %c0_i32_0 = arith.constant 0 : i32
    return %c0_i32 : i32
  }
  func.func @transform_6(%arg0: i32) -> (i32, i32) {
    %c0_i32 = arith.constant 0 : i32
    %c0_i32_0 = arith.constant 0 : i32
    %c0_i32_1 = arith.constant 0 : i32
    return %c0_i32, %c0_i32_0 : i32, i32
  }
  func.func @transform_7(%arg0: i32) -> i32 {
    %c0_i32 = arith.constant 0 : i32
    %c0_i32_0 = arith.constant 0 : i32
    return %c0_i32 : i32
  }
  func.func @transform_8(%arg0: i32) -> (i32, i32, i32) {
    %c0_i32 = arith.constant 0 : i32
    %c0_i32_0 = arith.constant 0 : i32
    %c0_i32_1 = arith.constant 0 : i32
    %c0_i32_2 = arith.constant 0 : i32
    return %c0_i32, %c0_i32_0, %c0_i32_1 : i32, i32, i32
  }
  func.func @transform_9(%arg0: i32) -> (i32, i32) {
    %c0_i32 = arith.constant 0 : i32
    %c0_i32_0 = arith.constant 0 : i32
    %c0_i32_1 = arith.constant 0 : i32
    return %c0_i32, %c0_i32_0 : i32, i32
  }
  func.func @transform_10(%arg0: i32) -> (i32, i32, i32) {
    %c0_i32 = arith.constant 0 : i32
    %c0_i32_0 = arith.constant 0 : i32
    %c0_i32_1 = arith.constant 0 : i32
    return %arg0, %c0_i32, %c0_i32_0 : i32, i32, i32
  }
}

</mosaic_0001>

<llo_original>
// kernel: tpu_custom_call.1
$region0: #{tpu_custom_call.1}
  #allocation0 [shape = 'u32[]', space=smem, size = 0x4, offset = 0x4, fixed_abs, tag = 'smem constant byte address 0x4 - core index']
  #allocation1 [shape = 'u32[144,128]{1,0:T(1,128)}', space=vmem, size = 0x12000, scoped, tag = 'internal scratch']
  #allocation2 [shape = 'bf16[16,512]{1,0:T(8,128)(2,1)}', space=vmem, size = 0x4000, scoped, tag = 'scratch operand']
  #allocation3 [shape = 'f32[8,512]{1,0:T(8,128)}', space=vmem, size = 0x4000, scoped, tag = 'scratch operand']
  #allocation4 [shape = 'f32[1]{0:T(128)S(6)}', space=smem, size = 0x200, scoped, tag = 'scoped memory for tpu_custom_call.1']
  %s0 = inlined_call_operand.vmem [shape: bf16[2,16,256], index: 0, kind: input, shape index: {}]
  %s1 = inlined_call_operand.vmem [shape: bf16[2,4,256], index: 1, kind: input, shape index: {}]
  %s2 = inlined_call_operand.vmem [shape: bf16[9,16,4], index: 2, kind: input, shape index: {}]
  %s3 = inlined_call_operand.vmem [shape: f32[16,1], index: 3, kind: input, shape index: {}]
  %s4 = inlined_call_operand.vmem [shape: f32[4,18], index: 4, kind: input, shape index: {}]
  %s5 = inlined_call_operand.vmem [shape: f32[2], index: 5, kind: input, shape index: {}]
  %s6 = inlined_call_operand.vmem [shape: f32[2,9], index: 6, kind: input, shape index: {}]
  %s7 = inlined_call_operand.<no memory space> [shape: f32[1], index: 7, kind: input, shape index: {}]
  %s8 = inlined_call_operand.vmem [shape: bf16[9,8,16], index: 8, kind: input, shape index: {}]
  %s9 = inlined_call_operand.vmem [shape: f32[8,1], index: 9, kind: input, shape index: {}]
  %s10 = inlined_call_operand.hbm [shape: f32[2,8,256], index: 10, kind: output, shape index: {}]
  %s11 = sld [smem:[#allocation0]]
  $region77: #{tpu_custom_call.1} parent=0
    _
  %s13 = ssub.s32 1, %s11
  %s14 = scalar_select 0, %s13, %s11
  %15 = sst [smem:[#allocation4]] %s7
  $region1: #{tpu_custom_call.1} parent=0
    #allocation5 [shape = 'u8[512]{0}', space=smem, size = 0x200, scoped, tag = 'input window, operand 5, single buffered']
    #allocation6 [shape = 's32[2]{0}', space=sflag, size = 0x8, scoped, tag = 'scoped memory for tpu_custom_call.1']
    #allocation7 [shape = 's32[2]{0}', space=sflag, size = 0x8, scoped, tag = 'scoped memory for tpu_custom_call.1']
    #allocation8 [shape = 'u8[16384]{0}', space=vmem, size = 0x4000, scoped, tag = 'output window, operand 0']
    %16 = vsyncpa [#allocation7], 0
    %17 = vsyncpa [#allocation6], 0
    %s18 = scalar_lea.sflag [#allocation6], 1
    %19 = vsyncpa %s18, 0
    loop: start=0, step=1, limit=4
    $region2: #{tpu_custom_call.1} parent=1 // loop_pre_header
      _
    $region3: #{tpu_custom_call.1} parent=1 // loop_header
      %s21 = sphi 0, %s25
      %p22 = scmp.ge.s32.totalorder %s21, 4
      %s31 = sphi 0, %s33
      %s34 = sphi 0, %s31
      %s35 = sphi 0, %s34
      %s51 = sphi 0, %s35
      %s57 = sphi 0, %s59
      %s60 = sphi 0, %s57
      %s61 = sphi 0, %s60
      %s77 = sphi 0, %s61
      %s81 = sphi 0, %s81
      %s83 = sphi 0, %s81
      %s84 = sphi 0, %s83
      %s98 = sphi 0, %s84
      %s102 = sphi 0, %s102
      %s104 = sphi 0, %s102
      %s105 = sphi 0, %s104
      %s119 = sphi 0, %s105
      %s123 = sphi 0, %s123
      %s125 = sphi 0, %s123
      %s126 = sphi 0, %s125
      %s140 = sphi 0, %s126
      %s144 = sphi 0, %s144
      %s146 = sphi 0, %s144
      %s147 = sphi 0, %s146
      %s161 = sphi 0, %s147
      %s165 = sphi 0, %s165
      %s167 = sphi 0, %s165
      %s168 = sphi 0, %s167
      %s182 = sphi 0, %s168
      %s186 = sphi 0, %s186
      %s188 = sphi 0, %s186
      %s189 = sphi 0, %s188
      %s203 = sphi 0, %s189
      %s207 = sphi 0, %s207
      %s209 = sphi 0, %s207
      %s210 = sphi 0, %s209
      %s224 = sphi 0, %s210
      %s228 = sphi 0, %s228
      %s230 = sphi 0, %s228
      %s231 = sphi 0, %s230
      %s245 = sphi 0, %s231
      %s251 = sphi 0, %s253
      %s254 = sphi 0, %s251
      %s255 = sphi 0, %s254
      %s271 = sphi 0, %s255
    $region4: #{tpu_custom_call.1} parent=1 // loop_header_branch
      %24 = sbr.rel (%p22) target = $region8
    $region5: #{tpu_custom_call.1} parent=1 // loop_body
      %s26 = ssub.s32 %s21, 1
      %s27 = ssub.s32 %s21, 2
      %s28 = sadd.s32 %s21, 1
      %s29 = ssub.s32 %s21, %s28
      %p30 = scmp.eq.s32.totalorder %s29, 0
      %s32 = sadd.s32 %s31, 1
      %s33 = scalar_select %p30, %s31, %s32
      %p36 = pneg %p30
      %p37 = scmp.eq.s32.totalorder %s21, 1
      %p38 = por %p36, %p37
      %p39 = scmp.ne.s32.totalorder %s31, %s34
      %p40 = scmp.eq.s32.totalorder %s21, 0
      %p41 = por %p39, %p40
      %p42 = scmp.ne.s32.totalorder %s31, %s34
      %p43 = scmp.eq.s32.totalorder %s26, 1
      %p44 = por %p42, %p43
      %p45 = scmp.ne.s32.totalorder %s34, %s35
      %p46 = scmp.eq.s32.totalorder %s26, 0
      %p47 = por %p45, %p46
      %p48 = scmp.ne.s32.totalorder %s34, %s35
      %p49 = scmp.eq.s32.totalorder %s27, 1
      %p50 = por %p48, %p49
      %p52 = scmp.ne.s32.totalorder %s35, %s51
      %p53 = scmp.eq.s32.totalorder %s27, 0
      %p54 = por %p52, %p53
      %s55 = ssub.s32 %s21, %s28
      %p56 = scmp.eq.s32.totalorder %s55, 0
      %s58 = sadd.s32 %s57, 1
      %s59 = scalar_select %p56, %s57, %s58
      %p62 = pneg %p56
      %p63 = scmp.eq.s32.totalorder %s21, 1
      %p64 = por %p62, %p63
      %p65 = scmp.ne.s32.totalorder %s57, %s60
      %p66 = scmp.eq.s32.totalorder %s21, 0
      %p67 = por %p65, %p66
      %p68 = scmp.ne.s32.totalorder %s57, %s60
      %p69 = scmp.eq.s32.totalorder %s26, 1
      %p70 = por %p68, %p69
      %p71 = scmp.ne.s32.totalorder %s60, %s61
      %p72 = scmp.eq.s32.totalorder %s26, 0
      %p73 = por %p71, %p72
      %p74 = scmp.ne.s32.totalorder %s60, %s61
      %p75 = scmp.eq.s32.totalorder %s27, 1
      %p76 = por %p74, %p75
      %p78 = scmp.ne.s32.totalorder %s61, %s77
      %p79 = scmp.eq.s32.totalorder %s27, 0
      %p80 = por %p78, %p79
      %s82 = sadd.s32 %s81, 1
      %p85 = scmp.eq.s32.totalorder %s21, 1
      %p86 = scmp.ne.s32.totalorder %s81, %s83
      %p87 = scmp.eq.s32.totalorder %s21, 0
      %p88 = por %p86, %p87
      %p89 = scmp.ne.s32.totalorder %s81, %s83
      %p90 = scmp.eq.s32.totalorder %s26, 1
      %p91 = por %p89, %p90
      %p92 = scmp.ne.s32.totalorder %s83, %s84
      %p93 = scmp.eq.s32.totalorder %s26, 0
      %p94 = por %p92, %p93
      %p95 = scmp.ne.s32.totalorder %s83, %s84
      %p96 = scmp.eq.s32.totalorder %s27, 1
      %p97 = por %p95, %p96
      %p99 = scmp.ne.s32.totalorder %s84, %s98
      %p100 = scmp.eq.s32.totalorder %s27, 0
      %p101 = por %p99, %p100
      %s103 = sadd.s32 %s102, 1
      %p106 = scmp.eq.s32.totalorder %s21, 1
      %p107 = scmp.ne.s32.totalorder %s102, %s104
      %p108 = scmp.eq.s32.totalorder %s21, 0
      %p109 = por %p107, %p108
      %p110 = scmp.ne.s32.totalorder %s102, %s104
      %p111 = scmp.eq.s32.totalorder %s26, 1
      %p112 = por %p110, %p111
      %p113 = scmp.ne.s32.totalorder %s104, %s105
      %p114 = scmp.eq.s32.totalorder %s26, 0
      %p115 = por %p113, %p114
      %p116 = scmp.ne.s32.totalorder %s104, %s105
      %p117 = scmp.eq.s32.totalorder %s27, 1
      %p118 = por %p116, %p117
      %p120 = scmp.ne.s32.totalorder %s105, %s119
      %p121 = scmp.eq.s32.totalorder %s27, 0
      %p122 = por %p120, %p121
      %s124 = sadd.s32 %s123, 1
      %p127 = scmp.eq.s32.totalorder %s21, 1
      %p128 = scmp.ne.s32.totalorder %s123, %s125
      %p129 = scmp.eq.s32.totalorder %s21, 0
      %p130 = por %p128, %p129
      %p131 = scmp.ne.s32.totalorder %s123, %s125
      %p132 = scmp.eq.s32.totalorder %s26, 1
      %p133 = por %p131, %p132
      %p134 = scmp.ne.s32.totalorder %s125, %s126
      %p135 = scmp.eq.s32.totalorder %s26, 0
      %p136 = por %p134, %p135
      %p137 = scmp.ne.s32.totalorder %s125, %s126
      %p138 = scmp.eq.s32.totalorder %s27, 1
      %p139 = por %p137, %p138
      %p141 = scmp.ne.s32.totalorder %s126, %s140
      %p142 = scmp.eq.s32.totalorder %s27, 0
      %p143 = por %p141, %p142
      %s145 = sadd.s32 %s144, 1
      %p148 = scmp.eq.s32.totalorder %s21, 1
      %p149 = scmp.ne.s32.totalorder %s144, %s146
      %p150 = scmp.eq.s32.totalorder %s21, 0
      %p151 = por %p149, %p150
      %p152 = scmp.ne.s32.totalorder %s144, %s146
      %p153 = scmp.eq.s32.totalorder %s26, 1
      %p154 = por %p152, %p153
      %p155 = scmp.ne.s32.totalorder %s146, %s147
      %p156 = scmp.eq.s32.totalorder %s26, 0
      %p157 = por %p155, %p156
      %p158 = scmp.ne.s32.totalorder %s146, %s147
      %p159 = scmp.eq.s32.totalorder %s27, 1
      %p160 = por %p158, %p159
      %p162 = scmp.ne.s32.totalorder %s147, %s161
      %p163 = scmp.eq.s32.totalorder %s27, 0
      %p164 = por %p162, %p163
      %s166 = sadd.s32 %s165, 1
      %p169 = scmp.eq.s32.totalorder %s21, 1
      %p170 = scmp.ne.s32.totalorder %s165, %s167
      %p171 = scmp.eq.s32.totalorder %s21, 0
      %p172 = por %p170, %p171
      %p173 = scmp.ne.s32.totalorder %s165, %s167
      %p174 = scmp.eq.s32.totalorder %s26, 1
      %p175 = por %p173, %p174
      %p176 = scmp.ne.s32.totalorder %s167, %s168
      %p177 = scmp.eq.s32.totalorder %s26, 0
      %p178 = por %p176, %p177
      %p179 = scmp.ne.s32.totalorder %s167, %s168
      %p180 = scmp.eq.s32.totalorder %s27, 1
      %p181 = por %p179, %p180
      %p183 = scmp.ne.s32.totalorder %s168, %s182
      %p184 = scmp.eq.s32.totalorder %s27, 0
      %p185 = por %p183, %p184
      %s187 = sadd.s32 %s186, 1
      %p190 = scmp.eq.s32.totalorder %s21, 1
      %p191 = scmp.ne.s32.totalorder %s186, %s188
      %p192 = scmp.eq.s32.totalorder %s21, 0
      %p193 = por %p191, %p192
      %p194 = scmp.ne.s32.totalorder %s186, %s188
      %p195 = scmp.eq.s32.totalorder %s26, 1
      %p196 = por %p194, %p195
      %p197 = scmp.ne.s32.totalorder %s188, %s189
      %p198 = scmp.eq.s32.totalorder %s26, 0
      %p199 = por %p197, %p198
      %p200 = scmp.ne.s32.totalorder %s188, %s189
      %p201 = scmp.eq.s32.totalorder %s27, 1
      %p202 = por %p200, %p201
      %p204 = scmp.ne.s32.totalorder %s189, %s203
      %p205 = scmp.eq.s32.totalorder %s27, 0
      %p206 = por %p204, %p205
      %s208 = sadd.s32 %s207, 1
      %p211 = scmp.eq.s32.totalorder %s21, 1
      %p212 = scmp.ne.s32.totalorder %s207, %s209
      %p213 = scmp.eq.s32.totalorder %s21, 0
      %p214 = por %p212, %p213
      %p215 = scmp.ne.s32.totalorder %s207, %s209
      %p216 = scmp.eq.s32.totalorder %s26, 1
      %p217 = por %p215, %p216
      %p218 = scmp.ne.s32.totalorder %s209, %s210
      %p219 = scmp.eq.s32.totalorder %s26, 0
      %p220 = por %p218, %p219
      %p221 = scmp.ne.s32.totalorder %s209, %s210
      %p222 = scmp.eq.s32.totalorder %s27, 1
      %p223 = por %p221, %p222
      %p225 = scmp.ne.s32.totalorder %s210, %s224
      %p226 = scmp.eq.s32.totalorder %s27, 0
      %p227 = por %p225, %p226
      %s229 = sadd.s32 %s228, 1
      %p232 = scmp.eq.s32.totalorder %s21, 1
      %p233 = scmp.ne.s32.totalorder %s228, %s230
      %p234 = scmp.eq.s32.totalorder %s21, 0
      %p235 = por %p233, %p234
      %p236 = scmp.ne.s32.totalorder %s228, %s230
      %p237 = scmp.eq.s32.totalorder %s26, 1
      %p238 = por %p236, %p237
      %p239 = scmp.ne.s32.totalorder %s230, %s231
      %p240 = scmp.eq.s32.totalorder %s26, 0
      %p241 = por %p239, %p240
      %p242 = scmp.ne.s32.totalorder %s230, %s231
      %p243 = scmp.eq.s32.totalorder %s27, 1
      %p244 = por %p242, %p243
      %p246 = scmp.ne.s32.totalorder %s231, %s245
      %p247 = scmp.eq.s32.totalorder %s27, 0
      %p248 = por %p246, %p247
      %s249 = ssub.s32 %s21, %s28
      %p250 = scmp.eq.s32.totalorder %s249, 0
      %s252 = sadd.s32 %s251, 1
      %s253 = scalar_select %p250, %s251, %s252
      %p256 = pneg %p250
      %p257 = scmp.eq.s32.totalorder %s21, 1
      %p258 = por %p256, %p257
      %p259 = scmp.ne.s32.totalorder %s251, %s254
      %p260 = scmp.eq.s32.totalorder %s21, 0
      %p261 = por %p259, %p260
      %p262 = scmp.ne.s32.totalorder %s251, %s254
      %p263 = scmp.eq.s32.totalorder %s26, 1
      %p264 = por %p262, %p263
      %p265 = scmp.ne.s32.totalorder %s254, %s255
      %p266 = scmp.eq.s32.totalorder %s26, 0
      %p267 = por %p265, %p266
      %p268 = scmp.ne.s32.totalorder %s254, %s255
      %p269 = scmp.eq.s32.totalorder %s27, 1
      %p270 = por %p268, %p269
      %p272 = scmp.ne.s32.totalorder %s255, %s271
      %p273 = scmp.eq.s32.totalorder %s27, 0
      %p274 = por %p272, %p273
      %p275 = scmp.le.s32.totalorder 1, %s21
      %p276 = scmp.lt.s32.totalorder %s21, 3
      %p277 = pnand %p275, %p276
      %p278 = pneg %p277
      // Predicated region
      $region9: #{tpu_custom_call.1} parent=5 // pred_check
        _
      $region10: #{tpu_custom_call.1} parent=5 // pred_check_branch
        %280 = sbr.rel (%p277) target = $region12
      $region11: #{tpu_custom_call.1} parent=5 // pred_region
        %s281 = ssub.s32 %s21, 1
        // Predicated region
        $region13: #{tpu_custom_call.1} parent=11 // pred_check
          %p282 = pneg %p94
        $region14: #{tpu_custom_call.1} parent=11 // pred_check_branch
          %284 = sbr.rel (%p282) target = $region16
        $region15: #{tpu_custom_call.1} parent=11 // pred_region
          _
        $region16: #{tpu_custom_call.1} parent=11 // pred_fallthru
          _
        // Predicated region
        $region17: #{tpu_custom_call.1} parent=11 // pred_check
          %p285 = pneg %p115
        $region18: #{tpu_custom_call.1} parent=11 // pred_check_branch
          %287 = sbr.rel (%p285) target = $region20
        $region19: #{tpu_custom_call.1} parent=11 // pred_region
          _
        $region20: #{tpu_custom_call.1} parent=11 // pred_fallthru
          _
        // Predicated region
        $region21: #{tpu_custom_call.1} parent=11 // pred_check
          %p288 = pneg %p136
        $region22: #{tpu_custom_call.1} parent=11 // pred_check_branch
          %290 = sbr.rel (%p288) target = $region24
        $region23: #{tpu_custom_call.1} parent=11 // pred_region
          _
        $region24: #{tpu_custom_call.1} parent=11 // pred_fallthru
          _
        // Predicated region
        $region25: #{tpu_custom_call.1} parent=11 // pred_check
          %p291 = pneg %p157
        $region26: #{tpu_custom_call.1} parent=11 // pred_check_branch
          %293 = sbr.rel (%p291) target = $region28
        $region27: #{tpu_custom_call.1} parent=11 // pred_region
          %s295 = ssub.s32 16, 16
          %296 = vsyncadd [#allocation7], %s295
          %s298 = sshll.u32 %s5, 4
          %s299 = int_to_ptr.vmem [resolvable:$true] %s298
          %301 = dma.vmem_to_smem %s299, 16, [#allocation5], [#allocation7]
        $region28: #{tpu_custom_call.1} parent=11 // pred_fallthru
          _
        // Predicated region
        $region29: #{tpu_custom_call.1} parent=11 // pred_check
          %p302 = pneg %p178
        $region30: #{tpu_custom_call.1} parent=11 // pred_check_branch
          %304 = sbr.rel (%p302) target = $region32
        $region31: #{tpu_custom_call.1} parent=11 // pred_region
          _
        $region32: #{tpu_custom_call.1} parent=11 // pred_fallthru
          _
        // Predicated region
        $region33: #{tpu_custom_call.1} parent=11 // pred_check
          %p305 = pneg %p199
        $region34: #{tpu_custom_call.1} parent=11 // pred_check_branch
          %307 = sbr.rel (%p305) target = $region36
        $region35: #{tpu_custom_call.1} parent=11 // pred_region
          _
        $region36: #{tpu_custom_call.1} parent=11 // pred_fallthru
          _
        // Predicated region
        $region37: #{tpu_custom_call.1} parent=11 // pred_check
          %p308 = pneg %p220
        $region38: #{tpu_custom_call.1} parent=11 // pred_check_branch
          %310 = sbr.rel (%p308) target = $region40
        $region39: #{tpu_custom_call.1} parent=11 // pred_region
          _
        $region40: #{tpu_custom_call.1} parent=11 // pred_fallthru
          _
        // Predicated region
        $region41: #{tpu_custom_call.1} parent=11 // pred_check
          %p311 = pneg %p241
        $region42: #{tpu_custom_call.1} parent=11 // pred_check_branch
          %313 = sbr.rel (%p311) target = $region44
        $region43: #{tpu_custom_call.1} parent=11 // pred_region
          _
        $region44: #{tpu_custom_call.1} parent=11 // pred_fallthru
          _
      $region12: #{tpu_custom_call.1} parent=5 // pred_fallthru
        _
      %p314 = scmp.lt.s32.totalorder %s21, 2
      // Predicated region
      $region45: #{tpu_custom_call.1} parent=5 // pred_check
        %p315 = pneg %p314
      $region46: #{tpu_custom_call.1} parent=5 // pred_check_branch
        %317 = sbr.rel (%p315) target = $region48
      $region47: #{tpu_custom_call.1} parent=5 // pred_region
        // Predicated region
        $region49: #{tpu_custom_call.1} parent=47 // pred_check
          %p318 = pneg %p41
        $region50: #{tpu_custom_call.1} parent=47 // pred_check_branch
          %320 = sbr.rel (%p318) target = $region52
        $region51: #{tpu_custom_call.1} parent=47 // pred_region
          %p321 = scmp.lt.s32.totalorder %s21, 1
          %s322 = scalar_select %p321, %s21, 1
          %s323 = smul.addr %s322, 4
          %s324 = smul.addr %s323, 4
          %s325 = scalar_lea.vmem %s0, %s324
        $region52: #{tpu_custom_call.1} parent=47 // pred_fallthru
          _
        // Predicated region
        $region53: #{tpu_custom_call.1} parent=47 // pred_check
          %p326 = pneg %p67
        $region54: #{tpu_custom_call.1} parent=47 // pred_check_branch
          %328 = sbr.rel (%p326) target = $region56
        $region55: #{tpu_custom_call.1} parent=47 // pred_region
          %p329 = scmp.lt.s32.totalorder %s21, 1
          %s330 = scalar_select %p329, %s21, 1
          %s331 = smul.addr %s330, 2
          %s332 = smul.addr %s331, 2
          %s333 = scalar_lea.vmem %s1, %s332
        $region56: #{tpu_custom_call.1} parent=47 // pred_fallthru
          _
      $region48: #{tpu_custom_call.1} parent=5 // pred_fallthru
        _
      %p334 = scmp.le.s32.totalorder 1, %s21
      %p335 = scmp.lt.s32.totalorder %s21, 3
      %p336 = pnand %p334, %p335
      %p337 = pneg %p336
      // Predicated region
      $region57: #{tpu_custom_call.1} parent=5 // pred_check
        _
      $region58: #{tpu_custom_call.1} parent=5 // pred_check_branch
        %339 = sbr.rel (%p336) target = $region60
      $region59: #{tpu_custom_call.1} parent=5 // pred_region
        %s340 = ssub.s32 %s21, 1
        // Predicated region
        $region61: #{tpu_custom_call.1} parent=59 // pred_check
          %p341 = pneg %p157
        $region62: #{tpu_custom_call.1} parent=59 // pred_check_branch
          %343 = sbr.rel (%p341) target = $region64
        $region63: #{tpu_custom_call.1} parent=59 // pred_region
          %344 = dma.done [#allocation7], 16
        $region64: #{tpu_custom_call.1} parent=59 // pred_fallthru
          _
        %345 = sfence
        %p346 = scmp.lt.s32.totalorder %s26, 1
        %s347 = scalar_select %p346, %s26, 1
        %s348 = smul.addr %s347, 4
        %s349 = smul.addr %s348, 4
        %s350 = scalar_lea.vmem %s0, %s349
        %p351 = pneg %p47
        %p352 = pneg %p44
        %p353 = scmp.lt.s32.totalorder %s26, 1
        %s354 = scalar_select %p353, %s26, 1
        %s355 = smul.addr %s354, 2
        %s356 = smul.addr %s355, 2
        %s357 = scalar_lea.vmem %s1, %s356
        %p358 = pneg %p73
        %p359 = pneg %p70
        %p360 = pneg %p94
        %p361 = pneg %p91
        %p362 = pneg %p115
        %p363 = pneg %p112
        %p364 = pneg %p136
        %p365 = pneg %p133
        %p366 = pneg %p157
        %p367 = pneg %p154
        %p368 = pneg %p178
        %p369 = pneg %p175
        %p370 = pneg %p199
        %p371 = pneg %p196
        %p372 = pneg %p220
        %p373 = pneg %p217
        %p374 = pneg %p241
        %p375 = pneg %p238
        %p376 = pneg %p267
        %p377 = pneg %p264
        %s378 = sand.u32 %s254, 1
        %s379 = scalar_lea.sflag [#allocation6], %s378
        %s380 = sand.u32 %s254, 1
        %s381 = smul.addr %s380, 16
        %s382 = scalar_lea.vmem [#allocation8], %s381
        %p383 = scmp.lt.s32.totalorder %s26, 1
        %s384 = scalar_select %p383, %s26, 1
        %s385 = smul.addr %s384, 4
        %s386 = smul.addr %s385, 4
        %s387 = scalar_lea.vmem %s0, %s386
        %p388 = scmp.lt.s32.totalorder %s26, 1
        %s389 = scalar_select %p388, %s26, 1
        %s390 = smul.addr %s389, 2
        %s391 = smul.addr %s390, 2
        %s392 = scalar_lea.vmem %s1, %s391
        %v394 = vlaneseq
        %v395 = vand.u32 %v394, 127
        %v396 = vadd.s32 %v395, 128
        %vm397 = vcmp.lt.s32.totalorder %v395, 0
        %v398 = vsub.s32 0, %v395
        %v399 = vsel %vm397, %v398, %v395
        %v400 = vshrl.u32 %v399, 4
        %v401 = vand.u32 %v399, 15
        %v402 = vsub.s32 0, %v401
        %v403 = vsel %vm397, %v402, %v401
        %vm404 = vcmp.lt.s32.totalorder %v396, 0
        %v405 = vsub.s32 0, %v396
        %v406 = vsel %vm404, %v405, %v396
        %v407 = vshrl.u32 %v406, 4
        %v408 = vand.u32 %v406, 15
        %v409 = vsub.s32 0, %v408
        %v410 = vsel %vm404, %v409, %v408
        %vm411 = vcmp.ne.s32.totalorder %v403, 0
        %vm412 = vcmp.ne.s32.totalorder %v410, 0
        %vm413 = vcmp.lt.s32.totalorder %v403, 0
        %vm414 = vcmp.lt.s32.totalorder %v410, 0
        %vm415 = vmand %vm413, %vm411
        %vm416 = vmand %vm414, %vm412
        %v417 = vadd.s32 %v403, 16
        %v418 = vadd.s32 %v410, 16
        %v419 = vsel %vm415, %v417, %v403
        %v420 = vsel %vm416, %v418, %v410
        %vm421 = vcmp.eq.s32.totalorder %v419, 0
        %vm422 = vcmp.eq.s32.totalorder %v420, 0
        %v423 = vsel %vm421, 0.0, 1.0
        %v424 = vsel %vm422, 0.0, 1.0
        %vm425 = vcmp.eq.s32.totalorder %v419, 15
        %vm426 = vcmp.eq.s32.totalorder %v420, 15
        %v427 = vsel %vm425, 0.0, 1.0
        %v428 = vsel %vm426, 0.0, 1.0
        %429 = vst [vmem:[#allocation2] sm:$0xf] 0
        %430 = vst [vmem:[#allocation2 + $0x10] sm:$0xf] 0
        %431 = vst [vmem:[#allocation2 + $0xc] sm:$0xf] 0
        %432 = vst [vmem:[#allocation2 + $0x1c] sm:$0xf] 0
        %433 = vst [vmem:[#allocation3] sm:$0xff] 0.0
        %434 = vst [vmem:[#allocation3 + $0x18] sm:$0xff] 0.0
        %v435 = vld [vmem:[%s387] sm:$0xff]
        %v436 = vld [vmem:[%s387 + $0x8] sm:$0xff]
        %v437 = vunpack.c.l.bf16 %v435
        %v438 = vunpack.c.h.bf16 %v435
        %v439 = vunpack.c.l.bf16 %v436
        %v440 = vunpack.c.h.bf16 %v436
        %v441 = vld [vmem:[%s392] sm:$0xf]
        %v444 = vunpack.c.l.s4 1983009808
        %v445 = vunpack.c.0.s8 %v444
        %v446 = vlaneseq
        %v447 = vshrl.u32 %v446, 7
        %v448 = vsub.s32 %v445, %v447
        %v449 = vrot.slane %v441, %v448
        %451 = vst [vmem:[#allocation2 + $0x4] sm:$0x33] %v449
        %v452 = vld [vmem:[%s3] sm:$0xff]
        %v453 = vld [vmem:[%s3 + $0x8] sm:$0xff]
        %455 = vset.pattern.permute.xlu0 0
        %456 = vperm.xlu0 %455, %v452
        %v457 = vpop.permute.xlu0 %456
        %460 = vset.pattern.permute.xlu0 0
        %461 = vperm.xlu0 %460, %v453
        %v462 = vpop.permute.xlu0 %461
        %v464 = vadd.f32 %v457, 0.0
        %v465 = vadd.f32 %v462, 0.0
        %v466 = vld [vmem:[#allocation2] sm:$0x33]
        %v467 = vld [vmem:[#allocation2 + $0x8] sm:$0x3]
        %v468 = vpack.c.bf16 %v423, %v423
        %v469 = vpack.c.bf16 %v424, %v424
        %v472 = vunpack.c.l.b16 %v468
        %v473 = vunpack.c.l.b16 %v469
        %v474 = vpack.c.b16 %v473, %v472
        %475 = vrot.lane.b32.xlu0 %v474, 111
        %v476 = vpop.permute.xlu0 %475
        %v477 = vrot.slane %v476, 4
        %vm478 = vcmask 908288
        %v479 = vsel %vm478, %v477, %v476
        %v482 = vmul.bf16 %v466, %v479
        %v483 = vmul.bf16 %v467, %v477
        %v484 = vld [vmem:[%s2] sm:$0xf]
        %v485 = vld [vmem:[%s2 + $0x4] sm:$0xf]
        %v488 = vunpack.c.l.b16 %v484
        %v489 = vunpack.c.l.b16 %v485
        %v490 = vpack.c.b16 %v489, %v488
        %v493 = vunpack.c.l.b16 %v482
        %v494 = vunpack.c.h.b16 %v482
        %v495 = vunpack.c.l.b16 %v483
        %v496 = vpack.c.b16 %v493, %v493
        %v497 = vpack.c.b16 %v494, %v494
        %v498 = vpack.c.b16 %v495, %v495
        %499 = vrot.lane.b32.xlu0 %v496, 17
        %v500 = vpop.permute.xlu0 %499
        %501 = vrot.lane.b32.xlu0 %v497, 17
        %v502 = vpop.permute.xlu0 %501
        %503 = vrot.lane.b32.xlu0 %v498, 17
        %v504 = vpop.permute.xlu0 %503
        %vm505 = vcmask 138240
        %v506 = vsel %vm505, %v500, %v502
        %v507 = vsel %vm505, %v502, %v504
        %vm508 = vcmask 31744
        %v510 = vsel %vm508, %v490, 0
        %vm512 = vcmask 1041408
        %v514 = vsel %vm512, %v506, 0
        %v517 = vsel %vm512, %v507, 0
        %519 = vmatprep.subr.bf16.mxu0 0
        %520 = vmatpush1.bf16.msra.mxu0 0
        %521 = vmatprep.subr.bf16.mxu0 0
        %522 = vmatpush1.bf16.msra.mxu0 0
        %523 = vmatprep.subr.bf16.mxu0 0
        %524 = vmatpush1.bf16.msra.mxu0 0
        %525 = vmatprep.subr.bf16.mxu0 0
        %526 = vmatpush1.bf16.msra.mxu0 0
        %527 = vmatprep.subr.bf16.mxu0 0
        %528 = vmatpush1.bf16.msra.mxu0 0
        %529 = vmatprep.subr.bf16.mxu0 0
        %530 = vmatpush1.bf16.msra.mxu0 0
        %531 = vmatprep.subr.bf16.mxu0 0
        %532 = vmatpush1.bf16.msra.mxu0 0
        %533 = vmatprep.subr.bf16.mxu0 %v517
        %534 = vmatpush1.bf16.msra.mxu0 %v514
        %535 = vmatprep.subr.bf16.mxu0 0
        %536 = vmatpush2.bf16.msra.mxu0 0
        %537 = vmatprep.subr.bf16.mxu0 0
        %538 = vmatpush2.bf16.msra.mxu0 0
        %539 = vmatprep.subr.bf16.mxu0 0
        %540 = vmatpush2.bf16.msra.mxu0 0
        %541 = vmatprep.subr.bf16.mxu0 0
        %542 = vmatpush2.bf16.msra.mxu0 0
        %543 = vmatprep.subr.bf16.mxu0 0
        %544 = vmatpush2.bf16.msra.mxu0 0
        %545 = vmatprep.subr.bf16.mxu0 0
        %546 = vmatpush2.bf16.msra.mxu0 0
        %547 = vmatprep.subr.bf16.mxu0 0
        %548 = vmatpush2.bf16.msra.mxu0 0
        %549 = vmatprep.subr.bf16.mxu0 0
        %550 = vmatpush2.bf16.msra.mxu0 0
        %551 = vmatprep.mubr.bf16.mxu0 0
        %552 = vmatmul.mubr.bf16.gmra.mxu0 %v510
        %v553 = vpop.f32.mrf.mxu0
        %v554 = vadd.f32 0.0, %v553
        %v555 = vpop.f32.mrf.mxu0
        %v556 = vadd.f32 0.0, %v555
        %v557 = vpop.f32.mrf.mxu0
        %v558 = vadd.f32 0.0, %v557
        %v559 = vpop.f32.mrf.mxu0
        %v560 = vadd.f32 0.0, %v559
        %561 = vdwg.mxu0
        %v562 = vadd.f32 %v464, %v554
        %v563 = vadd.f32 %v464, %v556
        %v564 = vadd.f32 %v465, %v558
        %v565 = vadd.f32 %v465, %v560
        %s566 = scalar_lea.vmem %s2, 8
        %v567 = vld [vmem:[%s566] sm:$0xf]
        %v568 = vld [vmem:[%s566 + $0x4] sm:$0xf]
        %v571 = vunpack.c.l.b16 %v567
        %v572 = vunpack.c.l.b16 %v568
        %v573 = vpack.c.b16 %v572, %v571
        %v576 = vunpack.c.l.b16 %v466
        %v577 = vunpack.c.h.b16 %v466
        %v578 = vunpack.c.l.b16 %v467
        %v579 = vpack.c.b16 %v576, %v576
        %v580 = vpack.c.b16 %v577, %v577
        %v581 = vpack.c.b16 %v578, %v578
        %582 = vrot.lane.b32.xlu0 %v579, 16
        %v583 = vpop.permute.xlu0 %582
        %584 = vrot.lane.b32.xlu0 %v580, 16
        %v585 = vpop.permute.xlu0 %584
        %586 = vrot.lane.b32.xlu0 %v581, 16
        %v587 = vpop.permute.xlu0 %586
        %vm588 = vcmask 130048
        %v589 = vsel %vm588, %v583, %v585
        %v590 = vsel %vm588, %v585, %v587
        %v592 = vsel %vm508, %v573, 0
        %v595 = vsel %vm512, %v589, 0
        %v598 = vsel %vm512, %v590, 0
        %600 = vmatprep.subr.bf16.mxu0 0
        %601 = vmatpush1.bf16.msra.mxu0 0
        %602 = vmatprep.subr.bf16.mxu0 0
        %603 = vmatpush1.bf16.msra.mxu0 0
        %604 = vmatprep.subr.bf16.mxu0 0
        %605 = vmatpush1.bf16.msra.mxu0 0
        %606 = vmatprep.subr.bf16.mxu0 0
        %607 = vmatpush1.bf16.msra.mxu0 0
        %608 = vmatprep.subr.bf16.mxu0 0
        %609 = vmatpush1.bf16.msra.mxu0 0
        %610 = vmatprep.subr.bf16.mxu0 0
        %611 = vmatpush1.bf16.msra.mxu0 0
        %612 = vmatprep.subr.bf16.mxu0 0
        %613 = vmatpush1.bf16.msra.mxu0 0
        %614 = vmatprep.subr.bf16.mxu0 %v598
        %615 = vmatpush1.bf16.msra.mxu0 %v595
        %616 = vmatprep.subr.bf16.mxu0 0
        %617 = vmatpush2.bf16.msra.mxu0 0
        %618 = vmatprep.subr.bf16.mxu0 0
        %619 = vmatpush2.bf16.msra.mxu0 0
        %620 = vmatprep.subr.bf16.mxu0 0
        %621 = vmatpush2.bf16.msra.mxu0 0
        %622 = vmatprep.subr.bf16.mxu0 0
        %623 = vmatpush2.bf16.msra.mxu0 0
        %624 = vmatprep.subr.bf16.mxu0 0
        %625 = vmatpush2.bf16.msra.mxu0 0
        %626 = vmatprep.subr.bf16.mxu0 0
        %627 = vmatpush2.bf16.msra.mxu0 0
        %628 = vmatprep.subr.bf16.mxu0 0
        %629 = vmatpush2.bf16.msra.mxu0 0
        %630 = vmatprep.subr.bf16.mxu0 0
        %631 = vmatpush2.bf16.msra.mxu0 0
        %632 = vmatprep.mubr.bf16.mxu0 0
        %633 = vmatmul.mubr.bf16.gmra.mxu0 %v592
        %v634 = vpop.f32.mrf.mxu0
        %v635 = vadd.f32 0.0, %v634
        %v636 = vpop.f32.mrf.mxu0
        %v637 = vadd.f32 0.0, %v636
        %v638 = vpop.f32.mrf.mxu0
        %v639 = vadd.f32 0.0, %v638
        %v640 = vpop.f32.mrf.mxu0
        %v641 = vadd.f32 0.0, %v640
        %642 = vdwg.mxu0
        %v643 = vadd.f32 %v562, %v635
        %v644 = vadd.f32 %v563, %v637
        %v645 = vadd.f32 %v564, %v639
        %v646 = vadd.f32 %v565, %v641
        %v647 = vpack.c.bf16 %v427, %v427
        %v648 = vpack.c.bf16 %v428, %v428
        %v651 = vunpack.c.l.b16 %v647
        %v652 = vunpack.c.l.b16 %v648
        %v653 = vpack.c.b16 %v652, %v651
        %654 = vrot.lane.b32.xlu0 %v653, 113
        %v655 = vpop.permute.xlu0 %654
        %v656 = vrot.slane %v655, 4
        %vm657 = vcmask 924672
        %v658 = vsel %vm657, %v656, %v655
        %v661 = vmul.bf16 %v466, %v658
        %v662 = vmul.bf16 %v467, %v656
        %s663 = scalar_lea.vmem %s2, 16
        %v664 = vld [vmem:[%s663] sm:$0xf]
        %v665 = vld [vmem:[%s663 + $0x4] sm:$0xf]
        %v668 = vunpack.c.l.b16 %v664
        %v669 = vunpack.c.l.b16 %v665
        %v670 = vpack.c.b16 %v669, %v668
        %v673 = vunpack.c.l.b16 %v661
        %v674 = vunpack.c.h.b16 %v661
        %v675 = vunpack.c.l.b16 %v662
        %v676 = vpack.c.b16 %v673, %v673
        %v677 = vpack.c.b16 %v674, %v674
        %v678 = vpack.c.b16 %v675, %v675
        %679 = vrot.lane.b32.xlu0 %v676, 15
        %v680 = vpop.permute.xlu0 %679
        %681 = vrot.lane.b32.xlu0 %v677, 15
        %v682 = vpop.permute.xlu0 %681
        %683 = vrot.lane.b32.xlu0 %v678, 15
        %v684 = vpop.permute.xlu0 %683
        %vm685 = vcmask 121856
        %v686 = vsel %vm685, %v680, %v682
        %v687 = vsel %vm685, %v682, %v684
        %v689 = vsel %vm508, %v670, 0
        %v692 = vsel %vm512, %v686, 0
        %v695 = vsel %vm512, %v687, 0
        %697 = vmatprep.subr.bf16.mxu0 0
        %698 = vmatpush1.bf16.msra.mxu0 0
        %699 = vmatprep.subr.bf16.mxu0 0
        %700 = vmatpush1.bf16.msra.mxu0 0
        %701 = vmatprep.subr.bf16.mxu0 0
        %702 = vmatpush1.bf16.msra.mxu0 0
        %703 = vmatprep.subr.bf16.mxu0 0
        %704 = vmatpush1.bf16.msra.mxu0 0
        %705 = vmatprep.subr.bf16.mxu0 0
        %706 = vmatpush1.bf16.msra.mxu0 0
        %707 = vmatprep.subr.bf16.mxu0 0
        %708 = vmatpush1.bf16.msra.mxu0 0
        %709 = vmatprep.subr.bf16.mxu0 0
        %710 = vmatpush1.bf16.msra.mxu0 0
        %711 = vmatprep.subr.bf16.mxu0 %v695
        %712 = vmatpush1.bf16.msra.mxu0 %v692
        %713 = vmatprep.subr.bf16.mxu0 0
        %714 = vmatpush2.bf16.msra.mxu0 0
        %715 = vmatprep.subr.bf16.mxu0 0
        %716 = vmatpush2.bf16.msra.mxu0 0
        %717 = vmatprep.subr.bf16.mxu0 0
        %718 = vmatpush2.bf16.msra.mxu0 0
        %719 = vmatprep.subr.bf16.mxu0 0
        %720 = vmatpush2.bf16.msra.mxu0 0
        %721 = vmatprep.subr.bf16.mxu0 0
        %722 = vmatpush2.bf16.msra.mxu0 0
        %723 = vmatprep.subr.bf16.mxu0 0
        %724 = vmatpush2.bf16.msra.mxu0 0
        %725 = vmatprep.subr.bf16.mxu0 0
        %726 = vmatpush2.bf16.msra.mxu0 0
        %727 = vmatprep.subr.bf16.mxu0 0
        %728 = vmatpush2.bf16.msra.mxu0 0
        %729 = vmatprep.mubr.bf16.mxu0 0
        %730 = vmatmul.mubr.bf16.gmra.mxu0 %v689
        %v731 = vpop.f32.mrf.mxu0
        %v732 = vadd.f32 0.0, %v731
        %v733 = vpop.f32.mrf.mxu0
        %v734 = vadd.f32 0.0, %v733
        %v735 = vpop.f32.mrf.mxu0
        %v736 = vadd.f32 0.0, %v735
        %v737 = vpop.f32.mrf.mxu0
        %v738 = vadd.f32 0.0, %v737
        %739 = vdwg.mxu0
        %v740 = vadd.f32 %v643, %v732
        %v741 = vadd.f32 %v644, %v734
        %v742 = vadd.f32 %v645, %v736
        %v743 = vadd.f32 %v646, %v738
        %744 = vrot.lane.b32.xlu0 %v474, 127
        %v745 = vpop.permute.xlu0 %744
        %v746 = vrot.slane %v745, 4
        %vm747 = vcmask 1039360
        %v748 = vsel %vm747, %v746, %v745
        %v751 = vmul.bf16 %v466, %v748
        %v752 = vmul.bf16 %v467, %v746
        %s753 = scalar_lea.vmem %s2, 24
        %v754 = vld [vmem:[%s753] sm:$0xf]
        %v755 = vld [vmem:[%s753 + $0x4] sm:$0xf]
        %v758 = vunpack.c.l.b16 %v754
        %v759 = vunpack.c.l.b16 %v755
        %v760 = vpack.c.b16 %v759, %v758
        %v763 = vunpack.c.l.b16 %v751
        %v764 = vunpack.c.h.b16 %v751
        %v765 = vunpack.c.l.b16 %v752
        %v766 = vpack.c.b16 %v763, %v763
        %v767 = vpack.c.b16 %v764, %v764
        %v768 = vpack.c.b16 %v765, %v765
        %769 = vrot.lane.b32.xlu0 %v766, 1
        %v770 = vpop.permute.xlu0 %769
        %771 = vrot.lane.b32.xlu0 %v767, 1
        %v772 = vpop.permute.xlu0 %771
        %773 = vrot.lane.b32.xlu0 %v768, 1
        %v774 = vpop.permute.xlu0 %773
        %vm775 = vcmask 7168
        %v776 = vsel %vm775, %v770, %v772
        %v777 = vsel %vm775, %v772, %v774
        %v779 = vsel %vm508, %v760, 0
        %v782 = vsel %vm512, %v776, 0
        %v785 = vsel %vm512, %v777, 0
        %787 = vmatprep.subr.bf16.mxu0 0
        %788 = vmatpush1.bf16.msra.mxu0 0
        %789 = vmatprep.subr.bf16.mxu0 0
        %790 = vmatpush1.bf16.msra.mxu0 0
        %791 = vmatprep.subr.bf16.mxu0 0
        %792 = vmatpush1.bf16.msra.mxu0 0
        %793 = vmatprep.subr.bf16.mxu0 0
        %794 = vmatpush1.bf16.msra.mxu0 0
        %795 = vmatprep.subr.bf16.mxu0 0
        %796 = vmatpush1.bf16.msra.mxu0 0
        %797 = vmatprep.subr.bf16.mxu0 0
        %798 = vmatpush1.bf16.msra.mxu0 0
        %799 = vmatprep.subr.bf16.mxu0 0
        %800 = vmatpush1.bf16.msra.mxu0 0
        %801 = vmatprep.subr.bf16.mxu0 %v785
        %802 = vmatpush1.bf16.msra.mxu0 %v782
        %803 = vmatprep.subr.bf16.mxu0 0
        %804 = vmatpush2.bf16.msra.mxu0 0
        %805 = vmatprep.subr.bf16.mxu0 0
        %806 = vmatpush2.bf16.msra.mxu0 0
        %807 = vmatprep.subr.bf16.mxu0 0
        %808 = vmatpush2.bf16.msra.mxu0 0
        %809 = vmatprep.subr.bf16.mxu0 0
        %810 = vmatpush2.bf16.msra.mxu0 0
        %811 = vmatprep.subr.bf16.mxu0 0
        %812 = vmatpush2.bf16.msra.mxu0 0
        %813 = vmatprep.subr.bf16.mxu0 0
        %814 = vmatpush2.bf16.msra.mxu0 0
        %815 = vmatprep.subr.bf16.mxu0 0
        %816 = vmatpush2.bf16.msra.mxu0 0
        %817 = vmatprep.subr.bf16.mxu0 0
        %818 = vmatpush2.bf16.msra.mxu0 0
        %819 = vmatprep.mubr.bf16.mxu0 0
        %820 = vmatmul.mubr.bf16.gmra.mxu0 %v779
        %v821 = vpop.f32.mrf.mxu0
        %v822 = vadd.f32 0.0, %v821
        %v823 = vpop.f32.mrf.mxu0
        %v824 = vadd.f32 0.0, %v823
        %v825 = vpop.f32.mrf.mxu0
        %v826 = vadd.f32 0.0, %v825
        %v827 = vpop.f32.mrf.mxu0
        %v828 = vadd.f32 0.0, %v827
        %829 = vdwg.mxu0
        %v830 = vadd.f32 %v740, %v822
        %v831 = vadd.f32 %v741, %v824
        %v832 = vadd.f32 %v742, %v826
        %v833 = vadd.f32 %v743, %v828
        %v834 = vld [vmem:[#allocation2 + $0x4] sm:$0x33]
        %s835 = scalar_lea.vmem %s2, 32
        %v836 = vld [vmem:[%s835] sm:$0xf]
        %v837 = vld [vmem:[%s835 + $0x4] sm:$0xf]
        %v840 = vunpack.c.l.b16 %v836
        %v841 = vunpack.c.l.b16 %v837
        %v842 = vpack.c.b16 %v841, %v840
        %v844 = vunpack.c.l.b16 %v834
        %v845 = vunpack.c.h.b16 %v834
        %v846 = vpack.c.b16 %v844, %v844
        %v847 = vpack.c.b16 %v845, %v845
        %v849 = vsel %vm508, %v842, 0
        %v852 = vsel %vm512, %v846, 0
        %v855 = vsel %vm512, %v847, 0
        %857 = vmatprep.subr.bf16.mxu0 0
        %858 = vmatpush1.bf16.msra.mxu0 0
        %859 = vmatprep.subr.bf16.mxu0 0
        %860 = vmatpush1.bf16.msra.mxu0 0
        %861 = vmatprep.subr.bf16.mxu0 0
        %862 = vmatpush1.bf16.msra.mxu0 0
        %863 = vmatprep.subr.bf16.mxu0 0
        %864 = vmatpush1.bf16.msra.mxu0 0
        %865 = vmatprep.subr.bf16.mxu0 0
        %866 = vmatpush1.bf16.msra.mxu0 0
        %867 = vmatprep.subr.bf16.mxu0 0
        %868 = vmatpush1.bf16.msra.mxu0 0
        %869 = vmatprep.subr.bf16.mxu0 0
        %870 = vmatpush1.bf16.msra.mxu0 0
        %871 = vmatprep.subr.bf16.mxu0 %v855
        %872 = vmatpush1.bf16.msra.mxu0 %v852
        %873 = vmatprep.subr.bf16.mxu0 0
        %874 = vmatpush2.bf16.msra.mxu0 0
        %875 = vmatprep.subr.bf16.mxu0 0
        %876 = vmatpush2.bf16.msra.mxu0 0
        %877 = vmatprep.subr.bf16.mxu0 0
        %878 = vmatpush2.bf16.msra.mxu0 0
        %879 = vmatprep.subr.bf16.mxu0 0
        %880 = vmatpush2.bf16.msra.mxu0 0
        %881 = vmatprep.subr.bf16.mxu0 0
        %882 = vmatpush2.bf16.msra.mxu0 0
        %883 = vmatprep.subr.bf16.mxu0 0
        %884 = vmatpush2.bf16.msra.mxu0 0
        %885 = vmatprep.subr.bf16.mxu0 0
        %886 = vmatpush2.bf16.msra.mxu0 0
        %887 = vmatprep.subr.bf16.mxu0 0
        %888 = vmatpush2.bf16.msra.mxu0 0
        %889 = vmatprep.mubr.bf16.mxu0 0
        %890 = vmatmul.mubr.bf16.gmra.mxu0 %v849
        %v891 = vpop.f32.mrf.mxu0
        %v892 = vadd.f32 0.0, %v891
        %v893 = vpop.f32.mrf.mxu0
        %v894 = vadd.f32 0.0, %v893
        %v895 = vpop.f32.mrf.mxu0
        %v896 = vadd.f32 0.0, %v895
        %v897 = vpop.f32.mrf.mxu0
        %v898 = vadd.f32 0.0, %v897
        %899 = vdwg.mxu0
        %v900 = vadd.f32 %v830, %v892
        %v901 = vadd.f32 %v831, %v894
        %v902 = vadd.f32 %v832, %v896
        %v903 = vadd.f32 %v833, %v898
        %v904 = vld [vmem:[#allocation2 + $0x4] sm:$0x33]
        %v905 = vld [vmem:[#allocation2 + $0xc] sm:$0x3]
        %906 = vrot.lane.b32.xlu0 %v653, 1
        %v907 = vpop.permute.xlu0 %906
        %v908 = vrot.slane %v907, 4
        %v909 = vsel %vm775, %v908, %v907
        %v912 = vmul.bf16 %v904, %v909
        %v913 = vmul.bf16 %v905, %v908
        %s914 = scalar_lea.vmem %s2, 40
        %v915 = vld [vmem:[%s914] sm:$0xf]
        %v916 = vld [vmem:[%s914 + $0x4] sm:$0xf]
        %v919 = vunpack.c.l.b16 %v915
        %v920 = vunpack.c.l.b16 %v916
        %v921 = vpack.c.b16 %v920, %v919
        %v924 = vunpack.c.l.b16 %v912
        %v925 = vunpack.c.h.b16 %v912
        %v926 = vunpack.c.l.b16 %v913
        %v927 = vpack.c.b16 %v924, %v924
        %v928 = vpack.c.b16 %v925, %v925
        %v929 = vpack.c.b16 %v926, %v926
        %930 = vrot.lane.b32.xlu0 %v927, 127
        %v931 = vpop.permute.xlu0 %930
        %932 = vrot.lane.b32.xlu0 %v928, 127
        %v933 = vpop.permute.xlu0 %932
        %934 = vrot.lane.b32.xlu0 %v929, 127
        %v935 = vpop.permute.xlu0 %934
        %v936 = vsel %vm747, %v931, %v933
        %v937 = vsel %vm747, %v933, %v935
        %v939 = vsel %vm508, %v921, 0
        %v942 = vsel %vm512, %v936, 0
        %v945 = vsel %vm512, %v937, 0
        %947 = vmatprep.subr.bf16.mxu0 0
        %948 = vmatpush1.bf16.msra.mxu0 0
        %949 = vmatprep.subr.bf16.mxu0 0
        %950 = vmatpush1.bf16.msra.mxu0 0
        %951 = vmatprep.subr.bf16.mxu0 0
        %952 = vmatpush1.bf16.msra.mxu0 0
        %953 = vmatprep.subr.bf16.mxu0 0
        %954 = vmatpush1.bf16.msra.mxu0 0
        %955 = vmatprep.subr.bf16.mxu0 0
        %956 = vmatpush1.bf16.msra.mxu0 0
        %957 = vmatprep.subr.bf16.mxu0 0
        %958 = vmatpush1.bf16.msra.mxu0 0
        %959 = vmatprep.subr.bf16.mxu0 0
        %960 = vmatpush1.bf16.msra.mxu0 0
        %961 = vmatprep.subr.bf16.mxu0 %v945
        %962 = vmatpush1.bf16.msra.mxu0 %v942
        %963 = vmatprep.subr.bf16.mxu0 0
        %964 = vmatpush2.bf16.msra.mxu0 0
        %965 = vmatprep.subr.bf16.mxu0 0
        %966 = vmatpush2.bf16.msra.mxu0 0
        %967 = vmatprep.subr.bf16.mxu0 0
        %968 = vmatpush2.bf16.msra.mxu0 0
        %969 = vmatprep.subr.bf16.mxu0 0
        %970 = vmatpush2.bf16.msra.mxu0 0
        %971 = vmatprep.subr.bf16.mxu0 0
        %972 = vmatpush2.bf16.msra.mxu0 0
        %973 = vmatprep.subr.bf16.mxu0 0
        %974 = vmatpush2.bf16.msra.mxu0 0
        %975 = vmatprep.subr.bf16.mxu0 0
        %976 = vmatpush2.bf16.msra.mxu0 0
        %977 = vmatprep.subr.bf16.mxu0 0
        %978 = vmatpush2.bf16.msra.mxu0 0
        %979 = vmatprep.mubr.bf16.mxu0 0
        %980 = vmatmul.mubr.bf16.gmra.mxu0 %v939
        %v981 = vpop.f32.mrf.mxu0
        %v982 = vadd.f32 0.0, %v981
        %v983 = vpop.f32.mrf.mxu0
        %v984 = vadd.f32 0.0, %v983
        %v985 = vpop.f32.mrf.mxu0
        %v986 = vadd.f32 0.0, %v985
        %v987 = vpop.f32.mrf.mxu0
        %v988 = vadd.f32 0.0, %v987
        %989 = vdwg.mxu0
        %v990 = vadd.f32 %v900, %v982
        %v991 = vadd.f32 %v901, %v984
        %v992 = vadd.f32 %v902, %v986
        %v993 = vadd.f32 %v903, %v988
        %994 = vrot.lane.b32.xlu0 %v474, 15
        %v995 = vpop.permute.xlu0 %994
        %v996 = vrot.slane %v995, 4
        %v997 = vsel %vm685, %v996, %v995
        %v1000 = vmul.bf16 %v904, %v997
        %v1001 = vmul.bf16 %v905, %v996
        %s1002 = scalar_lea.vmem %s2, 48
        %v1003 = vld [vmem:[%s1002] sm:$0xf]
        %v1004 = vld [vmem:[%s1002 + $0x4] sm:$0xf]
        %v1007 = vunpack.c.l.b16 %v1003
        %v1008 = vunpack.c.l.b16 %v1004
        %v1009 = vpack.c.b16 %v1008, %v1007
        %v1012 = vunpack.c.l.b16 %v1000
        %v1013 = vunpack.c.h.b16 %v1000
        %v1014 = vunpack.c.l.b16 %v1001
        %v1015 = vpack.c.b16 %v1012, %v1012
        %v1016 = vpack.c.b16 %v1013, %v1013
        %v1017 = vpack.c.b16 %v1014, %v1014
        %1018 = vrot.lane.b32.xlu0 %v1015, 113
        %v1019 = vpop.permute.xlu0 %1018
        %1020 = vrot.lane.b32.xlu0 %v1016, 113
        %v1021 = vpop.permute.xlu0 %1020
        %1022 = vrot.lane.b32.xlu0 %v1017, 113
        %v1023 = vpop.permute.xlu0 %1022
        %v1024 = vsel %vm657, %v1019, %v1021
        %v1025 = vsel %vm657, %v1021, %v1023
        %v1027 = vsel %vm508, %v1009, 0
        %v1030 = vsel %vm512, %v1024, 0
        %v1033 = vsel %vm512, %v1025, 0
        %1035 = vmatprep.subr.bf16.mxu0 0
        %1036 = vmatpush1.bf16.msra.mxu0 0
        %1037 = vmatprep.subr.bf16.mxu0 0
        %1038 = vmatpush1.bf16.msra.mxu0 0
        %1039 = vmatprep.subr.bf16.mxu0 0
        %1040 = vmatpush1.bf16.msra.mxu0 0
        %1041 = vmatprep.subr.bf16.mxu0 0
        %1042 = vmatpush1.bf16.msra.mxu0 0
        %1043 = vmatprep.subr.bf16.mxu0 0
        %1044 = vmatpush1.bf16.msra.mxu0 0
        %1045 = vmatprep.subr.bf16.mxu0 0
        %1046 = vmatpush1.bf16.msra.mxu0 0
        %1047 = vmatprep.subr.bf16.mxu0 0
        %1048 = vmatpush1.bf16.msra.mxu0 0
        %1049 = vmatprep.subr.bf16.mxu0 %v1033
        %1050 = vmatpush1.bf16.msra.mxu0 %v1030
        %1051 = vmatprep.subr.bf16.mxu0 0
        %1052 = vmatpush2.bf16.msra.mxu0 0
        %1053 = vmatprep.subr.bf16.mxu0 0
        %1054 = vmatpush2.bf16.msra.mxu0 0
        %1055 = vmatprep.subr.bf16.mxu0 0
        %1056 = vmatpush2.bf16.msra.mxu0 0
        %1057 = vmatprep.subr.bf16.mxu0 0
        %1058 = vmatpush2.bf16.msra.mxu0 0
        %1059 = vmatprep.subr.bf16.mxu0 0
        %1060 = vmatpush2.bf16.msra.mxu0 0
        %1061 = vmatprep.subr.bf16.mxu0 0
        %1062 = vmatpush2.bf16.msra.mxu0 0
        %1063 = vmatprep.subr.bf16.mxu0 0
        %1064 = vmatpush2.bf16.msra.mxu0 0
        %1065 = vmatprep.subr.bf16.mxu0 0
        %1066 = vmatpush2.bf16.msra.mxu0 0
        %1067 = vmatprep.mubr.bf16.mxu0 0
        %1068 = vmatmul.mubr.bf16.gmra.mxu0 %v1027
        %v1069 = vpop.f32.mrf.mxu0
        %v1070 = vadd.f32 0.0, %v1069
        %v1071 = vpop.f32.mrf.mxu0
        %v1072 = vadd.f32 0.0, %v1071
        %v1073 = vpop.f32.mrf.mxu0
        %v1074 = vadd.f32 0.0, %v1073
        %v1075 = vpop.f32.mrf.mxu0
        %v1076 = vadd.f32 0.0, %v1075
        %1077 = vdwg.mxu0
        %v1078 = vadd.f32 %v990, %v1070
        %v1079 = vadd.f32 %v991, %v1072
        %v1080 = vadd.f32 %v992, %v1074
        %v1081 = vadd.f32 %v993, %v1076
        %s1082 = scalar_lea.vmem %s2, 56
        %v1083 = vld [vmem:[%s1082] sm:$0xf]
        %v1084 = vld [vmem:[%s1082 + $0x4] sm:$0xf]
        %v1087 = vunpack.c.l.b16 %v1083
        %v1088 = vunpack.c.l.b16 %v1084
        %v1089 = vpack.c.b16 %v1088, %v1087
        %v1092 = vunpack.c.l.b16 %v904
        %v1093 = vunpack.c.h.b16 %v904
        %v1094 = vunpack.c.l.b16 %v905
        %v1095 = vpack.c.b16 %v1092, %v1092
        %v1096 = vpack.c.b16 %v1093, %v1093
        %v1097 = vpack.c.b16 %v1094, %v1094
        %1098 = vrot.lane.b32.xlu0 %v1095, 112
        %v1099 = vpop.permute.xlu0 %1098
        %1100 = vrot.lane.b32.xlu0 %v1096, 112
        %v1101 = vpop.permute.xlu0 %1100
        %1102 = vrot.lane.b32.xlu0 %v1097, 112
        %v1103 = vpop.permute.xlu0 %1102
        %vm1104 = vcmask 916480
        %v1105 = vsel %vm1104, %v1099, %v1101
        %v1106 = vsel %vm1104, %v1101, %v1103
        %v1108 = vsel %vm508, %v1089, 0
        %v1111 = vsel %vm512, %v1105, 0
        %v1114 = vsel %vm512, %v1106, 0
        %1116 = vmatprep.subr.bf16.mxu0 0
        %1117 = vmatpush1.bf16.msra.mxu0 0
        %1118 = vmatprep.subr.bf16.mxu0 0
        %1119 = vmatpush1.bf16.msra.mxu0 0
        %1120 = vmatprep.subr.bf16.mxu0 0
        %1121 = vmatpush1.bf16.msra.mxu0 0
        %1122 = vmatprep.subr.bf16.mxu0 0
        %1123 = vmatpush1.bf16.msra.mxu0 0
        %1124 = vmatprep.subr.bf16.mxu0 0
        %1125 = vmatpush1.bf16.msra.mxu0 0
        %1126 = vmatprep.subr.bf16.mxu0 0
        %1127 = vmatpush1.bf16.msra.mxu0 0
        %1128 = vmatprep.subr.bf16.mxu0 0
        %1129 = vmatpush1.bf16.msra.mxu0 0
        %1130 = vmatprep.subr.bf16.mxu0 %v1114
        %1131 = vmatpush1.bf16.msra.mxu0 %v1111
        %1132 = vmatprep.subr.bf16.mxu0 0
        %1133 = vmatpush2.bf16.msra.mxu0 0
        %1134 = vmatprep.subr.bf16.mxu0 0
        %1135 = vmatpush2.bf16.msra.mxu0 0
        %1136 = vmatprep.subr.bf16.mxu0 0
        %1137 = vmatpush2.bf16.msra.mxu0 0
        %1138 = vmatprep.subr.bf16.mxu0 0
        %1139 = vmatpush2.bf16.msra.mxu0 0
        %1140 = vmatprep.subr.bf16.mxu0 0
        %1141 = vmatpush2.bf16.msra.mxu0 0
        %1142 = vmatprep.subr.bf16.mxu0 0
        %1143 = vmatpush2.bf16.msra.mxu0 0
        %1144 = vmatprep.subr.bf16.mxu0 0
        %1145 = vmatpush2.bf16.msra.mxu0 0
        %1146 = vmatprep.subr.bf16.mxu0 0
        %1147 = vmatpush2.bf16.msra.mxu0 0
        %1148 = vmatprep.mubr.bf16.mxu0 0
        %1149 = vmatmul.mubr.bf16.gmra.mxu0 %v1108
        %v1150 = vpop.f32.mrf.mxu0
        %v1151 = vadd.f32 0.0, %v1150
        %v1152 = vpop.f32.mrf.mxu0
        %v1153 = vadd.f32 0.0, %v1152
        %v1154 = vpop.f32.mrf.mxu0
        %v1155 = vadd.f32 0.0, %v1154
        %v1156 = vpop.f32.mrf.mxu0
        %v1157 = vadd.f32 0.0, %v1156
        %1158 = vdwg.mxu0
        %v1159 = vadd.f32 %v1078, %v1151
        %v1160 = vadd.f32 %v1079, %v1153
        %v1161 = vadd.f32 %v1080, %v1155
        %v1162 = vadd.f32 %v1081, %v1157
        %1163 = vrot.lane.b32.xlu0 %v653, 17
        %v1164 = vpop.permute.xlu0 %1163
        %v1165 = vrot.slane %v1164, 4
        %v1166 = vsel %vm505, %v1165, %v1164
        %v1169 = vmul.bf16 %v904, %v1166
        %v1170 = vmul.bf16 %v905, %v1165
        %s1171 = scalar_lea.vmem %s2, 64
        %v1172 = vld [vmem:[%s1171] sm:$0xf]
        %v1173 = vld [vmem:[%s1171 + $0x4] sm:$0xf]
        %v1176 = vunpack.c.l.b16 %v1172
        %v1177 = vunpack.c.l.b16 %v1173
        %v1178 = vpack.c.b16 %v1177, %v1176
        %v1181 = vunpack.c.l.b16 %v1169
        %v1182 = vunpack.c.h.b16 %v1169
        %v1183 = vunpack.c.l.b16 %v1170
        %v1184 = vpack.c.b16 %v1181, %v1181
        %v1185 = vpack.c.b16 %v1182, %v1182
        %v1186 = vpack.c.b16 %v1183, %v1183
        %1187 = vrot.lane.b32.xlu0 %v1184, 111
        %v1188 = vpop.permute.xlu0 %1187
        %1189 = vrot.lane.b32.xlu0 %v1185, 111
        %v1190 = vpop.permute.xlu0 %1189
        %1191 = vrot.lane.b32.xlu0 %v1186, 111
        %v1192 = vpop.permute.xlu0 %1191
        %v1193 = vsel %vm478, %v1188, %v1190
        %v1194 = vsel %vm478, %v1190, %v1192
        %v1196 = vsel %vm508, %v1178, 0
        %v1199 = vsel %vm512, %v1193, 0
        %v1202 = vsel %vm512, %v1194, 0
        %1204 = vmatprep.subr.bf16.mxu0 0
        %1205 = vmatpush1.bf16.msra.mxu0 0
        %1206 = vmatprep.subr.bf16.mxu0 0
        %1207 = vmatpush1.bf16.msra.mxu0 0
        %1208 = vmatprep.subr.bf16.mxu0 0
        %1209 = vmatpush1.bf16.msra.mxu0 0
        %1210 = vmatprep.subr.bf16.mxu0 0
        %1211 = vmatpush1.bf16.msra.mxu0 0
        %1212 = vmatprep.subr.bf16.mxu0 0
        %1213 = vmatpush1.bf16.msra.mxu0 0
        %1214 = vmatprep.subr.bf16.mxu0 0
        %1215 = vmatpush1.bf16.msra.mxu0 0
        %1216 = vmatprep.subr.bf16.mxu0 0
        %1217 = vmatpush1.bf16.msra.mxu0 0
        %1218 = vmatprep.subr.bf16.mxu0 %v1202
        %1219 = vmatpush1.bf16.msra.mxu0 %v1199
        %1220 = vmatprep.subr.bf16.mxu0 0
        %1221 = vmatpush2.bf16.msra.mxu0 0
        %1222 = vmatprep.subr.bf16.mxu0 0
        %1223 = vmatpush2.bf16.msra.mxu0 0
        %1224 = vmatprep.subr.bf16.mxu0 0
        %1225 = vmatpush2.bf16.msra.mxu0 0
        %1226 = vmatprep.subr.bf16.mxu0 0
        %1227 = vmatpush2.bf16.msra.mxu0 0
        %1228 = vmatprep.subr.bf16.mxu0 0
        %1229 = vmatpush2.bf16.msra.mxu0 0
        %1230 = vmatprep.subr.bf16.mxu0 0
        %1231 = vmatpush2.bf16.msra.mxu0 0
        %1232 = vmatprep.subr.bf16.mxu0 0
        %1233 = vmatpush2.bf16.msra.mxu0 0
        %1234 = vmatprep.subr.bf16.mxu0 0
        %1235 = vmatpush2.bf16.msra.mxu0 0
        %1236 = vmatprep.mubr.bf16.mxu0 0
        %1237 = vmatmul.mubr.bf16.gmra.mxu0 %v1196
        %v1238 = vpop.f32.mrf.mxu0
        %v1239 = vadd.f32 0.0, %v1238
        %v1240 = vpop.f32.mrf.mxu0
        %v1241 = vadd.f32 0.0, %v1240
        %v1242 = vpop.f32.mrf.mxu0
        %v1243 = vadd.f32 0.0, %v1242
        %v1244 = vpop.f32.mrf.mxu0
        %v1245 = vadd.f32 0.0, %v1244
        %1246 = vdwg.mxu0
        %v1247 = vadd.f32 %v1159, %v1239
        %v1248 = vadd.f32 %v1160, %v1241
        %v1249 = vadd.f32 %v1161, %v1243
        %v1250 = vadd.f32 %v1162, %v1245
        %v1251 = vmax.f32 %v1247, 0.0
        %v1252 = vmax.f32 %v1248, 0.0
        %v1253 = vmax.f32 %v1249, 0.0
        %v1254 = vmax.f32 %v1250, 0.0
        %v1255 = vmax.f32 %v437, %v439
        %v1256 = vrot.slane %v1255, 4
        %v1257 = vmax.f32 %v1255, %v1256
        %v1258 = vrot.slane %v1257, 2
        %v1259 = vmax.f32 %v1257, %v1258
        %v1260 = vrot.slane %v1259, 1
        %v1261 = vmax.f32 %v1259, %v1260
        %v1262 = vmax.f32 %v438, %v440
        %v1263 = vrot.slane %v1262, 4
        %v1264 = vmax.f32 %v1262, %v1263
        %v1265 = vrot.slane %v1264, 2
        %v1266 = vmax.f32 %v1264, %v1265
        %v1267 = vrot.slane %v1266, 1
        %v1268 = vmax.f32 %v1266, %v1267
        %v1269 = vadd.f32 %v437, %v439
        %v1270 = vrot.slane %v1269, 4
        %v1271 = vadd.f32 %v1269, %v1270
        %v1272 = vrot.slane %v1271, 2
        %v1273 = vadd.f32 %v1271, %v1272
        %v1274 = vrot.slane %v1273, 1
        %v1275 = vadd.f32 %v1273, %v1274
        %v1276 = vadd.f32 %v438, %v440
        %v1277 = vrot.slane %v1276, 4
        %v1278 = vadd.f32 %v1276, %v1277
        %v1279 = vrot.slane %v1278, 2
        %v1280 = vadd.f32 %v1278, %v1279
        %v1281 = vrot.slane %v1280, 1
        %v1282 = vadd.f32 %v1280, %v1281
        %v1283 = vrcp.pop 16.0
        %v1284 = vmul.f32 %v1275, %v1283
        %v1285 = vmul.f32 %v1282, %v1283
        %v1286 = vmax.f32 %v1251, %v1253
        %v1287 = vrot.slane %v1286, 4
        %v1288 = vmax.f32 %v1286, %v1287
        %v1289 = vrot.slane %v1288, 2
        %v1290 = vmax.f32 %v1288, %v1289
        %v1291 = vrot.slane %v1290, 1
        %v1292 = vmax.f32 %v1290, %v1291
        %v1293 = vmax.f32 %v1252, %v1254
        %v1294 = vrot.slane %v1293, 4
        %v1295 = vmax.f32 %v1293, %v1294
        %v1296 = vrot.slane %v1295, 2
        %v1297 = vmax.f32 %v1295, %v1296
        %v1298 = vrot.slane %v1297, 1
        %v1299 = vmax.f32 %v1297, %v1298
        %v1300 = vadd.f32 %v1251, %v1253
        %v1301 = vrot.slane %v1300, 4
        %v1302 = vadd.f32 %v1300, %v1301
        %v1303 = vrot.slane %v1302, 2
        %v1304 = vadd.f32 %v1302, %v1303
        %v1305 = vrot.slane %v1304, 1
        %v1306 = vadd.f32 %v1304, %v1305
        %v1307 = vadd.f32 %v1252, %v1254
        %v1308 = vrot.slane %v1307, 4
        %v1309 = vadd.f32 %v1307, %v1308
        %v1310 = vrot.slane %v1309, 2
        %v1311 = vadd.f32 %v1309, %v1310
        %v1312 = vrot.slane %v1311, 1
        %v1313 = vadd.f32 %v1311, %v1312
        %v1314 = vmul.f32 %v1306, %v1283
        %v1315 = vmul.f32 %v1313, %v1283
        %vm1316 = vcmask 1040384
        %v1317 = vsel %vm1316, %v1261, %v1284
        %v1318 = vsel %vm1316, %v1268, %v1285
        %v1319 = vsel %vm512, %v1317, %v1292
        %v1320 = vsel %vm512, %v1318, %v1299
        %vm1321 = vcmask 1042432
        %v1322 = vsel %vm1321, %v1319, %v1314
        %v1323 = vsel %vm1321, %v1320, %v1315
        %1324 = vst [vmem:[#allocation3 + $0x8] sm:$0xf] %v1322
        %1325 = vst [vmem:[#allocation3 + $0x10] sm:$0xf] %v1323
        %s1326 = sld [smem:[#allocation5]]
        %v1327 = vstv %s1326
        %v1328 = vadd.f32 %v1327, 0.0
        %s1329 = sld [smem:[#allocation5 + $0x1]]
        %v1330 = vstv %s1329
        %v1331 = vadd.f32 %v1330, 0.0
        %v1332 = vld [vmem:[#allocation3] sm:$0xf]
        %v1333 = vld [vmem:[#allocation3 + $0x8] sm:$0xf]
        %v1334 = vld [vmem:[#allocation3 + $0x10] sm:$0xf]
        %v1335 = vld [vmem:[%s4] sm:$0xf]
        %1337 = vset.pattern.permute.xlu0 0
        %1338 = vperm.xlu0 %1337, %v1335
        %v1339 = vpop.permute.xlu0 %1338
        %v1341 = vmul.f32 %v1332, %v1339
        %v1342 = vmul.f32 %v1333, %v1339
        %v1343 = vmul.f32 %v1334, %v1339
        %vm1344 = vcmask 1044344
        %v1345 = vsel %vm1344, %v1341, 0.0
        %v1346 = vrot.slane %v1345, 4
        %v1347 = vadd.f32 %v1345, %v1346
        %v1348 = vrot.slane %v1347, 2
        %v1349 = vadd.f32 %v1347, %v1348
        %v1350 = vrot.slane %v1349, 1
        %v1351 = vadd.f32 %v1349, %v1350
        %vm1352 = vcmask 1043456
        %v1353 = vsel %vm1352, %v1342, 0.0
        %v1354 = vrot.slane %v1353, 4
        %v1355 = vadd.f32 %v1353, %v1354
        %v1356 = vrot.slane %v1355, 2
        %v1357 = vadd.f32 %v1355, %v1356
        %v1358 = vrot.slane %v1357, 1
        %v1359 = vadd.f32 %v1357, %v1358
        %vm1360 = vcmask 904192
        %v1361 = vsel %vm1360, %v1343, 0.0
        %v1362 = vrot.slane %v1361, 4
        %v1363 = vadd.f32 %v1361, %v1362
        %v1364 = vrot.slane %v1363, 2
        %v1365 = vadd.f32 %v1363, %v1364
        %v1366 = vrot.slane %v1365, 1
        %v1367 = vadd.f32 %v1365, %v1366
        %1370 = vrot.lane.b32.xlu0 %v423, 111
        %v1371 = vpop.permute.xlu0 %1370
        %1372 = vrot.lane.b32.xlu0 %v424, 111
        %v1373 = vpop.permute.xlu0 %1372
        %vm1374 = vcmask 908288
        %v1375 = vsel %vm1374, %v1371, %v1373
        %v1379 = vmul.f32 %v1351, %v1371
        %v1380 = vmul.f32 %v1359, %v1375
        %v1381 = vmul.f32 %v1367, %v1373
        %v1382 = vadd.f32 %v1328, %v1379
        %v1383 = vadd.f32 %v1328, %v1380
        %v1384 = vadd.f32 %v1328, %v1381
        %1385 = vset.pattern.permute.xlu0 1
        %1386 = vperm.xlu0 %1385, %v1335
        %v1387 = vpop.permute.xlu0 %1386
        %v1389 = vmul.f32 %v1332, %v1387
        %v1390 = vmul.f32 %v1333, %v1387
        %v1391 = vmul.f32 %v1334, %v1387
        %v1392 = vsel %vm1344, %v1389, 0.0
        %v1393 = vrot.slane %v1392, 4
        %v1394 = vadd.f32 %v1392, %v1393
        %v1395 = vrot.slane %v1394, 2
        %v1396 = vadd.f32 %v1394, %v1395
        %v1397 = vrot.slane %v1396, 1
        %v1398 = vadd.f32 %v1396, %v1397
        %v1399 = vsel %vm1352, %v1390, 0.0
        %v1400 = vrot.slane %v1399, 4
        %v1401 = vadd.f32 %v1399, %v1400
        %v1402 = vrot.slane %v1401, 2
        %v1403 = vadd.f32 %v1401, %v1402
        %v1404 = vrot.slane %v1403, 1
        %v1405 = vadd.f32 %v1403, %v1404
        %v1406 = vsel %vm1360, %v1391, 0.0
        %v1407 = vrot.slane %v1406, 4
        %v1408 = vadd.f32 %v1406, %v1407
        %v1409 = vrot.slane %v1408, 2
        %v1410 = vadd.f32 %v1408, %v1409
        %v1411 = vrot.slane %v1410, 1
        %v1412 = vadd.f32 %v1410, %v1411
        %v1413 = vmul.f32 %v1398, %v1371
        %v1414 = vmul.f32 %v1405, %v1375
        %v1415 = vmul.f32 %v1412, %v1373
        %v1416 = vadd.f32 %v1331, %v1413
        %v1417 = vadd.f32 %v1331, %v1414
        %v1418 = vadd.f32 %v1331, %v1415
        %1419 = vset.pattern.permute.xlu0 2
        %1420 = vperm.xlu0 %1419, %v1335
        %v1421 = vpop.permute.xlu0 %1420
        %v1423 = vmul.f32 %v1332, %v1421
        %v1424 = vmul.f32 %v1333, %v1421
        %v1425 = vmul.f32 %v1334, %v1421
        %vm1426 = vcmask 1044352
        %v1427 = vsel %vm1426, %v1423, 0.0
        %v1428 = vrot.slane %v1427, 4
        %v1429 = vadd.f32 %v1427, %v1428
        %v1430 = vrot.slane %v1429, 2
        %v1431 = vadd.f32 %v1429, %v1430
        %v1432 = vrot.slane %v1431, 1
        %v1433 = vadd.f32 %v1431, %v1432
        %v1434 = vsel %vm1352, %v1424, 0.0
        %v1435 = vrot.slane %v1434, 4
        %v1436 = vadd.f32 %v1434, %v1435
        %v1437 = vrot.slane %v1436, 2
        %v1438 = vadd.f32 %v1436, %v1437
        %v1439 = vrot.slane %v1438, 1
        %v1440 = vadd.f32 %v1438, %v1439
        %vm1441 = vcmask 912384
        %v1442 = vsel %vm1441, %v1425, 0.0
        %v1443 = vrot.slane %v1442, 4
        %v1444 = vadd.f32 %v1442, %v1443
        %v1445 = vrot.slane %v1444, 2
        %v1446 = vadd.f32 %v1444, %v1445
        %v1447 = vrot.slane %v1446, 1
        %v1448 = vadd.f32 %v1446, %v1447
        %1452 = vrot.lane.b32.xlu0 %v1433, 127
        %v1453 = vpop.permute.xlu0 %1452
        %1454 = vrot.lane.b32.xlu0 %v1440, 127
        %v1455 = vpop.permute.xlu0 %1454
        %1456 = vrot.lane.b32.xlu0 %v1448, 127
        %v1457 = vpop.permute.xlu0 %1456
        %vm1458 = vcmask 1039360
        %v1459 = vsel %vm1458, %v1453, %v1455
        %v1460 = vsel %vm1458, %v1455, %v1457
        %v1464 = vadd.f32 %v1382, %v1459
        %v1465 = vadd.f32 %v1383, %v1460
        %v1466 = vadd.f32 %v1384, %v1457
        %1467 = vset.pattern.permute.xlu0 3
        %1468 = vperm.xlu0 %1467, %v1335
        %v1469 = vpop.permute.xlu0 %1468
        %v1471 = vmul.f32 %v1332, %v1469
        %v1472 = vmul.f32 %v1333, %v1469
        %v1473 = vmul.f32 %v1334, %v1469
        %v1474 = vsel %vm1426, %v1471, 0.0
        %v1475 = vrot.slane %v1474, 4
        %v1476 = vadd.f32 %v1474, %v1475
        %v1477 = vrot.slane %v1476, 2
        %v1478 = vadd.f32 %v1476, %v1477
        %v1479 = vrot.slane %v1478, 1
        %v1480 = vadd.f32 %v1478, %v1479
        %v1481 = vsel %vm1352, %v1472, 0.0
        %v1482 = vrot.slane %v1481, 4
        %v1483 = vadd.f32 %v1481, %v1482
        %v1484 = vrot.slane %v1483, 2
        %v1485 = vadd.f32 %v1483, %v1484
        %v1486 = vrot.slane %v1485, 1
        %v1487 = vadd.f32 %v1485, %v1486
        %v1488 = vsel %vm1441, %v1473, 0.0
        %v1489 = vrot.slane %v1488, 4
        %v1490 = vadd.f32 %v1488, %v1489
        %v1491 = vrot.slane %v1490, 2
        %v1492 = vadd.f32 %v1490, %v1491
        %v1493 = vrot.slane %v1492, 1
        %v1494 = vadd.f32 %v1492, %v1493
        %1498 = vrot.lane.b32.xlu0 %v1480, 127
        %v1499 = vpop.permute.xlu0 %1498
        %1500 = vrot.lane.b32.xlu0 %v1487, 127
        %v1501 = vpop.permute.xlu0 %1500
        %1502 = vrot.lane.b32.xlu0 %v1494, 127
        %v1503 = vpop.permute.xlu0 %1502
        %v1504 = vsel %vm1458, %v1499, %v1501
        %v1505 = vsel %vm1458, %v1501, %v1503
        %v1509 = vadd.f32 %v1416, %v1504
        %v1510 = vadd.f32 %v1417, %v1505
        %v1511 = vadd.f32 %v1418, %v1503
        %1512 = vset.pattern.permute.xlu0 4
        %1513 = vperm.xlu0 %1512, %v1335
        %v1514 = vpop.permute.xlu0 %1513
        %v1516 = vmul.f32 %v1332, %v1514
        %v1517 = vmul.f32 %v1333, %v1514
        %v1518 = vmul.f32 %v1334, %v1514
        %vm1519 = vcmask 1044360
        %v1520 = vsel %vm1519, %v1516, 0.0
        %v1521 = vrot.slane %v1520, 4
        %v1522 = vadd.f32 %v1520, %v1521
        %v1523 = vrot.slane %v1522, 2
        %v1524 = vadd.f32 %v1522, %v1523
        %v1525 = vrot.slane %v1524, 1
        %v1526 = vadd.f32 %v1524, %v1525
        %v1527 = vsel %vm1352, %v1517, 0.0
        %v1528 = vrot.slane %v1527, 4
        %v1529 = vadd.f32 %v1527, %v1528
        %v1530 = vrot.slane %v1529, 2
        %v1531 = vadd.f32 %v1529, %v1530
        %v1532 = vrot.slane %v1531, 1
        %v1533 = vadd.f32 %v1531, %v1532
        %vm1534 = vcmask 920576
        %v1535 = vsel %vm1534, %v1518, 0.0
        %v1536 = vrot.slane %v1535, 4
        %v1537 = vadd.f32 %v1535, %v1536
        %v1538 = vrot.slane %v1537, 2
        %v1539 = vadd.f32 %v1537, %v1538
        %v1540 = vrot.slane %v1539, 1
        %v1541 = vadd.f32 %v1539, %v1540
        %1544 = vrot.lane.b32.xlu0 %v427, 113
        %v1545 = vpop.permute.xlu0 %1544
        %1546 = vrot.lane.b32.xlu0 %v428, 113
        %v1547 = vpop.permute.xlu0 %1546
        %vm1548 = vcmask 924672
        %v1549 = vsel %vm1548, %v1545, %v1547
        %v1553 = vmul.f32 %v1526, %v1545
        %v1554 = vmul.f32 %v1533, %v1549
        %v1555 = vmul.f32 %v1541, %v1547
        %1559 = vrot.lane.b32.xlu0 %v1553, 126
        %v1560 = vpop.permute.xlu0 %1559
        %1561 = vrot.lane.b32.xlu0 %v1554, 126
        %v1562 = vpop.permute.xlu0 %1561
        %1563 = vrot.lane.b32.xlu0 %v1555, 126
        %v1564 = vpop.permute.xlu0 %1563
        %vm1565 = vcmask 1031168
        %v1566 = vsel %vm1565, %v1560, %v1562
        %v1567 = vsel %vm1565, %v1562, %v1564
        %v1571 = vadd.f32 %v1464, %v1566
        %v1572 = vadd.f32 %v1465, %v1567
        %v1573 = vadd.f32 %v1466, %v1564
        %1574 = vset.pattern.permute.xlu0 5
        %1575 = vperm.xlu0 %1574, %v1335
        %v1576 = vpop.permute.xlu0 %1575
        %v1578 = vmul.f32 %v1332, %v1576
        %v1579 = vmul.f32 %v1333, %v1576
        %v1580 = vmul.f32 %v1334, %v1576
        %v1581 = vsel %vm1519, %v1578, 0.0
        %v1582 = vrot.slane %v1581, 4
        %v1583 = vadd.f32 %v1581, %v1582
        %v1584 = vrot.slane %v1583, 2
        %v1585 = vadd.f32 %v1583, %v1584
        %v1586 = vrot.slane %v1585, 1
        %v1587 = vadd.f32 %v1585, %v1586
        %v1588 = vsel %vm1352, %v1579, 0.0
        %v1589 = vrot.slane %v1588, 4
        %v1590 = vadd.f32 %v1588, %v1589
        %v1591 = vrot.slane %v1590, 2
        %v1592 = vadd.f32 %v1590, %v1591
        %v1593 = vrot.slane %v1592, 1
        %v1594 = vadd.f32 %v1592, %v1593
        %v1595 = vsel %vm1534, %v1580, 0.0
        %v1596 = vrot.slane %v1595, 4
        %v1597 = vadd.f32 %v1595, %v1596
        %v1598 = vrot.slane %v1597, 2
        %v1599 = vadd.f32 %v1597, %v1598
        %v1600 = vrot.slane %v1599, 1
        %v1601 = vadd.f32 %v1599, %v1600
        %v1602 = vmul.f32 %v1587, %v1545
        %v1603 = vmul.f32 %v1594, %v1549
        %v1604 = vmul.f32 %v1601, %v1547
        %1608 = vrot.lane.b32.xlu0 %v1602, 126
        %v1609 = vpop.permute.xlu0 %1608
        %1610 = vrot.lane.b32.xlu0 %v1603, 126
        %v1611 = vpop.permute.xlu0 %1610
        %1612 = vrot.lane.b32.xlu0 %v1604, 126
        %v1613 = vpop.permute.xlu0 %1612
        %v1614 = vsel %vm1565, %v1609, %v1611
        %v1615 = vsel %vm1565, %v1611, %v1613
        %v1619 = vadd.f32 %v1509, %v1614
        %v1620 = vadd.f32 %v1510, %v1615
        %v1621 = vadd.f32 %v1511, %v1613
        %1622 = vset.pattern.permute.xlu0 6
        %1623 = vperm.xlu0 %1622, %v1335
        %v1624 = vpop.permute.xlu0 %1623
        %v1626 = vmul.f32 %v1332, %v1624
        %v1627 = vmul.f32 %v1333, %v1624
        %v1628 = vmul.f32 %v1334, %v1624
        %vm1629 = vcmask 1044472
        %v1630 = vsel %vm1629, %v1626, 0.0
        %v1631 = vrot.slane %v1630, 4
        %v1632 = vadd.f32 %v1630, %v1631
        %v1633 = vrot.slane %v1632, 2
        %v1634 = vadd.f32 %v1632, %v1633
        %v1635 = vrot.slane %v1634, 1
        %v1636 = vadd.f32 %v1634, %v1635
        %v1637 = vsel %vm1352, %v1627, 0.0
        %v1638 = vrot.slane %v1637, 4
        %v1639 = vadd.f32 %v1637, %v1638
        %v1640 = vrot.slane %v1639, 2
        %v1641 = vadd.f32 %v1639, %v1640
        %v1642 = vrot.slane %v1641, 1
        %v1643 = vadd.f32 %v1641, %v1642
        %vm1644 = vcmask 1035264
        %v1645 = vsel %vm1644, %v1628, 0.0
        %v1646 = vrot.slane %v1645, 4
        %v1647 = vadd.f32 %v1645, %v1646
        %v1648 = vrot.slane %v1647, 2
        %v1649 = vadd.f32 %v1647, %v1648
        %v1650 = vrot.slane %v1649, 1
        %v1651 = vadd.f32 %v1649, %v1650
        %1652 = vrot.lane.b32.xlu0 %v423, 127
        %v1653 = vpop.permute.xlu0 %1652
        %1654 = vrot.lane.b32.xlu0 %v424, 127
        %v1655 = vpop.permute.xlu0 %1654
        %v1656 = vsel %vm1458, %v1653, %v1655
        %v1660 = vmul.f32 %v1636, %v1653
        %v1661 = vmul.f32 %v1643, %v1656
        %v1662 = vmul.f32 %v1651, %v1655
        %1666 = vrot.lane.b32.xlu0 %v1660, 112
        %v1667 = vpop.permute.xlu0 %1666
        %1668 = vrot.lane.b32.xlu0 %v1661, 112
        %v1669 = vpop.permute.xlu0 %1668
        %1670 = vrot.lane.b32.xlu0 %v1662, 112
        %v1671 = vpop.permute.xlu0 %1670
        %vm1672 = vcmask 916480
        %v1673 = vsel %vm1672, %v1667, %v1669
        %v1674 = vsel %vm1672, %v1669, %v1671
        %v1678 = vadd.f32 %v1571, %v1673
        %v1679 = vadd.f32 %v1572, %v1674
        %v1680 = vadd.f32 %v1573, %v1671
        %1681 = vset.pattern.permute.xlu0 7
        %1682 = vperm.xlu0 %1681, %v1335
        %v1683 = vpop.permute.xlu0 %1682
        %v1685 = vmul.f32 %v1332, %v1683
        %v1686 = vmul.f32 %v1333, %v1683
        %v1687 = vmul.f32 %v1334, %v1683
        %v1688 = vsel %vm1629, %v1685, 0.0
        %v1689 = vrot.slane %v1688, 4
        %v1690 = vadd.f32 %v1688, %v1689
        %v1691 = vrot.slane %v1690, 2
        %v1692 = vadd.f32 %v1690, %v1691
        %v1693 = vrot.slane %v1692, 1
        %v1694 = vadd.f32 %v1692, %v1693
        %v1695 = vsel %vm1352, %v1686, 0.0
        %v1696 = vrot.slane %v1695, 4
        %v1697 = vadd.f32 %v1695, %v1696
        %v1698 = vrot.slane %v1697, 2
        %v1699 = vadd.f32 %v1697, %v1698
        %v1700 = vrot.slane %v1699, 1
        %v1701 = vadd.f32 %v1699, %v1700
        %v1702 = vsel %vm1644, %v1687, 0.0
        %v1703 = vrot.slane %v1702, 4
        %v1704 = vadd.f32 %v1702, %v1703
        %v1705 = vrot.slane %v1704, 2
        %v1706 = vadd.f32 %v1704, %v1705
        %v1707 = vrot.slane %v1706, 1
        %v1708 = vadd.f32 %v1706, %v1707
        %v1709 = vmul.f32 %v1694, %v1653
        %v1710 = vmul.f32 %v1701, %v1656
        %v1711 = vmul.f32 %v1708, %v1655
        %1715 = vrot.lane.b32.xlu0 %v1709, 112
        %v1716 = vpop.permute.xlu0 %1715
        %1717 = vrot.lane.b32.xlu0 %v1710, 112
        %v1718 = vpop.permute.xlu0 %1717
        %1719 = vrot.lane.b32.xlu0 %v1711, 112
        %v1720 = vpop.permute.xlu0 %1719
        %v1721 = vsel %vm1672, %v1716, %v1718
        %v1722 = vsel %vm1672, %v1718, %v1720
        %v1726 = vadd.f32 %v1619, %v1721
        %v1727 = vadd.f32 %v1620, %v1722
        %v1728 = vadd.f32 %v1621, %v1720
        %1729 = vset.pattern.permute.xlu0 8
        %1730 = vperm.xlu0 %1729, %v1335
        %v1731 = vpop.permute.xlu0 %1730
        %v1733 = vmul.f32 %v1333, %v1731
        %v1734 = vmul.f32 %v1334, %v1731
        %v1735 = vsel %vm1352, %v1733, 0.0
        %v1736 = vrot.slane %v1735, 4
        %v1737 = vadd.f32 %v1735, %v1736
        %v1738 = vrot.slane %v1737, 2
        %v1739 = vadd.f32 %v1737, %v1738
        %v1740 = vrot.slane %v1739, 1
        %v1741 = vadd.f32 %v1739, %v1740
        %v1742 = vsel %vm1352, %v1734, 0.0
        %v1743 = vrot.slane %v1742, 4
        %v1744 = vadd.f32 %v1742, %v1743
        %v1745 = vrot.slane %v1744, 2
        %v1746 = vadd.f32 %v1744, %v1745
        %v1747 = vrot.slane %v1746, 1
        %v1748 = vadd.f32 %v1746, %v1747
        %1751 = vrot.lane.b32.xlu0 %v1741, 111
        %v1752 = vpop.permute.xlu0 %1751
        %1753 = vrot.lane.b32.xlu0 %v1748, 111
        %v1754 = vpop.permute.xlu0 %1753
        %v1755 = vsel %vm1374, %v1752, %v1754
        %v1759 = vadd.f32 %v1678, %v1752
        %v1760 = vadd.f32 %v1679, %v1755
        %v1761 = vadd.f32 %v1680, %v1754
        %1762 = vset.pattern.permute.xlu0 9
        %1763 = vperm.xlu0 %1762, %v1335
        %v1764 = vpop.permute.xlu0 %1763
        %v1766 = vmul.f32 %v1333, %v1764
        %v1767 = vmul.f32 %v1334, %v1764
        %v1768 = vsel %vm1352, %v1766, 0.0
        %v1769 = vrot.slane %v1768, 4
        %v1770 = vadd.f32 %v1768, %v1769
        %v1771 = vrot.slane %v1770, 2
        %v1772 = vadd.f32 %v1770, %v1771
        %v1773 = vrot.slane %v1772, 1
        %v1774 = vadd.f32 %v1772, %v1773
        %v1775 = vsel %vm1352, %v1767, 0.0
        %v1776 = vrot.slane %v1775, 4
        %v1777 = vadd.f32 %v1775, %v1776
        %v1778 = vrot.slane %v1777, 2
        %v1779 = vadd.f32 %v1777, %v1778
        %v1780 = vrot.slane %v1779, 1
        %v1781 = vadd.f32 %v1779, %v1780
        %1784 = vrot.lane.b32.xlu0 %v1774, 111
        %v1785 = vpop.permute.xlu0 %1784
        %1786 = vrot.lane.b32.xlu0 %v1781, 111
        %v1787 = vpop.permute.xlu0 %1786
        %v1788 = vsel %vm1374, %v1785, %v1787
        %v1792 = vadd.f32 %v1726, %v1785
        %v1793 = vadd.f32 %v1727, %v1788
        %v1794 = vadd.f32 %v1728, %v1787
        %v1795 = vld [vmem:[#allocation3 + $0x8] sm:$0xf]
        %v1796 = vld [vmem:[#allocation3 + $0x10] sm:$0xf]
        %v1797 = vld [vmem:[#allocation3 + $0x18] sm:$0xf]
        %1798 = vset.pattern.permute.xlu0 10
        %1799 = vperm.xlu0 %1798, %v1335
        %v1800 = vpop.permute.xlu0 %1799
        %v1802 = vmul.f32 %v1795, %v1800
        %v1803 = vmul.f32 %v1796, %v1800
        %v1804 = vmul.f32 %v1797, %v1800
        %vm1805 = vcmask 1043464
        %v1806 = vsel %vm1805, %v1802, 0.0
        %v1807 = vrot.slane %v1806, 4
        %v1808 = vadd.f32 %v1806, %v1807
        %v1809 = vrot.slane %v1808, 2
        %v1810 = vadd.f32 %v1808, %v1809
        %v1811 = vrot.slane %v1810, 1
        %v1812 = vadd.f32 %v1810, %v1811
        %v1813 = vsel %vm1352, %v1803, 0.0
        %v1814 = vrot.slane %v1813, 4
        %v1815 = vadd.f32 %v1813, %v1814
        %v1816 = vrot.slane %v1815, 2
        %v1817 = vadd.f32 %v1815, %v1816
        %v1818 = vrot.slane %v1817, 1
        %v1819 = vadd.f32 %v1817, %v1818
        %vm1820 = vcmask 3072
        %v1821 = vsel %vm1820, %v1804, 0.0
        %v1822 = vrot.slane %v1821, 4
        %v1823 = vadd.f32 %v1821, %v1822
        %v1824 = vrot.slane %v1823, 2
        %v1825 = vadd.f32 %v1823, %v1824
        %v1826 = vrot.slane %v1825, 1
        %v1827 = vadd.f32 %v1825, %v1826
        %1828 = vrot.lane.b32.xlu0 %v427, 1
        %v1829 = vpop.permute.xlu0 %1828
        %1830 = vrot.lane.b32.xlu0 %v428, 1
        %v1831 = vpop.permute.xlu0 %1830
        %vm1832 = vcmask 7168
        %v1833 = vsel %vm1832, %v1829, %v1831
        %v1837 = vmul.f32 %v1812, %v1829
        %v1838 = vmul.f32 %v1819, %v1833
        %v1839 = vmul.f32 %v1827, %v1831
        %1843 = vrot.lane.b32.xlu0 %v1837, 110
        %v1844 = vpop.permute.xlu0 %1843
        %1845 = vrot.lane.b32.xlu0 %v1838, 110
        %v1846 = vpop.permute.xlu0 %1845
        %1847 = vrot.lane.b32.xlu0 %v1839, 110
        %v1848 = vpop.permute.xlu0 %1847
        %vm1849 = vcmask 900096
        %v1850 = vsel %vm1849, %v1844, %v1846
        %v1851 = vsel %vm1849, %v1846, %v1848
        %v1855 = vadd.f32 %v1759, %v1844
        %v1856 = vadd.f32 %v1760, %v1850
        %v1857 = vadd.f32 %v1761, %v1851
        %1858 = vset.pattern.permute.xlu0 11
        %1859 = vperm.xlu0 %1858, %v1335
        %v1860 = vpop.permute.xlu0 %1859
        %v1862 = vmul.f32 %v1795, %v1860
        %v1863 = vmul.f32 %v1796, %v1860
        %v1864 = vmul.f32 %v1797, %v1860
        %v1865 = vsel %vm1805, %v1862, 0.0
        %v1866 = vrot.slane %v1865, 4
        %v1867 = vadd.f32 %v1865, %v1866
        %v1868 = vrot.slane %v1867, 2
        %v1869 = vadd.f32 %v1867, %v1868
        %v1870 = vrot.slane %v1869, 1
        %v1871 = vadd.f32 %v1869, %v1870
        %v1872 = vsel %vm1352, %v1863, 0.0
        %v1873 = vrot.slane %v1872, 4
        %v1874 = vadd.f32 %v1872, %v1873
        %v1875 = vrot.slane %v1874, 2
        %v1876 = vadd.f32 %v1874, %v1875
        %v1877 = vrot.slane %v1876, 1
        %v1878 = vadd.f32 %v1876, %v1877
        %v1879 = vsel %vm1820, %v1864, 0.0
        %v1880 = vrot.slane %v1879, 4
        %v1881 = vadd.f32 %v1879, %v1880
        %v1882 = vrot.slane %v1881, 2
        %v1883 = vadd.f32 %v1881, %v1882
        %v1884 = vrot.slane %v1883, 1
        %v1885 = vadd.f32 %v1883, %v1884
        %v1886 = vmul.f32 %v1871, %v1829
        %v1887 = vmul.f32 %v1878, %v1833
        %v1888 = vmul.f32 %v1885, %v1831
        %1892 = vrot.lane.b32.xlu0 %v1886, 110
        %v1893 = vpop.permute.xlu0 %1892
        %1894 = vrot.lane.b32.xlu0 %v1887, 110
        %v1895 = vpop.permute.xlu0 %1894
        %1896 = vrot.lane.b32.xlu0 %v1888, 110
        %v1897 = vpop.permute.xlu0 %1896
        %v1898 = vsel %vm1849, %v1893, %v1895
        %v1899 = vsel %vm1849, %v1895, %v1897
        %v1903 = vadd.f32 %v1792, %v1893
        %v1904 = vadd.f32 %v1793, %v1898
        %v1905 = vadd.f32 %v1794, %v1899
        %1906 = vset.pattern.permute.xlu0 12
        %1907 = vperm.xlu0 %1906, %v1335
        %v1908 = vpop.permute.xlu0 %1907
        %v1910 = vmul.f32 %v1795, %v1908
        %v1911 = vmul.f32 %v1796, %v1908
        %v1912 = vmul.f32 %v1797, %v1908
        %vm1913 = vcmask 1043576
        %v1914 = vsel %vm1913, %v1910, 0.0
        %v1915 = vrot.slane %v1914, 4
        %v1916 = vadd.f32 %v1914, %v1915
        %v1917 = vrot.slane %v1916, 2
        %v1918 = vadd.f32 %v1916, %v1917
        %v1919 = vrot.slane %v1918, 1
        %v1920 = vadd.f32 %v1918, %v1919
        %v1921 = vsel %vm1352, %v1911, 0.0
        %v1922 = vrot.slane %v1921, 4
        %v1923 = vadd.f32 %v1921, %v1922
        %v1924 = vrot.slane %v1923, 2
        %v1925 = vadd.f32 %v1923, %v1924
        %v1926 = vrot.slane %v1925, 1
        %v1927 = vadd.f32 %v1925, %v1926
        %vm1928 = vcmask 117760
        %v1929 = vsel %vm1928, %v1912, 0.0
        %v1930 = vrot.slane %v1929, 4
        %v1931 = vadd.f32 %v1929, %v1930
        %v1932 = vrot.slane %v1931, 2
        %v1933 = vadd.f32 %v1931, %v1932
        %v1934 = vrot.slane %v1933, 1
        %v1935 = vadd.f32 %v1933, %v1934
        %1936 = vrot.lane.b32.xlu0 %v423, 15
        %v1937 = vpop.permute.xlu0 %1936
        %1938 = vrot.lane.b32.xlu0 %v424, 15
        %v1939 = vpop.permute.xlu0 %1938
        %vm1940 = vcmask 121856
        %v1941 = vsel %vm1940, %v1937, %v1939
        %v1945 = vmul.f32 %v1920, %v1937
        %v1946 = vmul.f32 %v1927, %v1941
        %v1947 = vmul.f32 %v1935, %v1939
        %1951 = vrot.lane.b32.xlu0 %v1945, 96
        %v1952 = vpop.permute.xlu0 %1951
        %1953 = vrot.lane.b32.xlu0 %v1946, 96
        %v1954 = vpop.permute.xlu0 %1953
        %1955 = vrot.lane.b32.xlu0 %v1947, 96
        %v1956 = vpop.permute.xlu0 %1955
        %vm1957 = vcmask 785408
        %v1958 = vsel %vm1957, %v1952, %v1954
        %v1959 = vsel %vm1957, %v1954, %v1956
        %v1963 = vadd.f32 %v1855, %v1952
        %v1964 = vadd.f32 %v1856, %v1958
        %v1965 = vadd.f32 %v1857, %v1959
        %1966 = vset.pattern.permute.xlu0 13
        %1967 = vperm.xlu0 %1966, %v1335
        %v1968 = vpop.permute.xlu0 %1967
        %v1970 = vmul.f32 %v1795, %v1968
        %v1971 = vmul.f32 %v1796, %v1968
        %v1972 = vmul.f32 %v1797, %v1968
        %v1973 = vsel %vm1913, %v1970, 0.0
        %v1974 = vrot.slane %v1973, 4
        %v1975 = vadd.f32 %v1973, %v1974
        %v1976 = vrot.slane %v1975, 2
        %v1977 = vadd.f32 %v1975, %v1976
        %v1978 = vrot.slane %v1977, 1
        %v1979 = vadd.f32 %v1977, %v1978
        %v1980 = vsel %vm1352, %v1971, 0.0
        %v1981 = vrot.slane %v1980, 4
        %v1982 = vadd.f32 %v1980, %v1981
        %v1983 = vrot.slane %v1982, 2
        %v1984 = vadd.f32 %v1982, %v1983
        %v1985 = vrot.slane %v1984, 1
        %v1986 = vadd.f32 %v1984, %v1985
        %v1987 = vsel %vm1928, %v1972, 0.0
        %v1988 = vrot.slane %v1987, 4
        %v1989 = vadd.f32 %v1987, %v1988
        %v1990 = vrot.slane %v1989, 2
        %v1991 = vadd.f32 %v1989, %v1990
        %v1992 = vrot.slane %v1991, 1
        %v1993 = vadd.f32 %v1991, %v1992
        %v1994 = vmul.f32 %v1979, %v1937
        %v1995 = vmul.f32 %v1986, %v1941
        %v1996 = vmul.f32 %v1993, %v1939
        %2000 = vrot.lane.b32.xlu0 %v1994, 96
        %v2001 = vpop.permute.xlu0 %2000
        %2002 = vrot.lane.b32.xlu0 %v1995, 96
        %v2003 = vpop.permute.xlu0 %2002
        %2004 = vrot.lane.b32.xlu0 %v1996, 96
        %v2005 = vpop.permute.xlu0 %2004
        %v2006 = vsel %vm1957, %v2001, %v2003
        %v2007 = vsel %vm1957, %v2003, %v2005
        %v2011 = vadd.f32 %v1903, %v2001
        %v2012 = vadd.f32 %v1904, %v2006
        %v2013 = vadd.f32 %v1905, %v2007
        %2014 = vset.pattern.permute.xlu0 14
        %2015 = vperm.xlu0 %2014, %v1335
        %v2016 = vpop.permute.xlu0 %2015
        %v2018 = vmul.f32 %v1795, %v2016
        %v2019 = vmul.f32 %v1796, %v2016
        %v2020 = vmul.f32 %v1797, %v2016
        %vm2021 = vcmask 1043584
        %v2022 = vsel %vm2021, %v2018, 0.0
        %v2023 = vrot.slane %v2022, 4
        %v2024 = vadd.f32 %v2022, %v2023
        %v2025 = vrot.slane %v2024, 2
        %v2026 = vadd.f32 %v2024, %v2025
        %v2027 = vrot.slane %v2026, 1
        %v2028 = vadd.f32 %v2026, %v2027
        %v2029 = vsel %vm1352, %v2019, 0.0
        %v2030 = vrot.slane %v2029, 4
        %v2031 = vadd.f32 %v2029, %v2030
        %v2032 = vrot.slane %v2031, 2
        %v2033 = vadd.f32 %v2031, %v2032
        %v2034 = vrot.slane %v2033, 1
        %v2035 = vadd.f32 %v2033, %v2034
        %vm2036 = vcmask 125952
        %v2037 = vsel %vm2036, %v2020, 0.0
        %v2038 = vrot.slane %v2037, 4
        %v2039 = vadd.f32 %v2037, %v2038
        %v2040 = vrot.slane %v2039, 2
        %v2041 = vadd.f32 %v2039, %v2040
        %v2042 = vrot.slane %v2041, 1
        %v2043 = vadd.f32 %v2041, %v2042
        %2047 = vrot.lane.b32.xlu0 %v2028, 95
        %v2048 = vpop.permute.xlu0 %2047
        %2049 = vrot.lane.b32.xlu0 %v2035, 95
        %v2050 = vpop.permute.xlu0 %2049
        %2051 = vrot.lane.b32.xlu0 %v2043, 95
        %v2052 = vpop.permute.xlu0 %2051
        %vm2053 = vcmask 777216
        %v2054 = vsel %vm2053, %v2048, %v2050
        %v2055 = vsel %vm2053, %v2050, %v2052
        %v2059 = vadd.f32 %v1963, %v2048
        %v2060 = vadd.f32 %v1964, %v2054
        %v2061 = vadd.f32 %v1965, %v2055
        %2062 = vset.pattern.permute.xlu0 15
        %2063 = vperm.xlu0 %2062, %v1335
        %v2064 = vpop.permute.xlu0 %2063
        %v2066 = vmul.f32 %v1795, %v2064
        %v2067 = vmul.f32 %v1796, %v2064
        %v2068 = vmul.f32 %v1797, %v2064
        %v2069 = vsel %vm2021, %v2066, 0.0
        %v2070 = vrot.slane %v2069, 4
        %v2071 = vadd.f32 %v2069, %v2070
        %v2072 = vrot.slane %v2071, 2
        %v2073 = vadd.f32 %v2071, %v2072
        %v2074 = vrot.slane %v2073, 1
        %v2075 = vadd.f32 %v2073, %v2074
        %v2076 = vsel %vm1352, %v2067, 0.0
        %v2077 = vrot.slane %v2076, 4
        %v2078 = vadd.f32 %v2076, %v2077
        %v2079 = vrot.slane %v2078, 2
        %v2080 = vadd.f32 %v2078, %v2079
        %v2081 = vrot.slane %v2080, 1
        %v2082 = vadd.f32 %v2080, %v2081
        %v2083 = vsel %vm2036, %v2068, 0.0
        %v2084 = vrot.slane %v2083, 4
        %v2085 = vadd.f32 %v2083, %v2084
        %v2086 = vrot.slane %v2085, 2
        %v2087 = vadd.f32 %v2085, %v2086
        %v2088 = vrot.slane %v2087, 1
        %v2089 = vadd.f32 %v2087, %v2088
        %2093 = vrot.lane.b32.xlu0 %v2075, 95
        %v2094 = vpop.permute.xlu0 %2093
        %2095 = vrot.lane.b32.xlu0 %v2082, 95
        %v2096 = vpop.permute.xlu0 %2095
        %2097 = vrot.lane.b32.xlu0 %v2089, 95
        %v2098 = vpop.permute.xlu0 %2097
        %v2099 = vsel %vm2053, %v2094, %v2096
        %v2100 = vsel %vm2053, %v2096, %v2098
        %v2104 = vadd.f32 %v2011, %v2094
        %v2105 = vadd.f32 %v2012, %v2099
        %v2106 = vadd.f32 %v2013, %v2100
        %2107 = vset.pattern.permute.xlu0 16
        %2108 = vperm.xlu0 %2107, %v1335
        %v2109 = vpop.permute.xlu0 %2108
        %v2111 = vmul.f32 %v1795, %v2109
        %v2112 = vmul.f32 %v1796, %v2109
        %v2113 = vmul.f32 %v1797, %v2109
        %vm2114 = vcmask 1043592
        %v2115 = vsel %vm2114, %v2111, 0.0
        %v2116 = vrot.slane %v2115, 4
        %v2117 = vadd.f32 %v2115, %v2116
        %v2118 = vrot.slane %v2117, 2
        %v2119 = vadd.f32 %v2117, %v2118
        %v2120 = vrot.slane %v2119, 1
        %v2121 = vadd.f32 %v2119, %v2120
        %v2122 = vsel %vm1352, %v2112, 0.0
        %v2123 = vrot.slane %v2122, 4
        %v2124 = vadd.f32 %v2122, %v2123
        %v2125 = vrot.slane %v2124, 2
        %v2126 = vadd.f32 %v2124, %v2125
        %v2127 = vrot.slane %v2126, 1
        %v2128 = vadd.f32 %v2126, %v2127
        %vm2129 = vcmask 134144
        %v2130 = vsel %vm2129, %v2113, 0.0
        %v2131 = vrot.slane %v2130, 4
        %v2132 = vadd.f32 %v2130, %v2131
        %v2133 = vrot.slane %v2132, 2
        %v2134 = vadd.f32 %v2132, %v2133
        %v2135 = vrot.slane %v2134, 1
        %v2136 = vadd.f32 %v2134, %v2135
        %2137 = vrot.lane.b32.xlu0 %v427, 17
        %v2138 = vpop.permute.xlu0 %2137
        %2139 = vrot.lane.b32.xlu0 %v428, 17
        %v2140 = vpop.permute.xlu0 %2139
        %vm2141 = vcmask 138240
        %v2142 = vsel %vm2141, %v2138, %v2140
        %v2146 = vmul.f32 %v2121, %v2138
        %v2147 = vmul.f32 %v2128, %v2142
        %v2148 = vmul.f32 %v2136, %v2140
        %2152 = vrot.lane.b32.xlu0 %v2146, 94
        %v2153 = vpop.permute.xlu0 %2152
        %2154 = vrot.lane.b32.xlu0 %v2147, 94
        %v2155 = vpop.permute.xlu0 %2154
        %2156 = vrot.lane.b32.xlu0 %v2148, 94
        %v2157 = vpop.permute.xlu0 %2156
        %vm2158 = vcmask 769024
        %v2159 = vsel %vm2158, %v2153, %v2155
        %v2160 = vsel %vm2158, %v2155, %v2157
        %v2164 = vadd.f32 %v2059, %v2153
        %v2165 = vadd.f32 %v2060, %v2159
        %v2166 = vadd.f32 %v2061, %v2160
        %2167 = vset.pattern.permute.xlu0 17
        %2168 = vperm.xlu0 %2167, %v1335
        %v2169 = vpop.permute.xlu0 %2168
        %v2171 = vmul.f32 %v1795, %v2169
        %v2172 = vmul.f32 %v1796, %v2169
        %v2173 = vmul.f32 %v1797, %v2169
        %v2174 = vsel %vm2114, %v2171, 0.0
        %v2175 = vrot.slane %v2174, 4
        %v2176 = vadd.f32 %v2174, %v2175
        %v2177 = vrot.slane %v2176, 2
        %v2178 = vadd.f32 %v2176, %v2177
        %v2179 = vrot.slane %v2178, 1
        %v2180 = vadd.f32 %v2178, %v2179
        %v2181 = vsel %vm1352, %v2172, 0.0
        %v2182 = vrot.slane %v2181, 4
        %v2183 = vadd.f32 %v2181, %v2182
        %v2184 = vrot.slane %v2183, 2
        %v2185 = vadd.f32 %v2183, %v2184
        %v2186 = vrot.slane %v2185, 1
        %v2187 = vadd.f32 %v2185, %v2186
        %v2188 = vsel %vm2129, %v2173, 0.0
        %v2189 = vrot.slane %v2188, 4
        %v2190 = vadd.f32 %v2188, %v2189
        %v2191 = vrot.slane %v2190, 2
        %v2192 = vadd.f32 %v2190, %v2191
        %v2193 = vrot.slane %v2192, 1
        %v2194 = vadd.f32 %v2192, %v2193
        %v2195 = vmul.f32 %v2180, %v2138
        %v2196 = vmul.f32 %v2187, %v2142
        %v2197 = vmul.f32 %v2194, %v2140
        %2201 = vrot.lane.b32.xlu0 %v2195, 94
        %v2202 = vpop.permute.xlu0 %2201
        %2203 = vrot.lane.b32.xlu0 %v2196, 94
        %v2204 = vpop.permute.xlu0 %2203
        %2205 = vrot.lane.b32.xlu0 %v2197, 94
        %v2206 = vpop.permute.xlu0 %2205
        %v2207 = vsel %vm2158, %v2202, %v2204
        %v2208 = vsel %vm2158, %v2204, %v2206
        %v2212 = vadd.f32 %v2104, %v2202
        %v2213 = vadd.f32 %v2105, %v2207
        %v2214 = vadd.f32 %v2106, %v2208
        %v2215 = vmax.f32 %v2164, 0.0
        %v2216 = vmax.f32 %v2165, 0.0
        %v2217 = vmax.f32 %v2166, 0.0
        %v2218 = vmax.f32 %v2212, 0.0
        %v2219 = vmax.f32 %v2213, 0.0
        %v2220 = vmax.f32 %v2214, 0.0
        %v2224 = vrot.slane %v2218, 7
        %v2225 = vrot.slane %v2219, 7
        %v2226 = vrot.slane %v2220, 7
        %v2230 = vsel %vm1316, %v2215, %v2224
        %v2231 = vsel %vm1316, %v2216, %v2225
        %v2232 = vsel %vm1316, %v2217, %v2226
        %2236 = vrot.lane.b32.xlu0 %v2230, 17
        %v2237 = vpop.permute.xlu0 %2236
        %2238 = vrot.lane.b32.xlu0 %v2231, 17
        %v2239 = vpop.permute.xlu0 %2238
        %2240 = vrot.lane.b32.xlu0 %v2232, 17
        %v2241 = vpop.permute.xlu0 %2240
        %v2242 = vsel %vm2141, %v2237, %v2239
        %v2243 = vsel %vm2141, %v2239, %v2241
        %2246 = vst [vmem:[#allocation3 + $0x8] sm:$0x3] %v2242
        %2247 = vst [vmem:[#allocation3 + $0x10] sm:$0x3] %v2243
        %s2248 = sld [smem:[#allocation4]]
        %v2249 = vstv %s2248
        %v2250 = vadd.f32 %v2249, 0.0
        %v2251 = vld [vmem:[#allocation3] sm:$0x3]
        %v2252 = vld [vmem:[#allocation3 + $0x8] sm:$0x3]
        %v2253 = vld [vmem:[#allocation3 + $0x10] sm:$0x3]
        %v2254 = vld [vmem:[%s6] sm:$0x3]
        %2256 = vset.pattern.permute.xlu0 0
        %2257 = vperm.xlu0 %2256, %v2254
        %v2258 = vpop.permute.xlu0 %2257
        %v2260 = vmul.f32 %v2251, %v2258
        %v2261 = vmul.f32 %v2252, %v2258
        %v2262 = vmul.f32 %v2253, %v2258
        %vm2263 = vcmask 1042296
        %v2264 = vsel %vm2263, %v2260, 0.0
        %v2265 = vrot.slane %v2264, 4
        %v2266 = vadd.f32 %v2264, %v2265
        %v2267 = vrot.slane %v2266, 2
        %v2268 = vadd.f32 %v2266, %v2267
        %v2269 = vrot.slane %v2268, 1
        %v2270 = vadd.f32 %v2268, %v2269
        %v2271 = vsel %vm512, %v2261, 0.0
        %v2272 = vrot.slane %v2271, 4
        %v2273 = vadd.f32 %v2271, %v2272
        %v2274 = vrot.slane %v2273, 2
        %v2275 = vadd.f32 %v2273, %v2274
        %v2276 = vrot.slane %v2275, 1
        %v2277 = vadd.f32 %v2275, %v2276
        %vm2278 = vcmask 902144
        %v2279 = vsel %vm2278, %v2262, 0.0
        %v2280 = vrot.slane %v2279, 4
        %v2281 = vadd.f32 %v2279, %v2280
        %v2282 = vrot.slane %v2281, 2
        %v2283 = vadd.f32 %v2281, %v2282
        %v2284 = vrot.slane %v2283, 1
        %v2285 = vadd.f32 %v2283, %v2284
        %v2286 = vmul.f32 %v2270, %v1371
        %v2287 = vmul.f32 %v2277, %v1375
        %v2288 = vmul.f32 %v2285, %v1373
        %v2289 = vadd.f32 %v2250, %v2286
        %v2290 = vadd.f32 %v2250, %v2287
        %v2291 = vadd.f32 %v2250, %v2288
        %2292 = vset.pattern.permute.xlu0 1
        %2293 = vperm.xlu0 %2292, %v2254
        %v2294 = vpop.permute.xlu0 %2293
        %v2296 = vmul.f32 %v2251, %v2294
        %v2297 = vmul.f32 %v2252, %v2294
        %v2298 = vmul.f32 %v2253, %v2294
        %vm2299 = vcmask 1042304
        %v2300 = vsel %vm2299, %v2296, 0.0
        %v2301 = vrot.slane %v2300, 4
        %v2302 = vadd.f32 %v2300, %v2301
        %v2303 = vrot.slane %v2302, 2
        %v2304 = vadd.f32 %v2302, %v2303
        %v2305 = vrot.slane %v2304, 1
        %v2306 = vadd.f32 %v2304, %v2305
        %v2307 = vsel %vm512, %v2297, 0.0
        %v2308 = vrot.slane %v2307, 4
        %v2309 = vadd.f32 %v2307, %v2308
        %v2310 = vrot.slane %v2309, 2
        %v2311 = vadd.f32 %v2309, %v2310
        %v2312 = vrot.slane %v2311, 1
        %v2313 = vadd.f32 %v2311, %v2312
        %vm2314 = vcmask 910336
        %v2315 = vsel %vm2314, %v2298, 0.0
        %v2316 = vrot.slane %v2315, 4
        %v2317 = vadd.f32 %v2315, %v2316
        %v2318 = vrot.slane %v2317, 2
        %v2319 = vadd.f32 %v2317, %v2318
        %v2320 = vrot.slane %v2319, 1
        %v2321 = vadd.f32 %v2319, %v2320
        %2325 = vrot.lane.b32.xlu0 %v2306, 127
        %v2326 = vpop.permute.xlu0 %2325
        %2327 = vrot.lane.b32.xlu0 %v2313, 127
        %v2328 = vpop.permute.xlu0 %2327
        %2329 = vrot.lane.b32.xlu0 %v2321, 127
        %v2330 = vpop.permute.xlu0 %2329
        %v2331 = vsel %vm1458, %v2326, %v2328
        %v2332 = vsel %vm1458, %v2328, %v2330
        %v2336 = vadd.f32 %v2289, %v2331
        %v2337 = vadd.f32 %v2290, %v2332
        %v2338 = vadd.f32 %v2291, %v2330
        %2339 = vset.pattern.permute.xlu0 2
        %2340 = vperm.xlu0 %2339, %v2254
        %v2341 = vpop.permute.xlu0 %2340
        %v2343 = vmul.f32 %v2251, %v2341
        %v2344 = vmul.f32 %v2252, %v2341
        %v2345 = vmul.f32 %v2253, %v2341
        %vm2346 = vcmask 1042312
        %v2347 = vsel %vm2346, %v2343, 0.0
        %v2348 = vrot.slane %v2347, 4
        %v2349 = vadd.f32 %v2347, %v2348
        %v2350 = vrot.slane %v2349, 2
        %v2351 = vadd.f32 %v2349, %v2350
        %v2352 = vrot.slane %v2351, 1
        %v2353 = vadd.f32 %v2351, %v2352
        %v2354 = vsel %vm512, %v2344, 0.0
        %v2355 = vrot.slane %v2354, 4
        %v2356 = vadd.f32 %v2354, %v2355
        %v2357 = vrot.slane %v2356, 2
        %v2358 = vadd.f32 %v2356, %v2357
        %v2359 = vrot.slane %v2358, 1
        %v2360 = vadd.f32 %v2358, %v2359
        %vm2361 = vcmask 918528
        %v2362 = vsel %vm2361, %v2345, 0.0
        %v2363 = vrot.slane %v2362, 4
        %v2364 = vadd.f32 %v2362, %v2363
        %v2365 = vrot.slane %v2364, 2
        %v2366 = vadd.f32 %v2364, %v2365
        %v2367 = vrot.slane %v2366, 1
        %v2368 = vadd.f32 %v2366, %v2367
        %v2369 = vmul.f32 %v2353, %v1545
        %v2370 = vmul.f32 %v2360, %v1549
        %v2371 = vmul.f32 %v2368, %v1547
        %2375 = vrot.lane.b32.xlu0 %v2369, 126
        %v2376 = vpop.permute.xlu0 %2375
        %2377 = vrot.lane.b32.xlu0 %v2370, 126
        %v2378 = vpop.permute.xlu0 %2377
        %2379 = vrot.lane.b32.xlu0 %v2371, 126
        %v2380 = vpop.permute.xlu0 %2379
        %v2381 = vsel %vm1565, %v2376, %v2378
        %v2382 = vsel %vm1565, %v2378, %v2380
        %v2386 = vadd.f32 %v2336, %v2381
        %v2387 = vadd.f32 %v2337, %v2382
        %v2388 = vadd.f32 %v2338, %v2380
        %2389 = vset.pattern.permute.xlu0 3
        %2390 = vperm.xlu0 %2389, %v2254
        %v2391 = vpop.permute.xlu0 %2390
        %v2393 = vmul.f32 %v2251, %v2391
        %v2394 = vmul.f32 %v2252, %v2391
        %v2395 = vmul.f32 %v2253, %v2391
        %vm2396 = vcmask 1042424
        %v2397 = vsel %vm2396, %v2393, 0.0
        %v2398 = vrot.slane %v2397, 4
        %v2399 = vadd.f32 %v2397, %v2398
        %v2400 = vrot.slane %v2399, 2
        %v2401 = vadd.f32 %v2399, %v2400
        %v2402 = vrot.slane %v2401, 1
        %v2403 = vadd.f32 %v2401, %v2402
        %v2404 = vsel %vm512, %v2394, 0.0
        %v2405 = vrot.slane %v2404, 4
        %v2406 = vadd.f32 %v2404, %v2405
        %v2407 = vrot.slane %v2406, 2
        %v2408 = vadd.f32 %v2406, %v2407
        %v2409 = vrot.slane %v2408, 1
        %v2410 = vadd.f32 %v2408, %v2409
        %vm2411 = vcmask 1033216
        %v2412 = vsel %vm2411, %v2395, 0.0
        %v2413 = vrot.slane %v2412, 4
        %v2414 = vadd.f32 %v2412, %v2413
        %v2415 = vrot.slane %v2414, 2
        %v2416 = vadd.f32 %v2414, %v2415
        %v2417 = vrot.slane %v2416, 1
        %v2418 = vadd.f32 %v2416, %v2417
        %v2419 = vmul.f32 %v2403, %v1653
        %v2420 = vmul.f32 %v2410, %v1656
        %v2421 = vmul.f32 %v2418, %v1655
        %2425 = vrot.lane.b32.xlu0 %v2419, 112
        %v2426 = vpop.permute.xlu0 %2425
        %2427 = vrot.lane.b32.xlu0 %v2420, 112
        %v2428 = vpop.permute.xlu0 %2427
        %2429 = vrot.lane.b32.xlu0 %v2421, 112
        %v2430 = vpop.permute.xlu0 %2429
        %v2431 = vsel %vm1672, %v2426, %v2428
        %v2432 = vsel %vm1672, %v2428, %v2430
        %v2436 = vadd.f32 %v2386, %v2431
        %v2437 = vadd.f32 %v2387, %v2432
        %v2438 = vadd.f32 %v2388, %v2430
        %2439 = vset.pattern.permute.xlu0 4
        %2440 = vperm.xlu0 %2439, %v2254
        %v2441 = vpop.permute.xlu0 %2440
        %v2443 = vmul.f32 %v2252, %v2441
        %v2444 = vmul.f32 %v2253, %v2441
        %v2445 = vsel %vm512, %v2443, 0.0
        %v2446 = vrot.slane %v2445, 4
        %v2447 = vadd.f32 %v2445, %v2446
        %v2448 = vrot.slane %v2447, 2
        %v2449 = vadd.f32 %v2447, %v2448
        %v2450 = vrot.slane %v2449, 1
        %v2451 = vadd.f32 %v2449, %v2450
        %v2452 = vsel %vm512, %v2444, 0.0
        %v2453 = vrot.slane %v2452, 4
        %v2454 = vadd.f32 %v2452, %v2453
        %v2455 = vrot.slane %v2454, 2
        %v2456 = vadd.f32 %v2454, %v2455
        %v2457 = vrot.slane %v2456, 1
        %v2458 = vadd.f32 %v2456, %v2457
        %2461 = vrot.lane.b32.xlu0 %v2451, 111
        %v2462 = vpop.permute.xlu0 %2461
        %2463 = vrot.lane.b32.xlu0 %v2458, 111
        %v2464 = vpop.permute.xlu0 %2463
        %v2465 = vsel %vm1374, %v2462, %v2464
        %v2469 = vadd.f32 %v2436, %v2462
        %v2470 = vadd.f32 %v2437, %v2465
        %v2471 = vadd.f32 %v2438, %v2464
        %v2472 = vld [vmem:[#allocation3 + $0x8] sm:$0x3]
        %v2473 = vld [vmem:[#allocation3 + $0x10] sm:$0x3]
        %v2474 = vld [vmem:[#allocation3 + $0x18] sm:$0x3]
        %2475 = vset.pattern.permute.xlu0 5
        %2476 = vperm.xlu0 %2475, %v2254
        %v2477 = vpop.permute.xlu0 %2476
        %v2479 = vmul.f32 %v2472, %v2477
        %v2480 = vmul.f32 %v2473, %v2477
        %v2481 = vmul.f32 %v2474, %v2477
        %vm2482 = vcmask 1041416
        %v2483 = vsel %vm2482, %v2479, 0.0
        %v2484 = vrot.slane %v2483, 4
        %v2485 = vadd.f32 %v2483, %v2484
        %v2486 = vrot.slane %v2485, 2
        %v2487 = vadd.f32 %v2485, %v2486
        %v2488 = vrot.slane %v2487, 1
        %v2489 = vadd.f32 %v2487, %v2488
        %v2490 = vsel %vm512, %v2480, 0.0
        %v2491 = vrot.slane %v2490, 4
        %v2492 = vadd.f32 %v2490, %v2491
        %v2493 = vrot.slane %v2492, 2
        %v2494 = vadd.f32 %v2492, %v2493
        %v2495 = vrot.slane %v2494, 1
        %v2496 = vadd.f32 %v2494, %v2495
        %vm2497 = vcmask 1024
        %v2498 = vsel %vm2497, %v2481, 0.0
        %v2499 = vrot.slane %v2498, 4
        %v2500 = vadd.f32 %v2498, %v2499
        %v2501 = vrot.slane %v2500, 2
        %v2502 = vadd.f32 %v2500, %v2501
        %v2503 = vrot.slane %v2502, 1
        %v2504 = vadd.f32 %v2502, %v2503
        %v2505 = vmul.f32 %v2489, %v1829
        %v2506 = vmul.f32 %v2496, %v1833
        %v2507 = vmul.f32 %v2504, %v1831
        %2511 = vrot.lane.b32.xlu0 %v2505, 110
        %v2512 = vpop.permute.xlu0 %2511
        %2513 = vrot.lane.b32.xlu0 %v2506, 110
        %v2514 = vpop.permute.xlu0 %2513
        %2515 = vrot.lane.b32.xlu0 %v2507, 110
        %v2516 = vpop.permute.xlu0 %2515
        %v2517 = vsel %vm1849, %v2512, %v2514
        %v2518 = vsel %vm1849, %v2514, %v2516
        %v2522 = vadd.f32 %v2469, %v2512
        %v2523 = vadd.f32 %v2470, %v2517
        %v2524 = vadd.f32 %v2471, %v2518
        %2525 = vset.pattern.permute.xlu0 6
        %2526 = vperm.xlu0 %2525, %v2254
        %v2527 = vpop.permute.xlu0 %2526
        %v2529 = vmul.f32 %v2472, %v2527
        %v2530 = vmul.f32 %v2473, %v2527
        %v2531 = vmul.f32 %v2474, %v2527
        %vm2532 = vcmask 1041528
        %v2533 = vsel %vm2532, %v2529, 0.0
        %v2534 = vrot.slane %v2533, 4
        %v2535 = vadd.f32 %v2533, %v2534
        %v2536 = vrot.slane %v2535, 2
        %v2537 = vadd.f32 %v2535, %v2536
        %v2538 = vrot.slane %v2537, 1
        %v2539 = vadd.f32 %v2537, %v2538
        %v2540 = vsel %vm512, %v2530, 0.0
        %v2541 = vrot.slane %v2540, 4
        %v2542 = vadd.f32 %v2540, %v2541
        %v2543 = vrot.slane %v2542, 2
        %v2544 = vadd.f32 %v2542, %v2543
        %v2545 = vrot.slane %v2544, 1
        %v2546 = vadd.f32 %v2544, %v2545
        %vm2547 = vcmask 115712
        %v2548 = vsel %vm2547, %v2531, 0.0
        %v2549 = vrot.slane %v2548, 4
        %v2550 = vadd.f32 %v2548, %v2549
        %v2551 = vrot.slane %v2550, 2
        %v2552 = vadd.f32 %v2550, %v2551
        %v2553 = vrot.slane %v2552, 1
        %v2554 = vadd.f32 %v2552, %v2553
        %v2555 = vmul.f32 %v2539, %v1937
        %v2556 = vmul.f32 %v2546, %v1941
        %v2557 = vmul.f32 %v2554, %v1939
        %2561 = vrot.lane.b32.xlu0 %v2555, 96
        %v2562 = vpop.permute.xlu0 %2561
        %2563 = vrot.lane.b32.xlu0 %v2556, 96
        %v2564 = vpop.permute.xlu0 %2563
        %2565 = vrot.lane.b32.xlu0 %v2557, 96
        %v2566 = vpop.permute.xlu0 %2565
        %v2567 = vsel %vm1957, %v2562, %v2564
        %v2568 = vsel %vm1957, %v2564, %v2566
        %v2572 = vadd.f32 %v2522, %v2562
        %v2573 = vadd.f32 %v2523, %v2567
        %v2574 = vadd.f32 %v2524, %v2568
        %2575 = vset.pattern.permute.xlu0 7
        %2576 = vperm.xlu0 %2575, %v2254
        %v2577 = vpop.permute.xlu0 %2576
        %v2579 = vmul.f32 %v2472, %v2577
        %v2580 = vmul.f32 %v2473, %v2577
        %v2581 = vmul.f32 %v2474, %v2577
        %vm2582 = vcmask 1041536
        %v2583 = vsel %vm2582, %v2579, 0.0
        %v2584 = vrot.slane %v2583, 4
        %v2585 = vadd.f32 %v2583, %v2584
        %v2586 = vrot.slane %v2585, 2
        %v2587 = vadd.f32 %v2585, %v2586
        %v2588 = vrot.slane %v2587, 1
        %v2589 = vadd.f32 %v2587, %v2588
        %v2590 = vsel %vm512, %v2580, 0.0
        %v2591 = vrot.slane %v2590, 4
        %v2592 = vadd.f32 %v2590, %v2591
        %v2593 = vrot.slane %v2592, 2
        %v2594 = vadd.f32 %v2592, %v2593
        %v2595 = vrot.slane %v2594, 1
        %v2596 = vadd.f32 %v2594, %v2595
        %vm2597 = vcmask 123904
        %v2598 = vsel %vm2597, %v2581, 0.0
        %v2599 = vrot.slane %v2598, 4
        %v2600 = vadd.f32 %v2598, %v2599
        %v2601 = vrot.slane %v2600, 2
        %v2602 = vadd.f32 %v2600, %v2601
        %v2603 = vrot.slane %v2602, 1
        %v2604 = vadd.f32 %v2602, %v2603
        %2608 = vrot.lane.b32.xlu0 %v2589, 95
        %v2609 = vpop.permute.xlu0 %2608
        %2610 = vrot.lane.b32.xlu0 %v2596, 95
        %v2611 = vpop.permute.xlu0 %2610
        %2612 = vrot.lane.b32.xlu0 %v2604, 95
        %v2613 = vpop.permute.xlu0 %2612
        %v2614 = vsel %vm2053, %v2609, %v2611
        %v2615 = vsel %vm2053, %v2611, %v2613
        %v2619 = vadd.f32 %v2572, %v2609
        %v2620 = vadd.f32 %v2573, %v2614
        %v2621 = vadd.f32 %v2574, %v2615
        %2622 = vset.pattern.permute.xlu0 8
        %2623 = vperm.xlu0 %2622, %v2254
        %v2624 = vpop.permute.xlu0 %2623
        %v2626 = vmul.f32 %v2472, %v2624
        %v2627 = vmul.f32 %v2473, %v2624
        %v2628 = vmul.f32 %v2474, %v2624
        %vm2629 = vcmask 1041544
        %v2630 = vsel %vm2629, %v2626, 0.0
        %v2631 = vrot.slane %v2630, 4
        %v2632 = vadd.f32 %v2630, %v2631
        %v2633 = vrot.slane %v2632, 2
        %v2634 = vadd.f32 %v2632, %v2633
        %v2635 = vrot.slane %v2634, 1
        %v2636 = vadd.f32 %v2634, %v2635
        %v2637 = vsel %vm512, %v2627, 0.0
        %v2638 = vrot.slane %v2637, 4
        %v2639 = vadd.f32 %v2637, %v2638
        %v2640 = vrot.slane %v2639, 2
        %v2641 = vadd.f32 %v2639, %v2640
        %v2642 = vrot.slane %v2641, 1
        %v2643 = vadd.f32 %v2641, %v2642
        %vm2644 = vcmask 132096
        %v2645 = vsel %vm2644, %v2628, 0.0
        %v2646 = vrot.slane %v2645, 4
        %v2647 = vadd.f32 %v2645, %v2646
        %v2648 = vrot.slane %v2647, 2
        %v2649 = vadd.f32 %v2647, %v2648
        %v2650 = vrot.slane %v2649, 1
        %v2651 = vadd.f32 %v2649, %v2650
        %v2652 = vmul.f32 %v2636, %v2138
        %v2653 = vmul.f32 %v2643, %v2142
        %v2654 = vmul.f32 %v2651, %v2140
        %2658 = vrot.lane.b32.xlu0 %v2652, 94
        %v2659 = vpop.permute.xlu0 %2658
        %2660 = vrot.lane.b32.xlu0 %v2653, 94
        %v2661 = vpop.permute.xlu0 %2660
        %2662 = vrot.lane.b32.xlu0 %v2654, 94
        %v2663 = vpop.permute.xlu0 %2662
        %v2664 = vsel %vm2158, %v2659, %v2661
        %v2665 = vsel %vm2158, %v2661, %v2663
        %v2669 = vadd.f32 %v2619, %v2659
        %v2670 = vadd.f32 %v2620, %v2664
        %v2671 = vadd.f32 %v2621, %v2665
        %v2672 = vxor.u32 %v2669, 2147483648
        %v2673 = vxor.u32 %v2670, 2147483648
        %v2674 = vxor.u32 %v2671, 2147483648
        %v2675 = vmul.f32 %v2672, 1.442695
        %v2676 = vpow.pop %v2675
        %v2677 = vmul.f32 %v2673, 1.442695
        %v2678 = vpow.pop %v2677
        %v2679 = vmul.f32 %v2674, 1.442695
        %v2680 = vpow.pop %v2679
        %v2681 = vadd.f32 %v2676, 1.0
        %v2682 = vadd.f32 %v2678, 1.0
        %v2683 = vadd.f32 %v2680, 1.0
        %v2684 = vrcp.pop %v2681
        %v2685 = vmul.f32 1.0, %v2684
        %v2686 = vrcp.pop %v2682
        %v2687 = vmul.f32 1.0, %v2686
        %v2688 = vrcp.pop %v2683
        %v2689 = vmul.f32 1.0, %v2688
        %v2690 = vlaneseq
        %v2691 = vshrl.u32 %v2690, 7
        %v2692 = vsub.s32 0, %v2691
        %v2693 = vrot.slane %v2685, %v2692
        %v2694 = vlaneseq
        %v2695 = vshrl.u32 %v2694, 7
        %v2696 = vsub.s32 0, %v2695
        %v2697 = vrot.slane %v2687, %v2696
        %v2698 = vlaneseq
        %v2699 = vshrl.u32 %v2698, 7
        %v2700 = vsub.s32 0, %v2699
        %v2701 = vrot.slane %v2689, %v2700
        %2705 = vrot.lane.b32.xlu0 %v2693, 17
        %v2706 = vpop.permute.xlu0 %2705
        %2707 = vrot.lane.b32.xlu0 %v2697, 17
        %v2708 = vpop.permute.xlu0 %2707
        %2709 = vrot.lane.b32.xlu0 %v2701, 17
        %v2710 = vpop.permute.xlu0 %2709
        %v2711 = vsel %vm2141, %v2706, %v2708
        %v2712 = vsel %vm2141, %v2708, %v2710
        %v2715 = vmul.f32 %v437, %v2711
        %v2716 = vmul.f32 %v438, %v2712
        %v2717 = vmul.f32 %v439, %v2711
        %v2718 = vmul.f32 %v440, %v2712
        %v2719 = vsub.f32 1.0, %v2685
        %v2720 = vsub.f32 1.0, %v2687
        %v2721 = vsub.f32 1.0, %v2689
        %v2722 = vlaneseq
        %v2723 = vshrl.u32 %v2722, 7
        %v2724 = vsub.s32 0, %v2723
        %v2725 = vrot.slane %v2719, %v2724
        %v2726 = vlaneseq
        %v2727 = vshrl.u32 %v2726, 7
        %v2728 = vsub.s32 0, %v2727
        %v2729 = vrot.slane %v2720, %v2728
        %v2730 = vlaneseq
        %v2731 = vshrl.u32 %v2730, 7
        %v2732 = vsub.s32 0, %v2731
        %v2733 = vrot.slane %v2721, %v2732
        %2737 = vrot.lane.b32.xlu0 %v2725, 17
        %v2738 = vpop.permute.xlu0 %2737
        %2739 = vrot.lane.b32.xlu0 %v2729, 17
        %v2740 = vpop.permute.xlu0 %2739
        %2741 = vrot.lane.b32.xlu0 %v2733, 17
        %v2742 = vpop.permute.xlu0 %2741
        %v2743 = vsel %vm2141, %v2738, %v2740
        %v2744 = vsel %vm2141, %v2740, %v2742
        %v2747 = vmul.f32 %v1251, %v2743
        %v2748 = vmul.f32 %v1252, %v2744
        %v2749 = vmul.f32 %v1253, %v2743
        %v2750 = vmul.f32 %v1254, %v2744
        %v2751 = vadd.f32 %v2715, %v2747
        %v2752 = vadd.f32 %v2716, %v2748
        %v2753 = vadd.f32 %v2717, %v2749
        %v2754 = vadd.f32 %v2718, %v2750
        %v2755 = vpack.c.bf16 %v2753, %v2751
        %v2756 = vpack.c.bf16 %v2754, %v2752
        %v2759 = vunpack.c.l.b16 %v2755
        %v2760 = vunpack.c.l.b16 %v2756
        %v2761 = vunpack.c.h.b16 %v2755
        %v2762 = vunpack.c.h.b16 %v2756
        %v2763 = vpack.c.b16 %v2760, %v2759
        %v2764 = vpack.c.b16 %v2762, %v2761
        %2767 = vst [vmem:[#allocation2 + $0x4] sm:$0xff] %v2763
        %2768 = vst [vmem:[#allocation2 + $0x14] sm:$0xff] %v2764
        %v2769 = vld [vmem:[%s9] sm:$0xff]
        %2771 = vset.pattern.permute.xlu0 0
        %2772 = vperm.xlu0 %2771, %v2769
        %v2773 = vpop.permute.xlu0 %2772
        %v2775 = vadd.f32 %v2773, 0.0
        %v2776 = vld [vmem:[#allocation2] sm:$0xff]
        %v2777 = vld [vmem:[#allocation2 + $0x8] sm:$0xf]
        %v2778 = vld [vmem:[#allocation2 + $0x10] sm:$0xff]
        %v2779 = vld [vmem:[#allocation2 + $0x18] sm:$0xf]
        %v2780 = vld [vmem:[%s8] sm:$0xf]
        %v2785 = vunpack.c.l.b16 %v2776
        %v2786 = vunpack.c.h.b16 %v2776
        %v2787 = vunpack.c.l.b16 %v2777
        %v2788 = vunpack.c.l.b16 %v2778
        %v2789 = vunpack.c.h.b16 %v2778
        %v2790 = vunpack.c.l.b16 %v2779
        %v2791 = vpack.c.b16 %v2788, %v2785
        %v2792 = vpack.c.b16 %v2789, %v2786
        %v2793 = vpack.c.b16 %v2790, %v2787
        %2794 = vrot.lane.b32.xlu0 %v2791, 17
        %v2795 = vpop.permute.xlu0 %2794
        %2796 = vrot.lane.b32.xlu0 %v2792, 17
        %v2797 = vpop.permute.xlu0 %2796
        %2798 = vrot.lane.b32.xlu0 %v2793, 17
        %v2799 = vpop.permute.xlu0 %2798
        %v2800 = vsel %vm505, %v2795, %v2797
        %v2801 = vsel %vm505, %v2797, %v2799
        %vm2804 = vcmask 130048
        %v2806 = vsel %vm2804, %v2780, 0
        %2808 = vmatprep.subr.bf16.mxu0 0
        %2809 = vmatpush1.bf16.msra.mxu0 0
        %2810 = vmatprep.subr.bf16.mxu0 0
        %2811 = vmatpush1.bf16.msra.mxu0 0
        %2812 = vmatprep.subr.bf16.mxu0 0
        %2813 = vmatpush1.bf16.msra.mxu0 0
        %2814 = vmatprep.subr.bf16.mxu0 0
        %2815 = vmatpush1.bf16.msra.mxu0 0
        %2816 = vmatprep.subr.bf16.mxu0 0
        %2817 = vmatpush1.bf16.msra.mxu0 0
        %2818 = vmatprep.subr.bf16.mxu0 0
        %2819 = vmatpush1.bf16.msra.mxu0 0
        %2820 = vmatprep.subr.bf16.mxu0 0
        %2821 = vmatpush1.bf16.msra.mxu0 0
        %2822 = vmatprep.subr.bf16.mxu0 %v2801
        %2823 = vmatpush1.bf16.msra.mxu0 %v2800
        %2824 = vmatprep.subr.bf16.mxu0 0
        %2825 = vmatpush2.bf16.msra.mxu0 0
        %2826 = vmatprep.subr.bf16.mxu0 0
        %2827 = vmatpush2.bf16.msra.mxu0 0
        %2828 = vmatprep.subr.bf16.mxu0 0
        %2829 = vmatpush2.bf16.msra.mxu0 0
        %2830 = vmatprep.subr.bf16.mxu0 0
        %2831 = vmatpush2.bf16.msra.mxu0 0
        %2832 = vmatprep.subr.bf16.mxu0 0
        %2833 = vmatpush2.bf16.msra.mxu0 0
        %2834 = vmatprep.subr.bf16.mxu0 0
        %2835 = vmatpush2.bf16.msra.mxu0 0
        %2836 = vmatprep.subr.bf16.mxu0 0
        %2837 = vmatpush2.bf16.msra.mxu0 0
        %2838 = vmatprep.subr.bf16.mxu0 0
        %2839 = vmatpush2.bf16.msra.mxu0 0
        %2840 = vmatprep.mubr.bf16.mxu0 0
        %2841 = vmatmul.mubr.bf16.gmra.mxu0 %v2806
        %v2842 = vpop.f32.mrf.mxu0
        %v2843 = vadd.f32 0.0, %v2842
        %v2844 = vpop.f32.mrf.mxu0
        %v2845 = vadd.f32 0.0, %v2844
        %v2846 = vpop.f32.mrf.mxu0
        %v2847 = vpop.f32.mrf.mxu0
        %2848 = vdwg.mxu0
        %v2849 = vmul.f32 %v2843, %v423
        %v2850 = vmul.f32 %v2845, %v424
        %v2851 = vadd.f32 %v2775, %v2849
        %v2852 = vadd.f32 %v2775, %v2850
        %s2853 = scalar_lea.vmem %s8, 4
        %v2854 = vld [vmem:[%s2853] sm:$0xf]
        %2855 = vrot.lane.b32.xlu0 %v2791, 16
        %v2856 = vpop.permute.xlu0 %2855
        %2857 = vrot.lane.b32.xlu0 %v2792, 16
        %v2858 = vpop.permute.xlu0 %2857
        %2859 = vrot.lane.b32.xlu0 %v2793, 16
        %v2860 = vpop.permute.xlu0 %2859
        %v2861 = vsel %vm588, %v2856, %v2858
        %v2862 = vsel %vm588, %v2858, %v2860
        %v2866 = vsel %vm2804, %v2854, 0
        %2868 = vmatprep.subr.bf16.mxu0 0
        %2869 = vmatpush1.bf16.msra.mxu0 0
        %2870 = vmatprep.subr.bf16.mxu0 0
        %2871 = vmatpush1.bf16.msra.mxu0 0
        %2872 = vmatprep.subr.bf16.mxu0 0
        %2873 = vmatpush1.bf16.msra.mxu0 0
        %2874 = vmatprep.subr.bf16.mxu0 0
        %2875 = vmatpush1.bf16.msra.mxu0 0
        %2876 = vmatprep.subr.bf16.mxu0 0
        %2877 = vmatpush1.bf16.msra.mxu0 0
        %2878 = vmatprep.subr.bf16.mxu0 0
        %2879 = vmatpush1.bf16.msra.mxu0 0
        %2880 = vmatprep.subr.bf16.mxu0 0
        %2881 = vmatpush1.bf16.msra.mxu0 0
        %2882 = vmatprep.subr.bf16.mxu0 %v2862
        %2883 = vmatpush1.bf16.msra.mxu0 %v2861
        %2884 = vmatprep.subr.bf16.mxu0 0
        %2885 = vmatpush2.bf16.msra.mxu0 0
        %2886 = vmatprep.subr.bf16.mxu0 0
        %2887 = vmatpush2.bf16.msra.mxu0 0
        %2888 = vmatprep.subr.bf16.mxu0 0
        %2889 = vmatpush2.bf16.msra.mxu0 0
        %2890 = vmatprep.subr.bf16.mxu0 0
        %2891 = vmatpush2.bf16.msra.mxu0 0
        %2892 = vmatprep.subr.bf16.mxu0 0
        %2893 = vmatpush2.bf16.msra.mxu0 0
        %2894 = vmatprep.subr.bf16.mxu0 0
        %2895 = vmatpush2.bf16.msra.mxu0 0
        %2896 = vmatprep.subr.bf16.mxu0 0
        %2897 = vmatpush2.bf16.msra.mxu0 0
        %2898 = vmatprep.subr.bf16.mxu0 0
        %2899 = vmatpush2.bf16.msra.mxu0 0
        %2900 = vmatprep.mubr.bf16.mxu0 0
        %2901 = vmatmul.mubr.bf16.gmra.mxu0 %v2866
        %v2902 = vpop.f32.mrf.mxu0
        %v2903 = vadd.f32 0.0, %v2902
        %v2904 = vpop.f32.mrf.mxu0
        %v2905 = vadd.f32 0.0, %v2904
        %v2906 = vpop.f32.mrf.mxu0
        %v2907 = vpop.f32.mrf.mxu0
        %2908 = vdwg.mxu0
        %v2909 = vadd.f32 %v2851, %v2903
        %v2910 = vadd.f32 %v2852, %v2905
        %s2911 = scalar_lea.vmem %s8, 8
        %v2912 = vld [vmem:[%s2911] sm:$0xf]
        %2913 = vrot.lane.b32.xlu0 %v2791, 15
        %v2914 = vpop.permute.xlu0 %2913
        %2915 = vrot.lane.b32.xlu0 %v2792, 15
        %v2916 = vpop.permute.xlu0 %2915
        %2917 = vrot.lane.b32.xlu0 %v2793, 15
        %v2918 = vpop.permute.xlu0 %2917
        %v2919 = vsel %vm685, %v2914, %v2916
        %v2920 = vsel %vm685, %v2916, %v2918
        %v2924 = vsel %vm2804, %v2912, 0
        %2926 = vmatprep.subr.bf16.mxu0 0
        %2927 = vmatpush1.bf16.msra.mxu0 0
        %2928 = vmatprep.subr.bf16.mxu0 0
        %2929 = vmatpush1.bf16.msra.mxu0 0
        %2930 = vmatprep.subr.bf16.mxu0 0
        %2931 = vmatpush1.bf16.msra.mxu0 0
        %2932 = vmatprep.subr.bf16.mxu0 0
        %2933 = vmatpush1.bf16.msra.mxu0 0
        %2934 = vmatprep.subr.bf16.mxu0 0
        %2935 = vmatpush1.bf16.msra.mxu0 0
        %2936 = vmatprep.subr.bf16.mxu0 0
        %2937 = vmatpush1.bf16.msra.mxu0 0
        %2938 = vmatprep.subr.bf16.mxu0 0
        %2939 = vmatpush1.bf16.msra.mxu0 0
        %2940 = vmatprep.subr.bf16.mxu0 %v2920
        %2941 = vmatpush1.bf16.msra.mxu0 %v2919
        %2942 = vmatprep.subr.bf16.mxu0 0
        %2943 = vmatpush2.bf16.msra.mxu0 0
        %2944 = vmatprep.subr.bf16.mxu0 0
        %2945 = vmatpush2.bf16.msra.mxu0 0
        %2946 = vmatprep.subr.bf16.mxu0 0
        %2947 = vmatpush2.bf16.msra.mxu0 0
        %2948 = vmatprep.subr.bf16.mxu0 0
        %2949 = vmatpush2.bf16.msra.mxu0 0
        %2950 = vmatprep.subr.bf16.mxu0 0
        %2951 = vmatpush2.bf16.msra.mxu0 0
        %2952 = vmatprep.subr.bf16.mxu0 0
        %2953 = vmatpush2.bf16.msra.mxu0 0
        %2954 = vmatprep.subr.bf16.mxu0 0
        %2955 = vmatpush2.bf16.msra.mxu0 0
        %2956 = vmatprep.subr.bf16.mxu0 0
        %2957 = vmatpush2.bf16.msra.mxu0 0
        %2958 = vmatprep.mubr.bf16.mxu0 0
        %2959 = vmatmul.mubr.bf16.gmra.mxu0 %v2924
        %v2960 = vpop.f32.mrf.mxu0
        %v2961 = vadd.f32 0.0, %v2960
        %v2962 = vpop.f32.mrf.mxu0
        %v2963 = vadd.f32 0.0, %v2962
        %v2964 = vpop.f32.mrf.mxu0
        %v2965 = vpop.f32.mrf.mxu0
        %2966 = vdwg.mxu0
        %v2967 = vmul.f32 %v2961, %v427
        %v2968 = vmul.f32 %v2963, %v428
        %v2969 = vadd.f32 %v2909, %v2967
        %v2970 = vadd.f32 %v2910, %v2968
        %s2971 = scalar_lea.vmem %s8, 12
        %v2972 = vld [vmem:[%s2971] sm:$0xf]
        %2973 = vrot.lane.b32.xlu0 %v2791, 1
        %v2974 = vpop.permute.xlu0 %2973
        %2975 = vrot.lane.b32.xlu0 %v2792, 1
        %v2976 = vpop.permute.xlu0 %2975
        %2977 = vrot.lane.b32.xlu0 %v2793, 1
        %v2978 = vpop.permute.xlu0 %2977
        %v2979 = vsel %vm775, %v2974, %v2976
        %v2980 = vsel %vm775, %v2976, %v2978
        %v2984 = vsel %vm2804, %v2972, 0
        %2986 = vmatprep.subr.bf16.mxu0 0
        %2987 = vmatpush1.bf16.msra.mxu0 0
        %2988 = vmatprep.subr.bf16.mxu0 0
        %2989 = vmatpush1.bf16.msra.mxu0 0
        %2990 = vmatprep.subr.bf16.mxu0 0
        %2991 = vmatpush1.bf16.msra.mxu0 0
        %2992 = vmatprep.subr.bf16.mxu0 0
        %2993 = vmatpush1.bf16.msra.mxu0 0
        %2994 = vmatprep.subr.bf16.mxu0 0
        %2995 = vmatpush1.bf16.msra.mxu0 0
        %2996 = vmatprep.subr.bf16.mxu0 0
        %2997 = vmatpush1.bf16.msra.mxu0 0
        %2998 = vmatprep.subr.bf16.mxu0 0
        %2999 = vmatpush1.bf16.msra.mxu0 0
        %3000 = vmatprep.subr.bf16.mxu0 %v2980
        %3001 = vmatpush1.bf16.msra.mxu0 %v2979
        %3002 = vmatprep.subr.bf16.mxu0 0
        %3003 = vmatpush2.bf16.msra.mxu0 0
        %3004 = vmatprep.subr.bf16.mxu0 0
        %3005 = vmatpush2.bf16.msra.mxu0 0
        %3006 = vmatprep.subr.bf16.mxu0 0
        %3007 = vmatpush2.bf16.msra.mxu0 0
        %3008 = vmatprep.subr.bf16.mxu0 0
        %3009 = vmatpush2.bf16.msra.mxu0 0
        %3010 = vmatprep.subr.bf16.mxu0 0
        %3011 = vmatpush2.bf16.msra.mxu0 0
        %3012 = vmatprep.subr.bf16.mxu0 0
        %3013 = vmatpush2.bf16.msra.mxu0 0
        %3014 = vmatprep.subr.bf16.mxu0 0
        %3015 = vmatpush2.bf16.msra.mxu0 0
        %3016 = vmatprep.subr.bf16.mxu0 0
        %3017 = vmatpush2.bf16.msra.mxu0 0
        %3018 = vmatprep.mubr.bf16.mxu0 0
        %3019 = vmatmul.mubr.bf16.gmra.mxu0 %v2984
        %v3020 = vpop.f32.mrf.mxu0
        %v3021 = vadd.f32 0.0, %v3020
        %v3022 = vpop.f32.mrf.mxu0
        %v3023 = vadd.f32 0.0, %v3022
        %v3024 = vpop.f32.mrf.mxu0
        %v3025 = vpop.f32.mrf.mxu0
        %3026 = vdwg.mxu0
        %v3027 = vmul.f32 %v3021, %v423
        %v3028 = vmul.f32 %v3023, %v424
        %v3029 = vadd.f32 %v2969, %v3027
        %v3030 = vadd.f32 %v2970, %v3028
        %v3031 = vld [vmem:[#allocation2 + $0x4] sm:$0xff]
        %v3032 = vld [vmem:[#allocation2 + $0x14] sm:$0xff]
        %s3033 = scalar_lea.vmem %s8, 16
        %v3034 = vld [vmem:[%s3033] sm:$0xf]
        %v3037 = vunpack.c.l.b16 %v3031
        %v3038 = vunpack.c.h.b16 %v3031
        %v3039 = vunpack.c.l.b16 %v3032
        %v3040 = vunpack.c.h.b16 %v3032
        %v3041 = vpack.c.b16 %v3039, %v3037
        %v3042 = vpack.c.b16 %v3040, %v3038
        %v3046 = vsel %vm2804, %v3034, 0
        %3048 = vmatprep.subr.bf16.mxu0 0
        %3049 = vmatpush1.bf16.msra.mxu0 0
        %3050 = vmatprep.subr.bf16.mxu0 0
        %3051 = vmatpush1.bf16.msra.mxu0 0
        %3052 = vmatprep.subr.bf16.mxu0 0
        %3053 = vmatpush1.bf16.msra.mxu0 0
        %3054 = vmatprep.subr.bf16.mxu0 0
        %3055 = vmatpush1.bf16.msra.mxu0 0
        %3056 = vmatprep.subr.bf16.mxu0 0
        %3057 = vmatpush1.bf16.msra.mxu0 0
        %3058 = vmatprep.subr.bf16.mxu0 0
        %3059 = vmatpush1.bf16.msra.mxu0 0
        %3060 = vmatprep.subr.bf16.mxu0 0
        %3061 = vmatpush1.bf16.msra.mxu0 0
        %3062 = vmatprep.subr.bf16.mxu0 %v3042
        %3063 = vmatpush1.bf16.msra.mxu0 %v3041
        %3064 = vmatprep.subr.bf16.mxu0 0
        %3065 = vmatpush2.bf16.msra.mxu0 0
        %3066 = vmatprep.subr.bf16.mxu0 0
        %3067 = vmatpush2.bf16.msra.mxu0 0
        %3068 = vmatprep.subr.bf16.mxu0 0
        %3069 = vmatpush2.bf16.msra.mxu0 0
        %3070 = vmatprep.subr.bf16.mxu0 0
        %3071 = vmatpush2.bf16.msra.mxu0 0
        %3072 = vmatprep.subr.bf16.mxu0 0
        %3073 = vmatpush2.bf16.msra.mxu0 0
        %3074 = vmatprep.subr.bf16.mxu0 0
        %3075 = vmatpush2.bf16.msra.mxu0 0
        %3076 = vmatprep.subr.bf16.mxu0 0
        %3077 = vmatpush2.bf16.msra.mxu0 0
        %3078 = vmatprep.subr.bf16.mxu0 0
        %3079 = vmatpush2.bf16.msra.mxu0 0
        %3080 = vmatprep.mubr.bf16.mxu0 0
        %3081 = vmatmul.mubr.bf16.gmra.mxu0 %v3046
        %v3082 = vpop.f32.mrf.mxu0
        %v3083 = vadd.f32 0.0, %v3082
        %v3084 = vpop.f32.mrf.mxu0
        %v3085 = vadd.f32 0.0, %v3084
        %v3086 = vpop.f32.mrf.mxu0
        %v3087 = vpop.f32.mrf.mxu0
        %3088 = vdwg.mxu0
        %v3089 = vadd.f32 %v3029, %v3083
        %v3090 = vadd.f32 %v3030, %v3085
        %v3091 = vld [vmem:[#allocation2 + $0x4] sm:$0xff]
        %v3092 = vld [vmem:[#allocation2 + $0xc] sm:$0xf]
        %v3093 = vld [vmem:[#allocation2 + $0x14] sm:$0xff]
        %v3094 = vld [vmem:[#allocation2 + $0x1c] sm:$0xf]
        %s3095 = scalar_lea.vmem %s8, 20
        %v3096 = vld [vmem:[%s3095] sm:$0xf]
        %v3101 = vunpack.c.l.b16 %v3091
        %v3102 = vunpack.c.h.b16 %v3091
        %v3103 = vunpack.c.l.b16 %v3092
        %v3104 = vunpack.c.l.b16 %v3093
        %v3105 = vunpack.c.h.b16 %v3093
        %v3106 = vunpack.c.l.b16 %v3094
        %v3107 = vpack.c.b16 %v3104, %v3101
        %v3108 = vpack.c.b16 %v3105, %v3102
        %v3109 = vpack.c.b16 %v3106, %v3103
        %3110 = vrot.lane.b32.xlu0 %v3107, 127
        %v3111 = vpop.permute.xlu0 %3110
        %3112 = vrot.lane.b32.xlu0 %v3108, 127
        %v3113 = vpop.permute.xlu0 %3112
        %3114 = vrot.lane.b32.xlu0 %v3109, 127
        %v3115 = vpop.permute.xlu0 %3114
        %v3116 = vsel %vm747, %v3111, %v3113
        %v3117 = vsel %vm747, %v3113, %v3115
        %v3121 = vsel %vm2804, %v3096, 0
        %3123 = vmatprep.subr.bf16.mxu0 0
        %3124 = vmatpush1.bf16.msra.mxu0 0
        %3125 = vmatprep.subr.bf16.mxu0 0
        %3126 = vmatpush1.bf16.msra.mxu0 0
        %3127 = vmatprep.subr.bf16.mxu0 0
        %3128 = vmatpush1.bf16.msra.mxu0 0
        %3129 = vmatprep.subr.bf16.mxu0 0
        %3130 = vmatpush1.bf16.msra.mxu0 0
        %3131 = vmatprep.subr.bf16.mxu0 0
        %3132 = vmatpush1.bf16.msra.mxu0 0
        %3133 = vmatprep.subr.bf16.mxu0 0
        %3134 = vmatpush1.bf16.msra.mxu0 0
        %3135 = vmatprep.subr.bf16.mxu0 0
        %3136 = vmatpush1.bf16.msra.mxu0 0
        %3137 = vmatprep.subr.bf16.mxu0 %v3117
        %3138 = vmatpush1.bf16.msra.mxu0 %v3116
        %3139 = vmatprep.subr.bf16.mxu0 0
        %3140 = vmatpush2.bf16.msra.mxu0 0
        %3141 = vmatprep.subr.bf16.mxu0 0
        %3142 = vmatpush2.bf16.msra.mxu0 0
        %3143 = vmatprep.subr.bf16.mxu0 0
        %3144 = vmatpush2.bf16.msra.mxu0 0
        %3145 = vmatprep.subr.bf16.mxu0 0
        %3146 = vmatpush2.bf16.msra.mxu0 0
        %3147 = vmatprep.subr.bf16.mxu0 0
        %3148 = vmatpush2.bf16.msra.mxu0 0
        %3149 = vmatprep.subr.bf16.mxu0 0
        %3150 = vmatpush2.bf16.msra.mxu0 0
        %3151 = vmatprep.subr.bf16.mxu0 0
        %3152 = vmatpush2.bf16.msra.mxu0 0
        %3153 = vmatprep.subr.bf16.mxu0 0
        %3154 = vmatpush2.bf16.msra.mxu0 0
        %3155 = vmatprep.mubr.bf16.mxu0 0
        %3156 = vmatmul.mubr.bf16.gmra.mxu0 %v3121
        %v3157 = vpop.f32.mrf.mxu0
        %v3158 = vadd.f32 0.0, %v3157
        %v3159 = vpop.f32.mrf.mxu0
        %v3160 = vadd.f32 0.0, %v3159
        %v3161 = vpop.f32.mrf.mxu0
        %v3162 = vpop.f32.mrf.mxu0
        %3163 = vdwg.mxu0
        %v3164 = vmul.f32 %v3158, %v427
        %v3165 = vmul.f32 %v3160, %v428
        %v3166 = vadd.f32 %v3089, %v3164
        %v3167 = vadd.f32 %v3090, %v3165
        %s3168 = scalar_lea.vmem %s8, 24
        %v3169 = vld [vmem:[%s3168] sm:$0xf]
        %3170 = vrot.lane.b32.xlu0 %v3107, 113
        %v3171 = vpop.permute.xlu0 %3170
        %3172 = vrot.lane.b32.xlu0 %v3108, 113
        %v3173 = vpop.permute.xlu0 %3172
        %3174 = vrot.lane.b32.xlu0 %v3109, 113
        %v3175 = vpop.permute.xlu0 %3174
        %v3176 = vsel %vm657, %v3171, %v3173
        %v3177 = vsel %vm657, %v3173, %v3175
        %v3181 = vsel %vm2804, %v3169, 0
        %3183 = vmatprep.subr.bf16.mxu0 0
        %3184 = vmatpush1.bf16.msra.mxu0 0
        %3185 = vmatprep.subr.bf16.mxu0 0
        %3186 = vmatpush1.bf16.msra.mxu0 0
        %3187 = vmatprep.subr.bf16.mxu0 0
        %3188 = vmatpush1.bf16.msra.mxu0 0
        %3189 = vmatprep.subr.bf16.mxu0 0
        %3190 = vmatpush1.bf16.msra.mxu0 0
        %3191 = vmatprep.subr.bf16.mxu0 0
        %3192 = vmatpush1.bf16.msra.mxu0 0
        %3193 = vmatprep.subr.bf16.mxu0 0
        %3194 = vmatpush1.bf16.msra.mxu0 0
        %3195 = vmatprep.subr.bf16.mxu0 0
        %3196 = vmatpush1.bf16.msra.mxu0 0
        %3197 = vmatprep.subr.bf16.mxu0 %v3177
        %3198 = vmatpush1.bf16.msra.mxu0 %v3176
        %3199 = vmatprep.subr.bf16.mxu0 0
        %3200 = vmatpush2.bf16.msra.mxu0 0
        %3201 = vmatprep.subr.bf16.mxu0 0
        %3202 = vmatpush2.bf16.msra.mxu0 0
        %3203 = vmatprep.subr.bf16.mxu0 0
        %3204 = vmatpush2.bf16.msra.mxu0 0
        %3205 = vmatprep.subr.bf16.mxu0 0
        %3206 = vmatpush2.bf16.msra.mxu0 0
        %3207 = vmatprep.subr.bf16.mxu0 0
        %3208 = vmatpush2.bf16.msra.mxu0 0
        %3209 = vmatprep.subr.bf16.mxu0 0
        %3210 = vmatpush2.bf16.msra.mxu0 0
        %3211 = vmatprep.subr.bf16.mxu0 0
        %3212 = vmatpush2.bf16.msra.mxu0 0
        %3213 = vmatprep.subr.bf16.mxu0 0
        %3214 = vmatpush2.bf16.msra.mxu0 0
        %3215 = vmatprep.mubr.bf16.mxu0 0
        %3216 = vmatmul.mubr.bf16.gmra.mxu0 %v3181
        %v3217 = vpop.f32.mrf.mxu0
        %v3218 = vadd.f32 0.0, %v3217
        %v3219 = vpop.f32.mrf.mxu0
        %v3220 = vadd.f32 0.0, %v3219
        %v3221 = vpop.f32.mrf.mxu0
        %v3222 = vpop.f32.mrf.mxu0
        %3223 = vdwg.mxu0
        %v3224 = vmul.f32 %v3218, %v423
        %v3225 = vmul.f32 %v3220, %v424
        %v3226 = vadd.f32 %v3166, %v3224
        %v3227 = vadd.f32 %v3167, %v3225
        %s3228 = scalar_lea.vmem %s8, 28
        %v3229 = vld [vmem:[%s3228] sm:$0xf]
        %3230 = vrot.lane.b32.xlu0 %v3107, 112
        %v3231 = vpop.permute.xlu0 %3230
        %3232 = vrot.lane.b32.xlu0 %v3108, 112
        %v3233 = vpop.permute.xlu0 %3232
        %3234 = vrot.lane.b32.xlu0 %v3109, 112
        %v3235 = vpop.permute.xlu0 %3234
        %v3236 = vsel %vm1104, %v3231, %v3233
        %v3237 = vsel %vm1104, %v3233, %v3235
        %v3241 = vsel %vm2804, %v3229, 0
        %3243 = vmatprep.subr.bf16.mxu0 0
        %3244 = vmatpush1.bf16.msra.mxu0 0
        %3245 = vmatprep.subr.bf16.mxu0 0
        %3246 = vmatpush1.bf16.msra.mxu0 0
        %3247 = vmatprep.subr.bf16.mxu0 0
        %3248 = vmatpush1.bf16.msra.mxu0 0
        %3249 = vmatprep.subr.bf16.mxu0 0
        %3250 = vmatpush1.bf16.msra.mxu0 0
        %3251 = vmatprep.subr.bf16.mxu0 0
        %3252 = vmatpush1.bf16.msra.mxu0 0
        %3253 = vmatprep.subr.bf16.mxu0 0
        %3254 = vmatpush1.bf16.msra.mxu0 0
        %3255 = vmatprep.subr.bf16.mxu0 0
        %3256 = vmatpush1.bf16.msra.mxu0 0
        %3257 = vmatprep.subr.bf16.mxu0 %v3237
        %3258 = vmatpush1.bf16.msra.mxu0 %v3236
        %3259 = vmatprep.subr.bf16.mxu0 0
        %3260 = vmatpush2.bf16.msra.mxu0 0
        %3261 = vmatprep.subr.bf16.mxu0 0
        %3262 = vmatpush2.bf16.msra.mxu0 0
        %3263 = vmatprep.subr.bf16.mxu0 0
        %3264 = vmatpush2.bf16.msra.mxu0 0
        %3265 = vmatprep.subr.bf16.mxu0 0
        %3266 = vmatpush2.bf16.msra.mxu0 0
        %3267 = vmatprep.subr.bf16.mxu0 0
        %3268 = vmatpush2.bf16.msra.mxu0 0
        %3269 = vmatprep.subr.bf16.mxu0 0
        %3270 = vmatpush2.bf16.msra.mxu0 0
        %3271 = vmatprep.subr.bf16.mxu0 0
        %3272 = vmatpush2.bf16.msra.mxu0 0
        %3273 = vmatprep.subr.bf16.mxu0 0
        %3274 = vmatpush2.bf16.msra.mxu0 0
        %3275 = vmatprep.mubr.bf16.mxu0 0
        %3276 = vmatmul.mubr.bf16.gmra.mxu0 %v3241
        %v3277 = vpop.f32.mrf.mxu0
        %v3278 = vadd.f32 0.0, %v3277
        %v3279 = vpop.f32.mrf.mxu0
        %v3280 = vadd.f32 0.0, %v3279
        %v3281 = vpop.f32.mrf.mxu0
        %v3282 = vpop.f32.mrf.mxu0
        %3283 = vdwg.mxu0
        %v3284 = vadd.f32 %v3226, %v3278
        %v3285 = vadd.f32 %v3227, %v3280
        %s3286 = scalar_lea.vmem %s8, 32
        %v3287 = vld [vmem:[%s3286] sm:$0xf]
        %3288 = vrot.lane.b32.xlu0 %v3107, 111
        %v3289 = vpop.permute.xlu0 %3288
        %3290 = vrot.lane.b32.xlu0 %v3108, 111
        %v3291 = vpop.permute.xlu0 %3290
        %3292 = vrot.lane.b32.xlu0 %v3109, 111
        %v3293 = vpop.permute.xlu0 %3292
        %v3294 = vsel %vm478, %v3289, %v3291
        %v3295 = vsel %vm478, %v3291, %v3293
        %v3299 = vsel %vm2804, %v3287, 0
        %3301 = vmatprep.subr.bf16.mxu0 0
        %3302 = vmatpush1.bf16.msra.mxu0 0
        %3303 = vmatprep.subr.bf16.mxu0 0
        %3304 = vmatpush1.bf16.msra.mxu0 0
        %3305 = vmatprep.subr.bf16.mxu0 0
        %3306 = vmatpush1.bf16.msra.mxu0 0
        %3307 = vmatprep.subr.bf16.mxu0 0
        %3308 = vmatpush1.bf16.msra.mxu0 0
        %3309 = vmatprep.subr.bf16.mxu0 0
        %3310 = vmatpush1.bf16.msra.mxu0 0
        %3311 = vmatprep.subr.bf16.mxu0 0
        %3312 = vmatpush1.bf16.msra.mxu0 0
        %3313 = vmatprep.subr.bf16.mxu0 0
        %3314 = vmatpush1.bf16.msra.mxu0 0
        %3315 = vmatprep.subr.bf16.mxu0 %v3295
        %3316 = vmatpush1.bf16.msra.mxu0 %v3294
        %3317 = vmatprep.subr.bf16.mxu0 0
        %3318 = vmatpush2.bf16.msra.mxu0 0
        %3319 = vmatprep.subr.bf16.mxu0 0
        %3320 = vmatpush2.bf16.msra.mxu0 0
        %3321 = vmatprep.subr.bf16.mxu0 0
        %3322 = vmatpush2.bf16.msra.mxu0 0
        %3323 = vmatprep.subr.bf16.mxu0 0
        %3324 = vmatpush2.bf16.msra.mxu0 0
        %3325 = vmatprep.subr.bf16.mxu0 0
        %3326 = vmatpush2.bf16.msra.mxu0 0
        %3327 = vmatprep.subr.bf16.mxu0 0
        %3328 = vmatpush2.bf16.msra.mxu0 0
        %3329 = vmatprep.subr.bf16.mxu0 0
        %3330 = vmatpush2.bf16.msra.mxu0 0
        %3331 = vmatprep.subr.bf16.mxu0 0
        %3332 = vmatpush2.bf16.msra.mxu0 0
        %3333 = vmatprep.mubr.bf16.mxu0 0
        %3334 = vmatmul.mubr.bf16.gmra.mxu0 %v3299
        %v3335 = vpop.f32.mrf.mxu0
        %v3336 = vadd.f32 0.0, %v3335
        %v3337 = vpop.f32.mrf.mxu0
        %v3338 = vadd.f32 0.0, %v3337
        %v3339 = vpop.f32.mrf.mxu0
        %v3340 = vpop.f32.mrf.mxu0
        %3341 = vdwg.mxu0
        %v3342 = vmul.f32 %v3336, %v427
        %v3343 = vmul.f32 %v3338, %v428
        %v3344 = vadd.f32 %v3284, %v3342
        %v3345 = vadd.f32 %v3285, %v3343
        %v3346 = vmax.f32 %v3344, 0.0
        %v3347 = vmax.f32 %v3345, 0.0
        %3348 = vst [vmem:[%s382] sm:$0xff] %v3346
        %3349 = vst [vmem:[%s382 + $0x8] sm:$0xff] %v3347
        %s3350 = sand.u32 %s254, 1
        %s3351 = scalar_lea.sflag [#allocation6], %s3350
        %s3352 = sand.u32 %s254, 1
        %s3353 = smul.addr %s3352, 16
        %s3354 = scalar_lea.vmem [#allocation8], %s3353
        // Predicated region
        $region65: #{tpu_custom_call.1} parent=59 // pred_check
          %p3355 = pneg %p264
        $region66: #{tpu_custom_call.1} parent=59 // pred_check_branch
          %3357 = sbr.rel (%p3355) target = $region68
        $region67: #{tpu_custom_call.1} parent=59 // pred_region
          %s3359 = ssub.s32 256, 256
          %3360 = vsyncadd %s3351, %s3359
          %s3361 = smul.addr %s26, 2
          %s3362 = smul.addr %s3361, 128
          %s3363 = scalar_lea.hbm %s10, %s3362
          %s3365 = sshll.u32 %s3354, 4
          %s3366 = int_to_ptr.vmem [resolvable:$true] %s3365
          %3368 = dma.vmem_to_hbm [thread:$0]  %s3366, 256, %s3363, %s3351
        $region68: #{tpu_custom_call.1} parent=59 // pred_fallthru
          _
      $region60: #{tpu_custom_call.1} parent=5 // pred_fallthru
        _
      %p3369 = scmp.le.s32.totalorder 2, %s21
      // Predicated region
      $region69: #{tpu_custom_call.1} parent=5 // pred_check
        %p3370 = pneg %p3369
      $region70: #{tpu_custom_call.1} parent=5 // pred_check_branch
        %3372 = sbr.rel (%p3370) target = $region72
      $region71: #{tpu_custom_call.1} parent=5 // pred_region
        %s3373 = ssub.s32 %s21, 2
        // Predicated region
        $region73: #{tpu_custom_call.1} parent=71 // pred_check
          %p3374 = pneg %p270
        $region74: #{tpu_custom_call.1} parent=71 // pred_check_branch
          %3376 = sbr.rel (%p3374) target = $region76
        $region75: #{tpu_custom_call.1} parent=71 // pred_region
          %s3377 = sand.u32 %s255, 1
          %s3378 = scalar_lea.sflag [#allocation6], %s3377
          %s3379 = sand.u32 %s255, 1
          %s3380 = smul.addr %s3379, 16
          %s3381 = scalar_lea.vmem [#allocation8], %s3380
          %3382 = dma.done %s3378, 256
        $region76: #{tpu_custom_call.1} parent=71 // pred_fallthru
          _
      $region72: #{tpu_custom_call.1} parent=5 // pred_fallthru
        _
    $region6: #{tpu_custom_call.1} parent=1 // loop_footer
      %s25 = sadd.s32 1, %s21
    $region7: #{tpu_custom_call.1} parent=1 // loop_footer_branch
      %20 = sbr.rel target = $region3
    $region8: #{tpu_custom_call.1} parent=1 // loop_exit
      _
    %3383 = vsyncpa [#allocation6], 1
    %s3384 = scalar_lea.sflag [#allocation6], 1
    %3385 = vsyncpa %s3384, 1
    %3386 = vsyncpa [#allocation7], 1
    %s3387 = scalar_lea.sflag [#allocation7], 1
    %3388 = vsyncpa %s3387, 1

</llo_original>
